<compile_context>
chip_gen: v7x
topology: tpu7x:2x2x1
jax: 0.10.0
libtpu: 0.0.40
codegen_flags: <defaults>
</compile_context>

<pallas_src>
import math
import functools

import jax
import jax.numpy as jnp
from jax.experimental import pallas as pl
from jax.experimental.pallas import tpu as pltpu


@functools.lru_cache(maxsize=None)
def _vmem_limit_bytes():
    """Per-generation scoped-VMEM limit (~3/4 of physical, capped)."""
    try:
        cap = int(pltpu.get_tpu_info().vmem_capacity_bytes)
    except Exception:
        cap = 0
    if cap > 0:
        return int(min((cap * 3) // 4, 100 * 1024 * 1024))
    return 48 * 1024 * 1024  # conservative fallback (fits v7x's 64 MiB physical)


def _compiler_params(dims):
    return pltpu.CompilerParams(dimension_semantics=dims,
                                vmem_limit_bytes=_vmem_limit_bytes())


def _pick_tile(n, pref):
    """Largest tile <= pref that divides n (n itself if small or no divisor)."""
    if n <= pref:
        return n
    for t in (pref, 1024, 512, 256, 128, 64, 32, 16, 8):
        if t <= pref and n % t == 0:
            return t
    return n  # fallback: single full tile (same behaviour as untiled)


# ----------------------------- Pallas kernels -----------------------------

def _attn_block_kernel(*refs, nhead, sm_scale, eps, emb_scale, with_pe):
    """Fused: [emb scale + pe] -> QKV -> MHA -> single out-proj GEMM -> +res -> LN.

    Grid is (batch, query-tile).  K/V for the full sequence are computed once per
    batch (qi == 0) into head-major (nhead, S, dk) VMEM scratches.
    """
    if with_pe:
        (xt_ref, xf_ref, pet_ref, pef_ref, wq_ref, bq_ref, wkv_ref, bkv_ref,
         wo_ref, bo_ref, g_ref, b_ref, mask_ref, o_ref,
         k_sc, v_sc, ctx_sc) = refs
    else:
        (xt_ref, xf_ref, wq_ref, bq_ref, wkv_ref, bkv_ref,
         wo_ref, bo_ref, g_ref, b_ref, mask_ref, o_ref,
         k_sc, v_sc, ctx_sc) = refs
        pet_ref = pef_ref = None

    qi = pl.program_id(1)
    nh, S, dk = k_sc.shape
    E = nh * dk

    # ---- K/V for the whole sequence: once per batch, cached head-major so the
    #      per-query-tile inner loop never slices K/V at dk-offset lanes. --------
    @pl.when(qi == 0)
    def _():
        xf = xf_ref[0].astype(jnp.float32)                     # (S, E)
        if with_pe:
            xf = xf * emb_scale + pef_ref[...]
        xfb = xf.astype(jnp.bfloat16)
        # fused, lane-dense (E -> 2E) GEMM; head split done once here, not per tile
        kv = jnp.dot(xfb, wkv_ref[...],
                     preferred_element_type=jnp.float32) + bkv_ref[...]  # (S, 2E)
        for h in range(nh):
            lo = h * dk
            k_sc[h] = kv[:, lo:lo + dk].astype(jnp.bfloat16)
            v_sc[h] = kv[:, E + lo:E + lo + dk].astype(jnp.bfloat16)

    # ---- current query tile --------------------------------------------------
    x = xt_ref[0].astype(jnp.float32)                          # (tq, E)
    if with_pe:
        x = x * emb_scale + pet_ref[...]
    xb = x.astype(jnp.bfloat16)
    q = jnp.dot(xb, wq_ref[...],
                preferred_element_type=jnp.float32) + bq_ref[...]   # (tq, E) f32

    mask = mask_ref[...]                                       # (tq, S) additive mask
    for h in range(nh):                                        # static unroll over heads
        lo = h * dk
        # TODO(synk): q head slice is not 128-lane aligned when dk < 128; a padded
        #             (E, nhead, 128) Wq layout would remove this small relayout.
        qh = q[:, lo:lo + dk].astype(jnp.bfloat16)             # (tq, dk)
        s = jax.lax.dot_general(qh, k_sc[h],
                                dimension_numbers=(((1,), (1,)), ((), ())),
                                preferred_element_type=jnp.float32)  # (tq, S)
        s = s * sm_scale + mask
        m = jnp.max(s, axis=-1, keepdims=True)
        p = jnp.exp(s - m)
        p = p * pl.reciprocal(jnp.sum(p, axis=-1, keepdims=True), approx=False)
        a = jnp.dot(p.astype(jnp.bfloat16), v_sc[h],
                    preferred_element_type=jnp.float32)        # (tq, dk)
        ctx_sc[:, lo:lo + dk] = a                              # concat via scratch

    # Single E-wide-contraction out-projection GEMM (full (E, E) Wo, bf16 on MXU).
    attn = jnp.dot(ctx_sc[...].astype(jnp.bfloat16), wo_ref[...],
                   preferred_element_type=jnp.float32) + bo_ref[...]

    # residual + LayerNorm (f32 math), store bf16 activation for the next kernel
    y = x + attn
    mean = jnp.mean(y, axis=-1, keepdims=True)
    var = jnp.mean((y - mean) ** 2, axis=-1, keepdims=True)
    o_ref[0] = ((y - mean) * jax.lax.rsqrt(var + eps) * g_ref[...] + b_ref[...]
                ).astype(o_ref.dtype)


def _ffn_ln_kernel(x_ref, w1_ref, b1_ref, w2_ref, b2_ref, g_ref, b_ref, o_ref,
                   acc_ref, *, eps):
    """Fused FFN with H-tiling (grid axis 1 accumulates over hidden chunks),
    residual + LayerNorm at finalize.  x is bf16, math/accumulation is f32."""
    j = pl.program_id(1)

    @pl.when(j == 0)
    def _():
        acc_ref[...] = jnp.zeros_like(acc_ref)

    h = jnp.dot(x_ref[...], w1_ref[...],
                preferred_element_type=jnp.float32) + b1_ref[...]   # (tm, th)
    h = jnp.maximum(h, 0.0)
    acc_ref[...] += jnp.dot(h.astype(jnp.bfloat16), w2_ref[...],
                            preferred_element_type=jnp.float32)     # (tm, E)

    @pl.when(j == pl.num_programs(1) - 1)
    def _():
        y = x_ref[...].astype(jnp.float32) + acc_ref[...] + b2_ref[...]
        mean = jnp.mean(y, axis=-1, keepdims=True)
        var = jnp.mean((y - mean) ** 2, axis=-1, keepdims=True)
        o_ref[...] = ((y - mean) * jax.lax.rsqrt(var + eps) * g_ref[...] + b_ref[...]
                      ).astype(o_ref.dtype)


def _matmul_bias_kernel(x_ref, w_ref, b_ref, o_ref, acc_ref):
    """Tiled matmul (bf16 LHS/RHS) with K-axis f32 accumulation; bias at finalize."""
    @pl.when(pl.program_id(2) == 0)
    def _():
        acc_ref[...] = jnp.zeros_like(acc_ref)

    acc_ref[...] += jnp.dot(x_ref[...], w_ref[...],
                            preferred_element_type=jnp.float32)

    @pl.when(pl.program_id(2) == pl.num_programs(2) - 1)
    def _():
        o_ref[...] = acc_ref[...] + b_ref[...]


# ----------------------------- Pallas wrappers -----------------------------

def attention_block(x, layer, mask, *, nhead, pe=None, emb_scale=1.0, eps=1e-5,
                    tq_pref=256):
    """x: (B, S, E) bf16 -> (B, S, E) bf16.  Grid = (batch, query tiles)."""
    B, S, E = x.shape
    dk = E // nhead
    tq = _pick_tile(S, tq_pref)
    with_pe = pe is not None
    kernel = functools.partial(_attn_block_kernel, nhead=nhead,
                               sm_scale=1.0 / math.sqrt(dk), eps=eps,
                               emb_scale=emb_scale, with_pe=with_pe)
    const2 = lambda b, qi: (0, 0)

    in_specs = [
        pl.BlockSpec((1, tq, E), lambda b, qi: (b, qi, 0)),   # x: query tile
        pl.BlockSpec((1, S, E), lambda b, qi: (b, 0, 0)),     # x: full seq (K/V src), resident per batch
    ]
    args = [x, x]
    if with_pe:
        in_specs += [pl.BlockSpec((tq, E), lambda b, qi: (qi, 0)),   # pe tile
                     pl.BlockSpec((S, E), const2)]                   # pe full
        args += [pe, pe]
    in_specs += [
        pl.BlockSpec((E, E), const2),                         # wq (bf16, pre-transposed)
        pl.BlockSpec((1, E), const2),                         # bq
        pl.BlockSpec((E, 2 * E), const2),                     # wkv (bf16)
        pl.BlockSpec((1, 2 * E), const2),                     # bkv
        pl.BlockSpec((E, E), const2),                         # wo: single full matrix
        pl.BlockSpec((1, E), const2),                         # bo
        pl.BlockSpec((1, E), const2),                         # ln1 gamma
        pl.BlockSpec((1, E), const2),                         # ln1 beta
        # (tq, S) additive-mask tile; kept as an input to preserve the module's
        # general src_mask semantics (pure-causal could use in-kernel iota instead).
        pl.BlockSpec((tq, S), lambda b, qi: (qi, 0)),
    ]
    args += [layer["wq"], layer["bq"], layer["wkv"], layer["bkv"], layer["wo"],
             layer["bo"], layer["ln1_g"], layer["ln1_b"], mask]

    return pl.pallas_call(
        kernel,
        out_shape=jax.ShapeDtypeStruct((B, S, E), jnp.bfloat16),
        grid=(B, S // tq),
        in_specs=in_specs,
        out_specs=pl.BlockSpec((1, tq, E), lambda b, qi: (b, qi, 0)),
        scratch_shapes=[
            pltpu.VMEM((nhead, S, dk), jnp.bfloat16),   # K cache (head-major)
            pltpu.VMEM((nhead, S, dk), jnp.bfloat16),   # V cache (head-major)
            pltpu.VMEM((tq, E), jnp.float32),           # per-tile head-concat buffer
        ],
        compiler_params=_compiler_params(("parallel", "arbitrary")),
    )(*args)


def ffn_ln_block(x2d, layer, *, eps=1e-5, tm_pref=512, th_pref=2048):
    """x2d: (N, E) bf16 -> (N, E) bf16; row-tiled, H-tiled fused FFN + add + LN."""
    N, E = x2d.shape
    H = layer["w1"].shape[1]
    tm = _pick_tile(N, tm_pref)
    th = _pick_tile(H, th_pref)
    kernel = functools.partial(_ffn_ln_kernel, eps=eps)
    return pl.pallas_call(
        kernel,
        out_shape=jax.ShapeDtypeStruct((N, E), jnp.bfloat16),
        grid=(N // tm, H // th),
        in_specs=[
            pl.BlockSpec((tm, E), lambda i, j: (i, 0)),   # x tile (resident across j)
            pl.BlockSpec((E, th), lambda i, j: (0, j)),   # W1 hidden chunk
            pl.BlockSpec((1, th), lambda i, j: (0, j)),   # b1 chunk
            pl.BlockSpec((th, E), lambda i, j: (j, 0)),   # W2 hidden chunk
            pl.BlockSpec((1, E), lambda i, j: (0, 0)),    # b2
            pl.BlockSpec((1, E), lambda i, j: (0, 0)),    # ln2 gamma
            pl.BlockSpec((1, E), lambda i, j: (0, 0)),    # ln2 beta
        ],
        out_specs=pl.BlockSpec((tm, E), lambda i, j: (i, 0)),
        scratch_shapes=[pltpu.VMEM((tm, E), jnp.float32)],
        compiler_params=_compiler_params(("parallel", "arbitrary")),
    )(x2d, layer["w1"], layer["b1"], layer["w2"], layer["b2"],
      layer["ln2_g"], layer["ln2_b"])


def decoder_matmul(x2d, w_t, b, *, tm_pref=512, tn_pref=1024, tk_pref=512):
    """y = x @ w_t + b, tiled (M, N, K); bf16 LHS/RHS, f32 VMEM accumulator."""
    x2d = x2d.astype(jnp.bfloat16)
    M, K = x2d.shape
    _, N = w_t.shape
    tm = _pick_tile(M, tm_pref)
    tn = _pick_tile(N, tn_pref)
    tk = _pick_tile(K, tk_pref)
    b2 = b.reshape(1, N)
    return pl.pallas_call(
        _matmul_bias_kernel,
        out_shape=jax.ShapeDtypeStruct((M, N), jnp.float32),
        grid=(M // tm, N // tn, K // tk),
        in_specs=[
            pl.BlockSpec((tm, tk), lambda i, j, k: (i, k)),
            pl.BlockSpec((tk, tn), lambda i, j, k: (k, j)),
            pl.BlockSpec((1, tn), lambda i, j, k: (0, j)),
        ],
        out_specs=pl.BlockSpec((tm, tn), lambda i, j, k: (i, j)),
        scratch_shapes=[pltpu.VMEM((tm, tn), jnp.float32)],
        compiler_params=_compiler_params(("parallel", "parallel", "arbitrary")),
    )(x2d, w_t, b2)


# ----------------------------- Model assembly -----------------------------

def make_positional_encoding(max_len, d_model):
    position = jnp.arange(max_len, dtype=jnp.float32)[:, None]
    div_term = jnp.exp(jnp.arange(0, d_model, 2, dtype=jnp.float32)
                       * (-math.log(10000.0) / d_model))
    pe = jnp.zeros((max_len, d_model), dtype=jnp.float32)
    pe = pe.at[:, 0::2].set(jnp.sin(position * div_term))
    pe = pe.at[:, 1::2].set(jnp.cos(position * div_term))
    return pe  # (max_len, d_model)


def init_params(key, ntoken, ninp, nhead, nhid, nlayers, max_len=5000):
    keys = jax.random.split(key, 2 + 4 * nlayers)
    initrange = 0.1
    params = {
        "emb": jax.random.uniform(keys[0], (ntoken, ninp), jnp.float32,
                                  -initrange, initrange),
        "pe": make_positional_encoding(max_len, ninp),
        # decoder weight pre-transposed (ninp, ntoken), bf16 for the MXU path
        "dec_w_t": jax.random.uniform(keys[1], (ninp, ntoken), jnp.float32,
                                      -initrange, initrange).astype(jnp.bfloat16),
        "dec_b": jnp.zeros((ntoken,), jnp.float32),
        "layers": [],
    }
    s = 0.05
    k = 2
    for _ in range(nlayers):
        wq = s * jax.random.normal(keys[k + 0], (ninp, ninp), jnp.float32)
        wkv = s * jax.random.normal(keys[k + 1], (ninp, 2 * ninp), jnp.float32)
        wo = s * jax.random.normal(keys[k + 2], (ninp, ninp), jnp.float32)
        w1 = s * jax.random.normal(keys[k + 3], (ninp, nhid), jnp.float32)
        w2 = s * jax.random.normal(keys[k + 3], (nhid, ninp), jnp.float32)
        layer = {
            "wq": wq.astype(jnp.bfloat16),                    # (E, E)
            "bq": jnp.zeros((1, ninp), jnp.float32),
            "wkv": wkv.astype(jnp.bfloat16),                  # (E, 2E)
            "bkv": jnp.zeros((1, 2 * ninp), jnp.float32),
            "wo": wo.astype(jnp.bfloat16),                    # (E, E) single matrix
            "bo": jnp.zeros((1, ninp), jnp.float32),
            "w1": w1.astype(jnp.bfloat16),                    # (E, H)
            "b1": jnp.zeros((1, nhid), jnp.float32),
            "w2": w2.astype(jnp.bfloat16),                    # (H, E)
            "b2": jnp.zeros((1, ninp), jnp.float32),
            "ln1_g": jnp.ones((1, ninp), jnp.float32),
            "ln1_b": jnp.zeros((1, ninp), jnp.float32),
            "ln2_g": jnp.ones((1, ninp), jnp.float32),
            "ln2_b": jnp.zeros((1, ninp), jnp.float32),
        }
        params["layers"].append(layer)
        k += 4
    return params


def transformer_forward(params, src, src_mask, *, ninp, nhead):
    # src: (S, B) int32 token ids ; src_mask: (S, S) additive float mask
    S, B = src.shape
    # TODO(synk): embedding gather left to XLA (could be fused via scalar prefetch
    #             + pl.Element row-gather BlockSpec to save one HBM round trip).
    emb = params["emb"][src.T].astype(jnp.bfloat16)   # (B, S, E) bf16 activations
    pe = params["pe"][:S]                             # (S, E) f32, broadcast in-kernel
    emb_scale = math.sqrt(ninp)

    if not params["layers"]:
        x = (emb.astype(jnp.float32) * emb_scale + pe[None, :, :]).astype(jnp.bfloat16)
    else:
        x = emb
        for li, layer in enumerate(params["layers"]):
            if li == 0:
                x = attention_block(x, layer, src_mask, nhead=nhead,
                                    pe=pe, emb_scale=emb_scale)
            else:
                x = attention_block(x, layer, src_mask, nhead=nhead)
            x = ffn_ln_block(x.reshape(B * S, ninp), layer).reshape(B, S, ninp)

    logits = decoder_matmul(x.reshape(B * S, ninp), params["dec_w_t"], params["dec_b"])
    ntoken = params["dec_w_t"].shape[1]
    return logits.reshape(B, S, ntoken).transpose(1, 0, 2)   # (S, B, ntoken) f32


def generate_square_subsequent_mask(sz):
    idx = jnp.arange(sz)
    return jnp.where(idx[None, :] <= idx[:, None], 0.0, -jnp.inf).astype(jnp.float32)


# ----------------------------- Main -----------------------------

if __name__ == "__main__":
    ntoken, ninp, nhead, nhid, nlayers = 32, 32, 4, 64, 2
    S, B = 8, 2

    key = jax.random.PRNGKey(0)
    kp, ks = jax.random.split(key)
    params = init_params(kp, ntoken, ninp, nhead, nhid, nlayers, max_len=64)

    src = jax.random.randint(ks, (S, B), 0, ntoken, dtype=jnp.int32)
    src_mask = generate_square_subsequent_mask(S)

    fwd = jax.jit(functools.partial(transformer_forward, ninp=ninp, nhead=nhead))
    out = fwd(params, src, src_mask)
    out = jax.block_until_ready(out)

    assert out.shape == (S, B, ntoken)
    assert bool(jnp.all(jnp.isfinite(out)))
    print("KERNEL_OK")
</pallas_src>

<mosaic_0001>
module attributes {stable_mosaic.version = 11 : i64} {
  func.func @_ffn_ln_kernel(%arg0: i32, %arg1: i32, %arg2: memref<16x32xbf16, #tpu.memory_space<vmem>>, %arg3: memref<32x64xbf16, #tpu.memory_space<vmem>>, %arg4: memref<1x64xf32, #tpu.memory_space<vmem>>, %arg5: memref<64x32xbf16, #tpu.memory_space<vmem>>, %arg6: memref<1x32xf32, #tpu.memory_space<vmem>>, %arg7: memref<1x32xf32, #tpu.memory_space<vmem>>, %arg8: memref<1x32xf32, #tpu.memory_space<vmem>>, %arg9: memref<16x32xbf16, #tpu.memory_space<vmem>>, %arg10: memref<16x32xf32, #tpu.memory_space<vmem>>) attributes {dimension_semantics = [#tpu.dimension_semantics<parallel>, #tpu.dimension_semantics<arbitrary>], iteration_bounds = array<i64: 1, 1>, scalar_prefetch = 0 : i64, scratch_operands = 1 : i64, tpu.core_type = #tpu.core_type<tc>, window_params = [{transform_indices = @transform_0, window_bounds = array<i64: 16, 32>}, {transform_indices = @transform_1, window_bounds = array<i64: 32, 64>}, {transform_indices = @transform_2, window_bounds = array<i64: 1, 64>}, {transform_indices = @transform_3, window_bounds = array<i64: 64, 32>}, {pipeline_mode = #tpu.pipeline_mode<synchronous>, transform_indices = @transform_4, window_bounds = array<i64: 1, 32>}, {pipeline_mode = #tpu.pipeline_mode<synchronous>, transform_indices = @transform_5, window_bounds = array<i64: 1, 32>}, {pipeline_mode = #tpu.pipeline_mode<synchronous>, transform_indices = @transform_6, window_bounds = array<i64: 1, 32>}, {transform_indices = @transform_7, window_bounds = array<i64: 16, 32>}]} {
    %c0_i32 = arith.constant 0 : i32
    %0 = arith.cmpi eq, %arg1, %c0_i32 : i32
    %1 = arith.extui %0 : i1 to i32
    %c0_i32_0 = arith.constant 0 : i32
    %2 = arith.cmpi ne, %1, %c0_i32_0 : i32
    scf.if %2 {
      %cst_16 = arith.constant 0.000000e+00 : f32
      %20 = vector.broadcast %cst_16 : f32 to vector<16x32xf32>
      %c0_17 = arith.constant 0 : index
      %c0_18 = arith.constant 0 : index
      %21 = vector.load %arg10[%c0_17, %c0_18] : memref<16x32xf32, #tpu.memory_space<vmem>>, vector<16x32xf32>
      tpu.vector_store %arg10[%c0_17, %c0_18], %20 {strides = array<i32>} : memref<16x32xf32, #tpu.memory_space<vmem>>, vector<16x32xf32>,
    } else {
    }
    %c0 = arith.constant 0 : index
    %c0_1 = arith.constant 0 : index
    %3 = vector.load %arg2[%c0, %c0_1] : memref<16x32xbf16, #tpu.memory_space<vmem>>, vector<16x32xbf16>
    %c0_2 = arith.constant 0 : index
    %c0_3 = arith.constant 0 : index
    %4 = vector.load %arg3[%c0_2, %c0_3] : memref<32x64xbf16, #tpu.memory_space<vmem>>, vector<32x64xbf16>
    %cst = arith.constant dense<0.000000e+00> : vector<16x64xf32>
    %5 = tpu.matmul %3, %4, %cst {dimension_numbers = #tpu.dot_dimension_numbers<[1], [0], [0], [1], [0, 0, 1, 1], [], []>} : vector<16x32xbf16>, vector<32x64xbf16>, vector<16x64xf32> -> vector<16x64xf32>
    %c0_4 = arith.constant 0 : index
    %c0_5 = arith.constant 0 : index
    %6 = vector.load %arg4[%c0_4, %c0_5] : memref<1x64xf32, #tpu.memory_space<vmem>>, vector<1x64xf32>
    %7 = vector.broadcast %6 : vector<1x64xf32> to vector<16x64xf32>
    %8 = arith.addf %5, %7 : vector<16x64xf32>
    %cst_6 = arith.constant 0.000000e+00 : f32
    %9 = vector.broadcast %cst_6 : f32 to vector<16x64xf32>
    %10 = arith.maximumf %8, %9 : vector<16x64xf32>
    %c0_7 = arith.constant 0 : index
    %c0_8 = arith.constant 0 : index
    %11 = vector.load %arg10[%c0_7, %c0_8] : memref<16x32xf32, #tpu.memory_space<vmem>>, vector<16x32xf32>
    %12 = arith.truncf %10 : vector<16x64xf32> to vector<16x64xbf16>
    %c0_9 = arith.constant 0 : index
    %c0_10 = arith.constant 0 : index
    %13 = vector.load %arg5[%c0_9, %c0_10] : memref<64x32xbf16, #tpu.memory_space<vmem>>, vector<64x32xbf16>
    %cst_11 = arith.constant dense<0.000000e+00> : vector<16x32xf32>
    %14 = tpu.matmul %12, %13, %cst_11 {dimension_numbers = #tpu.dot_dimension_numbers<[1], [0], [0], [1], [0, 0, 1, 1], [], []>} : vector<16x64xbf16>, vector<64x32xbf16>, vector<16x32xf32> -> vector<16x32xf32>
    %15 = arith.addf %11, %14 : vector<16x32xf32>
    %c0_12 = arith.constant 0 : index
    %c0_13 = arith.constant 0 : index
    %16 = vector.load %arg10[%c0_12, %c0_13] : memref<16x32xf32, #tpu.memory_space<vmem>>, vector<16x32xf32>
    tpu.vector_store %arg10[%c0_12, %c0_13], %15 {strides = array<i32>} : memref<16x32xf32, #tpu.memory_space<vmem>>, vector<16x32xf32>,
    %c0_i32_14 = arith.constant 0 : i32
    %17 = arith.cmpi eq, %arg1, %c0_i32_14 : i32
    %18 = arith.extui %17 : i1 to i32
    %c0_i32_15 = arith.constant 0 : i32
    %19 = arith.cmpi ne, %18, %c0_i32_15 : i32
    scf.if %19 {
      %c0_16 = arith.constant 0 : index
      %c0_17 = arith.constant 0 : index
      %20 = vector.load %arg2[%c0_16, %c0_17] : memref<16x32xbf16, #tpu.memory_space<vmem>>, vector<16x32xbf16>
      %21 = arith.extf %20 : vector<16x32xbf16> to vector<16x32xf32>
      %c0_18 = arith.constant 0 : index
      %c0_19 = arith.constant 0 : index
      %22 = vector.load %arg10[%c0_18, %c0_19] : memref<16x32xf32, #tpu.memory_space<vmem>>, vector<16x32xf32>
      %23 = arith.addf %21, %22 : vector<16x32xf32>
      %c0_20 = arith.constant 0 : index
      %c0_21 = arith.constant 0 : index
      %24 = vector.load %arg6[%c0_20, %c0_21] : memref<1x32xf32, #tpu.memory_space<vmem>>, vector<1x32xf32>
      %25 = vector.broadcast %24 : vector<1x32xf32> to vector<16x32xf32>
      %26 = arith.addf %23, %25 : vector<16x32xf32>
      %cst_22 = arith.constant dense<0.000000e+00> : vector<16xf32>
      %27 = vector.multi_reduction <add>, %26, %cst_22 [1] : vector<16x32xf32> to vector<16xf32>
      %28 = vector.shape_cast %27 : vector<16xf32> to vector<16x1xf32>
      %cst_23 = arith.constant 3.200000e+01 : f32
      %29 = vector.broadcast %cst_23 : f32 to vector<16x1xf32>
      %30 = arith.divf %28, %29 : vector<16x1xf32>
      %31 = vector.broadcast %30 : vector<16x1xf32> to vector<16x32xf32>
      %32 = arith.subf %26, %31 : vector<16x32xf32>
      %33 = arith.mulf %32, %32 : vector<16x32xf32>
      %cst_24 = arith.constant dense<0.000000e+00> : vector<16xf32>
      %34 = vector.multi_reduction <add>, %33, %cst_24 [1] : vector<16x32xf32> to vector<16xf32>
      %35 = vector.shape_cast %34 : vector<16xf32> to vector<16x1xf32>
      %cst_25 = arith.constant 3.200000e+01 : f32
      %36 = vector.broadcast %cst_25 : f32 to vector<16x1xf32>
      %37 = arith.divf %35, %36 : vector<16x1xf32>
      %38 = vector.broadcast %30 : vector<16x1xf32> to vector<16x32xf32>
      %39 = arith.subf %26, %38 : vector<16x32xf32>
      %cst_26 = arith.constant 9.99999974E-6 : f32
      %40 = vector.broadcast %cst_26 : f32 to vector<16x1xf32>
      %41 = arith.addf %37, %40 : vector<16x1xf32>
      %42 = math.rsqrt %41 : vector<16x1xf32>
      %43 = vector.broadcast %42 : vector<16x1xf32> to vector<16x32xf32>
      %44 = arith.mulf %39, %43 : vector<16x32xf32>
      %c0_27 = arith.constant 0 : index
      %c0_28 = arith.constant 0 : index
      %45 = vector.load %arg7[%c0_27, %c0_28] : memref<1x32xf32, #tpu.memory_space<vmem>>, vector<1x32xf32>
      %46 = vector.broadcast %45 : vector<1x32xf32> to vector<16x32xf32>
      %47 = arith.mulf %44, %46 : vector<16x32xf32>
      %c0_29 = arith.constant 0 : index
      %c0_30 = arith.constant 0 : index
      %48 = vector.load %arg8[%c0_29, %c0_30] : memref<1x32xf32, #tpu.memory_space<vmem>>, vector<1x32xf32>
      %49 = vector.broadcast %48 : vector<1x32xf32> to vector<16x32xf32>
      %50 = arith.addf %47, %49 : vector<16x32xf32>
      %51 = arith.truncf %50 : vector<16x32xf32> to vector<16x32xbf16>
      %c0_31 = arith.constant 0 : index
      %c0_32 = arith.constant 0 : index
      %52 = vector.load %arg9[%c0_31, %c0_32] : memref<16x32xbf16, #tpu.memory_space<vmem>>, vector<16x32xbf16>
      tpu.vector_store %arg9[%c0_31, %c0_32], %51 {strides = array<i32>} : memref<16x32xbf16, #tpu.memory_space<vmem>>, vector<16x32xbf16>,
    } else {
    }
    return
  }
  func.func @transform_0(%arg0: i32, %arg1: i32) -> (i32, i32) {
    %c0_i32 = arith.constant 0 : i32
    %c0_i32_0 = arith.constant 0 : i32
    return %arg0, %c0_i32 : i32, i32
  }
  func.func @transform_1(%arg0: i32, %arg1: i32) -> (i32, i32) {
    %c0_i32 = arith.constant 0 : i32
    %c0_i32_0 = arith.constant 0 : i32
    return %c0_i32, %arg1 : i32, i32
  }
  func.func @transform_2(%arg0: i32, %arg1: i32) -> (i32, i32) {
    %c0_i32 = arith.constant 0 : i32
    %c0_i32_0 = arith.constant 0 : i32
    return %c0_i32, %arg1 : i32, i32
  }
  func.func @transform_3(%arg0: i32, %arg1: i32) -> (i32, i32) {
    %c0_i32 = arith.constant 0 : i32
    %c0_i32_0 = arith.constant 0 : i32
    return %arg1, %c0_i32 : i32, i32
  }
  func.func @transform_4(%arg0: i32, %arg1: i32) -> (i32, i32) {
    %c0_i32 = arith.constant 0 : i32
    %c0_i32_0 = arith.constant 0 : i32
    %c0_i32_1 = arith.constant 0 : i32
    return %c0_i32, %c0_i32_0 : i32, i32
  }
  func.func @transform_5(%arg0: i32, %arg1: i32) -> (i32, i32) {
    %c0_i32 = arith.constant 0 : i32
    %c0_i32_0 = arith.constant 0 : i32
    %c0_i32_1 = arith.constant 0 : i32
    return %c0_i32, %c0_i32_0 : i32, i32
  }
  func.func @transform_6(%arg0: i32, %arg1: i32) -> (i32, i32) {
    %c0_i32 = arith.constant 0 : i32
    %c0_i32_0 = arith.constant 0 : i32
    %c0_i32_1 = arith.constant 0 : i32
    return %c0_i32, %c0_i32_0 : i32, i32
  }
  func.func @transform_7(%arg0: i32, %arg1: i32) -> (i32, i32) {
    %c0_i32 = arith.constant 0 : i32
    %c0_i32_0 = arith.constant 0 : i32
    return %arg0, %c0_i32 : i32, i32
  }
}

module attributes {stable_mosaic.version = 11 : i64} {
  func.func @_matmul_bias_kernel(%arg0: i32, %arg1: i32, %arg2: i32, %arg3: memref<16x32xbf16, #tpu.memory_space<vmem>>, %arg4: memref<32x32xbf16, #tpu.memory_space<vmem>>, %arg5: memref<1x32xf32, #tpu.memory_space<vmem>>, %arg6: memref<16x32xf32, #tpu.memory_space<vmem>>, %arg7: memref<16x32xf32, #tpu.memory_space<vmem>>) attributes {dimension_semantics = [#tpu.dimension_semantics<parallel>, #tpu.dimension_semantics<parallel>, #tpu.dimension_semantics<arbitrary>], iteration_bounds = array<i64: 1, 1, 1>, scalar_prefetch = 0 : i64, scratch_operands = 1 : i64, tpu.core_type = #tpu.core_type<tc>, window_params = [{transform_indices = @transform_0, window_bounds = array<i64: 16, 32>}, {transform_indices = @transform_1, window_bounds = array<i64: 32, 32>}, {transform_indices = @transform_2, window_bounds = array<i64: 1, 32>}, {transform_indices = @transform_3, window_bounds = array<i64: 16, 32>}]} {
    %c0_i32 = arith.constant 0 : i32
    %0 = arith.cmpi eq, %arg2, %c0_i32 : i32
    %1 = arith.extui %0 : i1 to i32
    %c0_i32_0 = arith.constant 0 : i32
    %2 = arith.cmpi ne, %1, %c0_i32_0 : i32
    scf.if %2 {
      %cst_10 = arith.constant 0.000000e+00 : f32
      %12 = vector.broadcast %cst_10 : f32 to vector<16x32xf32>
      %c0_11 = arith.constant 0 : index
      %c0_12 = arith.constant 0 : index
      %13 = vector.load %arg7[%c0_11, %c0_12] : memref<16x32xf32, #tpu.memory_space<vmem>>, vector<16x32xf32>
      tpu.vector_store %arg7[%c0_11, %c0_12], %12 {strides = array<i32>} : memref<16x32xf32, #tpu.memory_space<vmem>>, vector<16x32xf32>,
    } else {
    }
    %c0 = arith.constant 0 : index
    %c0_1 = arith.constant 0 : index
    %3 = vector.load %arg7[%c0, %c0_1] : memref<16x32xf32, #tpu.memory_space<vmem>>, vector<16x32xf32>
    %c0_2 = arith.constant 0 : index
    %c0_3 = arith.constant 0 : index
    %4 = vector.load %arg3[%c0_2, %c0_3] : memref<16x32xbf16, #tpu.memory_space<vmem>>, vector<16x32xbf16>
    %c0_4 = arith.constant 0 : index
    %c0_5 = arith.constant 0 : index
    %5 = vector.load %arg4[%c0_4, %c0_5] : memref<32x32xbf16, #tpu.memory_space<vmem>>, vector<32x32xbf16>
    %cst = arith.constant dense<0.000000e+00> : vector<16x32xf32>
    %6 = tpu.matmul %4, %5, %cst {dimension_numbers = #tpu.dot_dimension_numbers<[1], [0], [0], [1], [0, 0, 1, 1], [], []>} : vector<16x32xbf16>, vector<32x32xbf16>, vector<16x32xf32> -> vector<16x32xf32>
    %7 = arith.addf %3, %6 : vector<16x32xf32>
    %c0_6 = arith.constant 0 : index
    %c0_7 = arith.constant 0 : index
    %8 = vector.load %arg7[%c0_6, %c0_7] : memref<16x32xf32, #tpu.memory_space<vmem>>, vector<16x32xf32>
    tpu.vector_store %arg7[%c0_6, %c0_7], %7 {strides = array<i32>} : memref<16x32xf32, #tpu.memory_space<vmem>>, vector<16x32xf32>,
    %c0_i32_8 = arith.constant 0 : i32
    %9 = arith.cmpi eq, %arg2, %c0_i32_8 : i32
    %10 = arith.extui %9 : i1 to i32
    %c0_i32_9 = arith.constant 0 : i32
    %11 = arith.cmpi ne, %10, %c0_i32_9 : i32
    scf.if %11 {
      %c0_10 = arith.constant 0 : index
      %c0_11 = arith.constant 0 : index
      %12 = vector.load %arg7[%c0_10, %c0_11] : memref<16x32xf32, #tpu.memory_space<vmem>>, vector<16x32xf32>
      %c0_12 = arith.constant 0 : index
      %c0_13 = arith.constant 0 : index
      %13 = vector.load %arg5[%c0_12, %c0_13] : memref<1x32xf32, #tpu.memory_space<vmem>>, vector<1x32xf32>
      %14 = vector.broadcast %13 : vector<1x32xf32> to vector<16x32xf32>
      %15 = arith.addf %12, %14 : vector<16x32xf32>
      %c0_14 = arith.constant 0 : index
      %c0_15 = arith.constant 0 : index
      %16 = vector.load %arg6[%c0_14, %c0_15] : memref<16x32xf32, #tpu.memory_space<vmem>>, vector<16x32xf32>
      tpu.vector_store %arg6[%c0_14, %c0_15], %15 {strides = array<i32>} : memref<16x32xf32, #tpu.memory_space<vmem>>, vector<16x32xf32>,
    } else {
    }
    return
  }
  func.func @transform_0(%arg0: i32, %arg1: i32, %arg2: i32) -> (i32, i32) {
    %c0_i32 = arith.constant 0 : i32
    return %arg0, %arg2 : i32, i32
  }
  func.func @transform_1(%arg0: i32, %arg1: i32, %arg2: i32) -> (i32, i32) {
    %c0_i32 = arith.constant 0 : i32
    return %arg2, %arg1 : i32, i32
  }
  func.func @transform_2(%arg0: i32, %arg1: i32, %arg2: i32) -> (i32, i32) {
    %c0_i32 = arith.constant 0 : i32
    %c0_i32_0 = arith.constant 0 : i32
    return %c0_i32, %arg1 : i32, i32
  }
  func.func @transform_3(%arg0: i32, %arg1: i32, %arg2: i32) -> (i32, i32) {
    %c0_i32 = arith.constant 0 : i32
    return %arg0, %arg1 : i32, i32
  }
}

module attributes {stable_mosaic.version = 11 : i64} {
  func.func @_attn_block_kernel(%arg0: i32, %arg1: i32, %arg2: memref<1x8x32xbf16, #tpu.memory_space<vmem>>, %arg3: memref<1x8x32xbf16, #tpu.memory_space<vmem>>, %arg4: memref<32x32xbf16, #tpu.memory_space<vmem>>, %arg5: memref<1x32xf32, #tpu.memory_space<vmem>>, %arg6: memref<32x64xbf16, #tpu.memory_space<vmem>>, %arg7: memref<1x64xf32, #tpu.memory_space<vmem>>, %arg8: memref<32x32xbf16, #tpu.memory_space<vmem>>, %arg9: memref<1x32xf32, #tpu.memory_space<vmem>>, %arg10: memref<1x32xf32, #tpu.memory_space<vmem>>, %arg11: memref<1x32xf32, #tpu.memory_space<vmem>>, %arg12: memref<8x8xf32, #tpu.memory_space<vmem>>, %arg13: memref<1x8x32xbf16, #tpu.memory_space<vmem>>, %arg14: memref<4x8x8xbf16, #tpu.memory_space<vmem>>, %arg15: memref<4x8x8xbf16, #tpu.memory_space<vmem>>, %arg16: memref<8x32xf32, #tpu.memory_space<vmem>>) attributes {dimension_semantics = [#tpu.dimension_semantics<parallel>, #tpu.dimension_semantics<arbitrary>], iteration_bounds = array<i64: 2, 1>, scalar_prefetch = 0 : i64, scratch_operands = 3 : i64, tpu.core_type = #tpu.core_type<tc>, window_params = [{transform_indices = @transform_0, window_bounds = array<i64: 1, 8, 32>}, {transform_indices = @transform_1, window_bounds = array<i64: 1, 8, 32>}, {pipeline_mode = #tpu.pipeline_mode<synchronous>, transform_indices = @transform_2, window_bounds = array<i64: 32, 32>}, {pipeline_mode = #tpu.pipeline_mode<synchronous>, transform_indices = @transform_3, window_bounds = array<i64: 1, 32>}, {pipeline_mode = #tpu.pipeline_mode<synchronous>, transform_indices = @transform_4, window_bounds = array<i64: 32, 64>}, {pipeline_mode = #tpu.pipeline_mode<synchronous>, transform_indices = @transform_5, window_bounds = array<i64: 1, 64>}, {pipeline_mode = #tpu.pipeline_mode<synchronous>, transform_indices = @transform_6, window_bounds = array<i64: 32, 32>}, {pipeline_mode = #tpu.pipeline_mode<synchronous>, transform_indices = @transform_7, window_bounds = array<i64: 1, 32>}, {pipeline_mode = #tpu.pipeline_mode<synchronous>, transform_indices = @transform_8, window_bounds = array<i64: 1, 32>}, {pipeline_mode = #tpu.pipeline_mode<synchronous>, transform_indices = @transform_9, window_bounds = array<i64: 1, 32>}, {transform_indices = @transform_10, window_bounds = array<i64: 8, 8>}, {transform_indices = @transform_11, window_bounds = array<i64: 1, 8, 32>}]} {
    %c0_i32 = arith.constant 0 : i32
    %0 = arith.cmpi eq, %arg1, %c0_i32 : i32
    %1 = arith.extui %0 : i1 to i32
    %c0_i32_0 = arith.constant 0 : i32
    %2 = arith.cmpi ne, %1, %c0_i32_0 : i32
    scf.if %2 {
      %c0_74 = arith.constant 0 : index
      %c0_75 = arith.constant 0 : index
      %c0_76 = arith.constant 0 : index
      %141 = vector.load %arg3[%c0_74, %c0_75, %c0_76] : memref<1x8x32xbf16, #tpu.memory_space<vmem>>, vector<1x8x32xbf16>
      %142 = vector.shape_cast %141 : vector<1x8x32xbf16> to vector<8x32xbf16>
      %143 = arith.extf %142 : vector<8x32xbf16> to vector<8x32xf32>
      %144 = arith.truncf %143 : vector<8x32xf32> to vector<8x32xbf16>
      %c0_77 = arith.constant 0 : index
      %c0_78 = arith.constant 0 : index
      %145 = vector.load %arg6[%c0_77, %c0_78] : memref<32x64xbf16, #tpu.memory_space<vmem>>, vector<32x64xbf16>
      %cst_79 = arith.constant dense<0.000000e+00> : vector<8x64xf32>
      %146 = tpu.matmul %144, %145, %cst_79 {dimension_numbers = #tpu.dot_dimension_numbers<[1], [0], [0], [1], [0, 0, 1, 1], [], []>} : vector<8x32xbf16>, vector<32x64xbf16>, vector<8x64xf32> -> vector<8x64xf32>
      %c0_80 = arith.constant 0 : index
      %c0_81 = arith.constant 0 : index
      %147 = vector.load %arg7[%c0_80, %c0_81] : memref<1x64xf32, #tpu.memory_space<vmem>>, vector<1x64xf32>
      %148 = vector.broadcast %147 : vector<1x64xf32> to vector<8x64xf32>
      %149 = arith.addf %146, %148 : vector<8x64xf32>
      %150 = vector.extract_strided_slice %149 {offsets = [0, 0], sizes = [8, 8], strides = [1, 1]} : vector<8x64xf32> to vector<8x8xf32>
      %151 = arith.truncf %150 : vector<8x8xf32> to vector<8x8xbf16>
      %c0_82 = arith.constant 0 : index
      %c0_83 = arith.constant 0 : index
      %c0_84 = arith.constant 0 : index
      %152 = vector.load %arg14[%c0_82, %c0_83, %c0_84] : memref<4x8x8xbf16, #tpu.memory_space<vmem>>, vector<1x8x8xbf16>
      %153 = vector.shape_cast %152 : vector<1x8x8xbf16> to vector<8x8xbf16>
      %154 = vector.shape_cast %151 : vector<8x8xbf16> to vector<1x8x8xbf16>
      tpu.vector_store %arg14[%c0_82, %c0_83, %c0_84], %154 {strides = array<i32>} : memref<4x8x8xbf16, #tpu.memory_space<vmem>>, vector<1x8x8xbf16>,
      %155 = vector.extract_strided_slice %149 {offsets = [0, 32], sizes = [8, 8], strides = [1, 1]} : vector<8x64xf32> to vector<8x8xf32>
      %156 = arith.truncf %155 : vector<8x8xf32> to vector<8x8xbf16>
      %c0_85 = arith.constant 0 : index
      %c0_86 = arith.constant 0 : index
      %c0_87 = arith.constant 0 : index
      %157 = vector.load %arg15[%c0_85, %c0_86, %c0_87] : memref<4x8x8xbf16, #tpu.memory_space<vmem>>, vector<1x8x8xbf16>
      %158 = vector.shape_cast %157 : vector<1x8x8xbf16> to vector<8x8xbf16>
      %159 = vector.shape_cast %156 : vector<8x8xbf16> to vector<1x8x8xbf16>
      tpu.vector_store %arg15[%c0_85, %c0_86, %c0_87], %159 {strides = array<i32>} : memref<4x8x8xbf16, #tpu.memory_space<vmem>>, vector<1x8x8xbf16>,
      %160 = vector.extract_strided_slice %149 {offsets = [0, 8], sizes = [8, 8], strides = [1, 1]} : vector<8x64xf32> to vector<8x8xf32>
      %161 = arith.truncf %160 : vector<8x8xf32> to vector<8x8xbf16>
      %c1_88 = arith.constant 1 : index
      %c0_89 = arith.constant 0 : index
      %c0_90 = arith.constant 0 : index
      %162 = vector.load %arg14[%c1_88, %c0_89, %c0_90] : memref<4x8x8xbf16, #tpu.memory_space<vmem>>, vector<1x8x8xbf16>
      %163 = vector.shape_cast %162 : vector<1x8x8xbf16> to vector<8x8xbf16>
      %164 = vector.shape_cast %161 : vector<8x8xbf16> to vector<1x8x8xbf16>
      tpu.vector_store %arg14[%c1_88, %c0_89, %c0_90], %164 {strides = array<i32>} : memref<4x8x8xbf16, #tpu.memory_space<vmem>>, vector<1x8x8xbf16>,
      %165 = vector.extract_strided_slice %149 {offsets = [0, 40], sizes = [8, 8], strides = [1, 1]} : vector<8x64xf32> to vector<8x8xf32>
      %166 = arith.truncf %165 : vector<8x8xf32> to vector<8x8xbf16>
      %c1_91 = arith.constant 1 : index
      %c0_92 = arith.constant 0 : index
      %c0_93 = arith.constant 0 : index
      %167 = vector.load %arg15[%c1_91, %c0_92, %c0_93] : memref<4x8x8xbf16, #tpu.memory_space<vmem>>, vector<1x8x8xbf16>
      %168 = vector.shape_cast %167 : vector<1x8x8xbf16> to vector<8x8xbf16>
      %169 = vector.shape_cast %166 : vector<8x8xbf16> to vector<1x8x8xbf16>
      tpu.vector_store %arg15[%c1_91, %c0_92, %c0_93], %169 {strides = array<i32>} : memref<4x8x8xbf16, #tpu.memory_space<vmem>>, vector<1x8x8xbf16>,
      %170 = vector.extract_strided_slice %149 {offsets = [0, 16], sizes = [8, 8], strides = [1, 1]} : vector<8x64xf32> to vector<8x8xf32>
      %171 = arith.truncf %170 : vector<8x8xf32> to vector<8x8xbf16>
      %c2_94 = arith.constant 2 : index
      %c0_95 = arith.constant 0 : index
      %c0_96 = arith.constant 0 : index
      %172 = vector.load %arg14[%c2_94, %c0_95, %c0_96] : memref<4x8x8xbf16, #tpu.memory_space<vmem>>, vector<1x8x8xbf16>
      %173 = vector.shape_cast %172 : vector<1x8x8xbf16> to vector<8x8xbf16>
      %174 = vector.shape_cast %171 : vector<8x8xbf16> to vector<1x8x8xbf16>
      tpu.vector_store %arg14[%c2_94, %c0_95, %c0_96], %174 {strides = array<i32>} : memref<4x8x8xbf16, #tpu.memory_space<vmem>>, vector<1x8x8xbf16>,
      %175 = vector.extract_strided_slice %149 {offsets = [0, 48], sizes = [8, 8], strides = [1, 1]} : vector<8x64xf32> to vector<8x8xf32>
      %176 = arith.truncf %175 : vector<8x8xf32> to vector<8x8xbf16>
      %c2_97 = arith.constant 2 : index
      %c0_98 = arith.constant 0 : index
      %c0_99 = arith.constant 0 : index
      %177 = vector.load %arg15[%c2_97, %c0_98, %c0_99] : memref<4x8x8xbf16, #tpu.memory_space<vmem>>, vector<1x8x8xbf16>
      %178 = vector.shape_cast %177 : vector<1x8x8xbf16> to vector<8x8xbf16>
      %179 = vector.shape_cast %176 : vector<8x8xbf16> to vector<1x8x8xbf16>
      tpu.vector_store %arg15[%c2_97, %c0_98, %c0_99], %179 {strides = array<i32>} : memref<4x8x8xbf16, #tpu.memory_space<vmem>>, vector<1x8x8xbf16>,
      %180 = vector.extract_strided_slice %149 {offsets = [0, 24], sizes = [8, 8], strides = [1, 1]} : vector<8x64xf32> to vector<8x8xf32>
      %181 = arith.truncf %180 : vector<8x8xf32> to vector<8x8xbf16>
      %c3_100 = arith.constant 3 : index
      %c0_101 = arith.constant 0 : index
      %c0_102 = arith.constant 0 : index
      %182 = vector.load %arg14[%c3_100, %c0_101, %c0_102] : memref<4x8x8xbf16, #tpu.memory_space<vmem>>, vector<1x8x8xbf16>
      %183 = vector.shape_cast %182 : vector<1x8x8xbf16> to vector<8x8xbf16>
      %184 = vector.shape_cast %181 : vector<8x8xbf16> to vector<1x8x8xbf16>
      tpu.vector_store %arg14[%c3_100, %c0_101, %c0_102], %184 {strides = array<i32>} : memref<4x8x8xbf16, #tpu.memory_space<vmem>>, vector<1x8x8xbf16>,
      %185 = vector.extract_strided_slice %149 {offsets = [0, 56], sizes = [8, 8], strides = [1, 1]} : vector<8x64xf32> to vector<8x8xf32>
      %186 = arith.truncf %185 : vector<8x8xf32> to vector<8x8xbf16>
      %c3_103 = arith.constant 3 : index
      %c0_104 = arith.constant 0 : index
      %c0_105 = arith.constant 0 : index
      %187 = vector.load %arg15[%c3_103, %c0_104, %c0_105] : memref<4x8x8xbf16, #tpu.memory_space<vmem>>, vector<1x8x8xbf16>
      %188 = vector.shape_cast %187 : vector<1x8x8xbf16> to vector<8x8xbf16>
      %189 = vector.shape_cast %186 : vector<8x8xbf16> to vector<1x8x8xbf16>
      tpu.vector_store %arg15[%c3_103, %c0_104, %c0_105], %189 {strides = array<i32>} : memref<4x8x8xbf16, #tpu.memory_space<vmem>>, vector<1x8x8xbf16>,
    } else {
    }
    %c0 = arith.constant 0 : index
    %c0_1 = arith.constant 0 : index
    %c0_2 = arith.constant 0 : index
    %3 = vector.load %arg2[%c0, %c0_1, %c0_2] : memref<1x8x32xbf16, #tpu.memory_space<vmem>>, vector<1x8x32xbf16>
    %4 = vector.shape_cast %3 : vector<1x8x32xbf16> to vector<8x32xbf16>
    %5 = arith.extf %4 : vector<8x32xbf16> to vector<8x32xf32>
    %6 = arith.truncf %5 : vector<8x32xf32> to vector<8x32xbf16>
    %c0_3 = arith.constant 0 : index
    %c0_4 = arith.constant 0 : index
    %7 = vector.load %arg4[%c0_3, %c0_4] : memref<32x32xbf16, #tpu.memory_space<vmem>>, vector<32x32xbf16>
    %cst = arith.constant dense<0.000000e+00> : vector<8x32xf32>
    %8 = tpu.matmul %6, %7, %cst {dimension_numbers = #tpu.dot_dimension_numbers<[1], [0], [0], [1], [0, 0, 1, 1], [], []>} : vector<8x32xbf16>, vector<32x32xbf16>, vector<8x32xf32> -> vector<8x32xf32>
    %c0_5 = arith.constant 0 : index
    %c0_6 = arith.constant 0 : index
    %9 = vector.load %arg5[%c0_5, %c0_6] : memref<1x32xf32, #tpu.memory_space<vmem>>, vector<1x32xf32>
    %10 = vector.broadcast %9 : vector<1x32xf32> to vector<8x32xf32>
    %11 = arith.addf %8, %10 : vector<8x32xf32>
    %c0_7 = arith.constant 0 : index
    %c0_8 = arith.constant 0 : index
    %12 = vector.load %arg12[%c0_7, %c0_8] : memref<8x8xf32, #tpu.memory_space<vmem>>, vector<8x8xf32>
    %13 = vector.extract_strided_slice %11 {offsets = [0, 0], sizes = [8, 8], strides = [1, 1]} : vector<8x32xf32> to vector<8x8xf32>
    %14 = arith.truncf %13 : vector<8x8xf32> to vector<8x8xbf16>
    %c0_9 = arith.constant 0 : index
    %c0_10 = arith.constant 0 : index
    %c0_11 = arith.constant 0 : index
    %15 = vector.load %arg14[%c0_9, %c0_10, %c0_11] : memref<4x8x8xbf16, #tpu.memory_space<vmem>>, vector<1x8x8xbf16>
    %16 = vector.shape_cast %15 : vector<1x8x8xbf16> to vector<8x8xbf16>
    %cst_12 = arith.constant dense<0.000000e+00> : vector<8x8xf32>
    %17 = tpu.matmul %14, %16, %cst_12 {dimension_numbers = #tpu.dot_dimension_numbers<[1], [1], [0], [0], [0, 0, 1, 0], [], []>} : vector<8x8xbf16>, vector<8x8xbf16>, vector<8x8xf32> -> vector<8x8xf32>
    %cst_13 = arith.constant 0.353553385 : f32
    %18 = vector.broadcast %cst_13 : f32 to vector<8x8xf32>
    %19 = arith.mulf %17, %18 : vector<8x8xf32>
    %20 = arith.addf %19, %12 : vector<8x8xf32>
    %cst_14 = arith.constant dense<0xFF800000> : vector<8xf32>
    %21 = vector.multi_reduction <maximumf>, %20, %cst_14 [1] : vector<8x8xf32> to vector<8xf32>
    %22 = vector.shape_cast %21 : vector<8xf32> to vector<8x1xf32>
    %23 = vector.broadcast %22 : vector<8x1xf32> to vector<8x8xf32>
    %24 = arith.subf %20, %23 : vector<8x8xf32>
    %25 = math.exp %24 : vector<8x8xf32>
    %cst_15 = arith.constant dense<0.000000e+00> : vector<8xf32>
    %26 = vector.multi_reduction <add>, %25, %cst_15 [1] : vector<8x8xf32> to vector<8xf32>
    %27 = vector.shape_cast %26 : vector<8xf32> to vector<8x1xf32>
    %28 = tpu.reciprocal %27 : vector<8x1xf32> -> vector<8x1xf32>
    %29 = vector.broadcast %28 : vector<8x1xf32> to vector<8x8xf32>
    %30 = arith.mulf %25, %29 : vector<8x8xf32>
    %31 = arith.truncf %30 : vector<8x8xf32> to vector<8x8xbf16>
    %c0_16 = arith.constant 0 : index
    %c0_17 = arith.constant 0 : index
    %c0_18 = arith.constant 0 : index
    %32 = vector.load %arg15[%c0_16, %c0_17, %c0_18] : memref<4x8x8xbf16, #tpu.memory_space<vmem>>, vector<1x8x8xbf16>
    %33 = vector.shape_cast %32 : vector<1x8x8xbf16> to vector<8x8xbf16>
    %cst_19 = arith.constant dense<0.000000e+00> : vector<8x8xf32>
    %34 = tpu.matmul %31, %33, %cst_19 {dimension_numbers = #tpu.dot_dimension_numbers<[1], [0], [0], [1], [0, 0, 1, 1], [], []>} : vector<8x8xbf16>, vector<8x8xbf16>, vector<8x8xf32> -> vector<8x8xf32>
    %c0_20 = arith.constant 0 : index
    %c0_21 = arith.constant 0 : index
    %35 = vector.load %arg16[%c0_20, %c0_21] : memref<8x32xf32, #tpu.memory_space<vmem>>, vector<8x8xf32>
    tpu.vector_store %arg16[%c0_20, %c0_21], %34 {strides = array<i32>} : memref<8x32xf32, #tpu.memory_space<vmem>>, vector<8x8xf32>,
    %36 = vector.extract_strided_slice %11 {offsets = [0, 8], sizes = [8, 8], strides = [1, 1]} : vector<8x32xf32> to vector<8x8xf32>
    %37 = arith.truncf %36 : vector<8x8xf32> to vector<8x8xbf16>
    %c1 = arith.constant 1 : index
    %c0_22 = arith.constant 0 : index
    %c0_23 = arith.constant 0 : index
    %38 = vector.load %arg14[%c1, %c0_22, %c0_23] : memref<4x8x8xbf16, #tpu.memory_space<vmem>>, vector<1x8x8xbf16>
    %39 = vector.shape_cast %38 : vector<1x8x8xbf16> to vector<8x8xbf16>
    %cst_24 = arith.constant dense<0.000000e+00> : vector<8x8xf32>
    %40 = tpu.matmul %37, %39, %cst_24 {dimension_numbers = #tpu.dot_dimension_numbers<[1], [1], [0], [0], [0, 0, 1, 0], [], []>} : vector<8x8xbf16>, vector<8x8xbf16>, vector<8x8xf32> -> vector<8x8xf32>
    %cst_25 = arith.constant 0.353553385 : f32
    %41 = vector.broadcast %cst_25 : f32 to vector<8x8xf32>
    %42 = arith.mulf %40, %41 : vector<8x8xf32>
    %43 = arith.addf %42, %12 : vector<8x8xf32>
    %cst_26 = arith.constant dense<0xFF800000> : vector<8xf32>
    %44 = vector.multi_reduction <maximumf>, %43, %cst_26 [1] : vector<8x8xf32> to vector<8xf32>
    %45 = vector.shape_cast %44 : vector<8xf32> to vector<8x1xf32>
    %46 = vector.broadcast %45 : vector<8x1xf32> to vector<8x8xf32>
    %47 = arith.subf %43, %46 : vector<8x8xf32>
    %48 = math.exp %47 : vector<8x8xf32>
    %cst_27 = arith.constant dense<0.000000e+00> : vector<8xf32>
    %49 = vector.multi_reduction <add>, %48, %cst_27 [1] : vector<8x8xf32> to vector<8xf32>
    %50 = vector.shape_cast %49 : vector<8xf32> to vector<8x1xf32>
    %51 = tpu.reciprocal %50 : vector<8x1xf32> -> vector<8x1xf32>
    %52 = vector.broadcast %51 : vector<8x1xf32> to vector<8x8xf32>
    %53 = arith.mulf %48, %52 : vector<8x8xf32>
    %54 = arith.truncf %53 : vector<8x8xf32> to vector<8x8xbf16>
    %c1_28 = arith.constant 1 : index
    %c0_29 = arith.constant 0 : index
    %c0_30 = arith.constant 0 : index
    %55 = vector.load %arg15[%c1_28, %c0_29, %c0_30] : memref<4x8x8xbf16, #tpu.memory_space<vmem>>, vector<1x8x8xbf16>
    %56 = vector.shape_cast %55 : vector<1x8x8xbf16> to vector<8x8xbf16>
    %cst_31 = arith.constant dense<0.000000e+00> : vector<8x8xf32>
    %57 = tpu.matmul %54, %56, %cst_31 {dimension_numbers = #tpu.dot_dimension_numbers<[1], [0], [0], [1], [0, 0, 1, 1], [], []>} : vector<8x8xbf16>, vector<8x8xbf16>, vector<8x8xf32> -> vector<8x8xf32>
    %c0_32 = arith.constant 0 : index
    %c8 = arith.constant 8 : index
    %58 = vector.load %arg16[%c0_32, %c8] : memref<8x32xf32, #tpu.memory_space<vmem>>, vector<8x8xf32>
    tpu.vector_store %arg16[%c0_32, %c8], %57 {strides = array<i32>} : memref<8x32xf32, #tpu.memory_space<vmem>>, vector<8x8xf32>,
    %59 = vector.extract_strided_slice %11 {offsets = [0, 16], sizes = [8, 8], strides = [1, 1]} : vector<8x32xf32> to vector<8x8xf32>
    %60 = arith.truncf %59 : vector<8x8xf32> to vector<8x8xbf16>
    %c2 = arith.constant 2 : index
    %c0_33 = arith.constant 0 : index
    %c0_34 = arith.constant 0 : index
    %61 = vector.load %arg14[%c2, %c0_33, %c0_34] : memref<4x8x8xbf16, #tpu.memory_space<vmem>>, vector<1x8x8xbf16>
    %62 = vector.shape_cast %61 : vector<1x8x8xbf16> to vector<8x8xbf16>
    %cst_35 = arith.constant dense<0.000000e+00> : vector<8x8xf32>
    %63 = tpu.matmul %60, %62, %cst_35 {dimension_numbers = #tpu.dot_dimension_numbers<[1], [1], [0], [0], [0, 0, 1, 0], [], []>} : vector<8x8xbf16>, vector<8x8xbf16>, vector<8x8xf32> -> vector<8x8xf32>
    %cst_36 = arith.constant 0.353553385 : f32
    %64 = vector.broadcast %cst_36 : f32 to vector<8x8xf32>
    %65 = arith.mulf %63, %64 : vector<8x8xf32>
    %66 = arith.addf %65, %12 : vector<8x8xf32>
    %cst_37 = arith.constant dense<0xFF800000> : vector<8xf32>
    %67 = vector.multi_reduction <maximumf>, %66, %cst_37 [1] : vector<8x8xf32> to vector<8xf32>
    %68 = vector.shape_cast %67 : vector<8xf32> to vector<8x1xf32>
    %69 = vector.broadcast %68 : vector<8x1xf32> to vector<8x8xf32>
    %70 = arith.subf %66, %69 : vector<8x8xf32>
    %71 = math.exp %70 : vector<8x8xf32>
    %cst_38 = arith.constant dense<0.000000e+00> : vector<8xf32>
    %72 = vector.multi_reduction <add>, %71, %cst_38 [1] : vector<8x8xf32> to vector<8xf32>
    %73 = vector.shape_cast %72 : vector<8xf32> to vector<8x1xf32>
    %74 = tpu.reciprocal %73 : vector<8x1xf32> -> vector<8x1xf32>
    %75 = vector.broadcast %74 : vector<8x1xf32> to vector<8x8xf32>
    %76 = arith.mulf %71, %75 : vector<8x8xf32>
    %77 = arith.truncf %76 : vector<8x8xf32> to vector<8x8xbf16>
    %c2_39 = arith.constant 2 : index
    %c0_40 = arith.constant 0 : index
    %c0_41 = arith.constant 0 : index
    %78 = vector.load %arg15[%c2_39, %c0_40, %c0_41] : memref<4x8x8xbf16, #tpu.memory_space<vmem>>, vector<1x8x8xbf16>
    %79 = vector.shape_cast %78 : vector<1x8x8xbf16> to vector<8x8xbf16>
    %cst_42 = arith.constant dense<0.000000e+00> : vector<8x8xf32>
    %80 = tpu.matmul %77, %79, %cst_42 {dimension_numbers = #tpu.dot_dimension_numbers<[1], [0], [0], [1], [0, 0, 1, 1], [], []>} : vector<8x8xbf16>, vector<8x8xbf16>, vector<8x8xf32> -> vector<8x8xf32>
    %c0_43 = arith.constant 0 : index
    %c16 = arith.constant 16 : index
    %81 = vector.load %arg16[%c0_43, %c16] : memref<8x32xf32, #tpu.memory_space<vmem>>, vector<8x8xf32>
    tpu.vector_store %arg16[%c0_43, %c16], %80 {strides = array<i32>} : memref<8x32xf32, #tpu.memory_space<vmem>>, vector<8x8xf32>,
    %82 = vector.extract_strided_slice %11 {offsets = [0, 24], sizes = [8, 8], strides = [1, 1]} : vector<8x32xf32> to vector<8x8xf32>
    %83 = arith.truncf %82 : vector<8x8xf32> to vector<8x8xbf16>
    %c3 = arith.constant 3 : index
    %c0_44 = arith.constant 0 : index
    %c0_45 = arith.constant 0 : index
    %84 = vector.load %arg14[%c3, %c0_44, %c0_45] : memref<4x8x8xbf16, #tpu.memory_space<vmem>>, vector<1x8x8xbf16>
    %85 = vector.shape_cast %84 : vector<1x8x8xbf16> to vector<8x8xbf16>
    %cst_46 = arith.constant dense<0.000000e+00> : vector<8x8xf32>
    %86 = tpu.matmul %83, %85, %cst_46 {dimension_numbers = #tpu.dot_dimension_numbers<[1], [1], [0], [0], [0, 0, 1, 0], [], []>} : vector<8x8xbf16>, vector<8x8xbf16>, vector<8x8xf32> -> vector<8x8xf32>
    %cst_47 = arith.constant 0.353553385 : f32
    %87 = vector.broadcast %cst_47 : f32 to vector<8x8xf32>
    %88 = arith.mulf %86, %87 : vector<8x8xf32>
    %89 = arith.addf %88, %12 : vector<8x8xf32>
    %cst_48 = arith.constant dense<0xFF800000> : vector<8xf32>
    %90 = vector.multi_reduction <maximumf>, %89, %cst_48 [1] : vector<8x8xf32> to vector<8xf32>
    %91 = vector.shape_cast %90 : vector<8xf32> to vector<8x1xf32>
    %92 = vector.broadcast %91 : vector<8x1xf32> to vector<8x8xf32>
    %93 = arith.subf %89, %92 : vector<8x8xf32>
    %94 = math.exp %93 : vector<8x8xf32>
    %cst_49 = arith.constant dense<0.000000e+00> : vector<8xf32>
    %95 = vector.multi_reduction <add>, %94, %cst_49 [1] : vector<8x8xf32> to vector<8xf32>
    %96 = vector.shape_cast %95 : vector<8xf32> to vector<8x1xf32>
    %97 = tpu.reciprocal %96 : vector<8x1xf32> -> vector<8x1xf32>
    %98 = vector.broadcast %97 : vector<8x1xf32> to vector<8x8xf32>
    %99 = arith.mulf %94, %98 : vector<8x8xf32>
    %100 = arith.truncf %99 : vector<8x8xf32> to vector<8x8xbf16>
    %c3_50 = arith.constant 3 : index
    %c0_51 = arith.constant 0 : index
    %c0_52 = arith.constant 0 : index
    %101 = vector.load %arg15[%c3_50, %c0_51, %c0_52] : memref<4x8x8xbf16, #tpu.memory_space<vmem>>, vector<1x8x8xbf16>
    %102 = vector.shape_cast %101 : vector<1x8x8xbf16> to vector<8x8xbf16>
    %cst_53 = arith.constant dense<0.000000e+00> : vector<8x8xf32>
    %103 = tpu.matmul %100, %102, %cst_53 {dimension_numbers = #tpu.dot_dimension_numbers<[1], [0], [0], [1], [0, 0, 1, 1], [], []>} : vector<8x8xbf16>, vector<8x8xbf16>, vector<8x8xf32> -> vector<8x8xf32>
    %c0_54 = arith.constant 0 : index
    %c24 = arith.constant 24 : index
    %104 = vector.load %arg16[%c0_54, %c24] : memref<8x32xf32, #tpu.memory_space<vmem>>, vector<8x8xf32>
    tpu.vector_store %arg16[%c0_54, %c24], %103 {strides = array<i32>} : memref<8x32xf32, #tpu.memory_space<vmem>>, vector<8x8xf32>,
    %c0_55 = arith.constant 0 : index
    %c0_56 = arith.constant 0 : index
    %105 = vector.load %arg16[%c0_55, %c0_56] : memref<8x32xf32, #tpu.memory_space<vmem>>, vector<8x32xf32>
    %106 = arith.truncf %105 : vector<8x32xf32> to vector<8x32xbf16>
    %c0_57 = arith.constant 0 : index
    %c0_58 = arith.constant 0 : index
    %107 = vector.load %arg8[%c0_57, %c0_58] : memref<32x32xbf16, #tpu.memory_space<vmem>>, vector<32x32xbf16>
    %cst_59 = arith.constant dense<0.000000e+00> : vector<8x32xf32>
    %108 = tpu.matmul %106, %107, %cst_59 {dimension_numbers = #tpu.dot_dimension_numbers<[1], [0], [0], [1], [0, 0, 1, 1], [], []>} : vector<8x32xbf16>, vector<32x32xbf16>, vector<8x32xf32> -> vector<8x32xf32>
    %c0_60 = arith.constant 0 : index
    %c0_61 = arith.constant 0 : index
    %109 = vector.load %arg9[%c0_60, %c0_61] : memref<1x32xf32, #tpu.memory_space<vmem>>, vector<1x32xf32>
    %110 = vector.broadcast %109 : vector<1x32xf32> to vector<8x32xf32>
    %111 = arith.addf %108, %110 : vector<8x32xf32>
    %112 = arith.addf %5, %111 : vector<8x32xf32>
    %cst_62 = arith.constant dense<0.000000e+00> : vector<8xf32>
    %113 = vector.multi_reduction <add>, %112, %cst_62 [1] : vector<8x32xf32> to vector<8xf32>
    %114 = vector.shape_cast %113 : vector<8xf32> to vector<8x1xf32>
    %cst_63 = arith.constant 3.200000e+01 : f32
    %115 = vector.broadcast %cst_63 : f32 to vector<8x1xf32>
    %116 = arith.divf %114, %115 : vector<8x1xf32>
    %117 = vector.broadcast %116 : vector<8x1xf32> to vector<8x32xf32>
    %118 = arith.subf %112, %117 : vector<8x32xf32>
    %119 = arith.mulf %118, %118 : vector<8x32xf32>
    %cst_64 = arith.constant dense<0.000000e+00> : vector<8xf32>
    %120 = vector.multi_reduction <add>, %119, %cst_64 [1] : vector<8x32xf32> to vector<8xf32>
    %121 = vector.shape_cast %120 : vector<8xf32> to vector<8x1xf32>
    %cst_65 = arith.constant 3.200000e+01 : f32
    %122 = vector.broadcast %cst_65 : f32 to vector<8x1xf32>
    %123 = arith.divf %121, %122 : vector<8x1xf32>
    %124 = vector.broadcast %116 : vector<8x1xf32> to vector<8x32xf32>
    %125 = arith.subf %112, %124 : vector<8x32xf32>
    %cst_66 = arith.constant 9.99999974E-6 : f32
    %126 = vector.broadcast %cst_66 : f32 to vector<8x1xf32>
    %127 = arith.addf %123, %126 : vector<8x1xf32>
    %128 = math.rsqrt %127 : vector<8x1xf32>
    %129 = vector.broadcast %128 : vector<8x1xf32> to vector<8x32xf32>
    %130 = arith.mulf %125, %129 : vector<8x32xf32>
    %c0_67 = arith.constant 0 : index
    %c0_68 = arith.constant 0 : index
    %131 = vector.load %arg10[%c0_67, %c0_68] : memref<1x32xf32, #tpu.memory_space<vmem>>, vector<1x32xf32>
    %132 = vector.broadcast %131 : vector<1x32xf32> to vector<8x32xf32>
    %133 = arith.mulf %130, %132 : vector<8x32xf32>
    %c0_69 = arith.constant 0 : index
    %c0_70 = arith.constant 0 : index
    %134 = vector.load %arg11[%c0_69, %c0_70] : memref<1x32xf32, #tpu.memory_space<vmem>>, vector<1x32xf32>
    %135 = vector.broadcast %134 : vector<1x32xf32> to vector<8x32xf32>
    %136 = arith.addf %133, %135 : vector<8x32xf32>
    %137 = arith.truncf %136 : vector<8x32xf32> to vector<8x32xbf16>
    %c0_71 = arith.constant 0 : index
    %c0_72 = arith.constant 0 : index
    %c0_73 = arith.constant 0 : index
    %138 = vector.load %arg13[%c0_71, %c0_72, %c0_73] : memref<1x8x32xbf16, #tpu.memory_space<vmem>>, vector<1x8x32xbf16>
    %139 = vector.shape_cast %138 : vector<1x8x32xbf16> to vector<8x32xbf16>
    %140 = vector.shape_cast %137 : vector<8x32xbf16> to vector<1x8x32xbf16>
    tpu.vector_store %arg13[%c0_71, %c0_72, %c0_73], %140 {strides = array<i32>} : memref<1x8x32xbf16, #tpu.memory_space<vmem>>, vector<1x8x32xbf16>,
    return
  }
  func.func @transform_0(%arg0: i32, %arg1: i32) -> (i32, i32, i32) {
    %c0_i32 = arith.constant 0 : i32
    %c0_i32_0 = arith.constant 0 : i32
    return %arg0, %arg1, %c0_i32 : i32, i32, i32
  }
  func.func @transform_1(%arg0: i32, %arg1: i32) -> (i32, i32, i32) {
    %c0_i32 = arith.constant 0 : i32
    %c0_i32_0 = arith.constant 0 : i32
    %c0_i32_1 = arith.constant 0 : i32
    return %arg0, %c0_i32, %c0_i32_0 : i32, i32, i32
  }
  func.func @transform_2(%arg0: i32, %arg1: i32) -> (i32, i32) {
    %c0_i32 = arith.constant 0 : i32
    %c0_i32_0 = arith.constant 0 : i32
    %c0_i32_1 = arith.constant 0 : i32
    return %c0_i32, %c0_i32_0 : i32, i32
  }
  func.func @transform_3(%arg0: i32, %arg1: i32) -> (i32, i32) {
    %c0_i32 = arith.constant 0 : i32
    %c0_i32_0 = arith.constant 0 : i32
    %c0_i32_1 = arith.constant 0 : i32
    return %c0_i32, %c0_i32_0 : i32, i32
  }
  func.func @transform_4(%arg0: i32, %arg1: i32) -> (i32, i32) {
    %c0_i32 = arith.constant 0 : i32
    %c0_i32_0 = arith.constant 0 : i32
    %c0_i32_1 = arith.constant 0 : i32
    return %c0_i32, %c0_i32_0 : i32, i32
  }
  func.func @transform_5(%arg0: i32, %arg1: i32) -> (i32, i32) {
    %c0_i32 = arith.constant 0 : i32
    %c0_i32_0 = arith.constant 0 : i32
    %c0_i32_1 = arith.constant 0 : i32
    return %c0_i32, %c0_i32_0 : i32, i32
  }
  func.func @transform_6(%arg0: i32, %arg1: i32) -> (i32, i32) {
    %c0_i32 = arith.constant 0 : i32
    %c0_i32_0 = arith.constant 0 : i32
    %c0_i32_1 = arith.constant 0 : i32
    return %c0_i32, %c0_i32_0 : i32, i32
  }
  func.func @transform_7(%arg0: i32, %arg1: i32) -> (i32, i32) {
    %c0_i32 = arith.constant 0 : i32
    %c0_i32_0 = arith.constant 0 : i32
    %c0_i32_1 = arith.constant 0 : i32
    return %c0_i32, %c0_i32_0 : i32, i32
  }
  func.func @transform_8(%arg0: i32, %arg1: i32) -> (i32, i32) {
    %c0_i32 = arith.constant 0 : i32
    %c0_i32_0 = arith.constant 0 : i32
    %c0_i32_1 = arith.constant 0 : i32
    return %c0_i32, %c0_i32_0 : i32, i32
  }
  func.func @transform_9(%arg0: i32, %arg1: i32) -> (i32, i32) {
    %c0_i32 = arith.constant 0 : i32
    %c0_i32_0 = arith.constant 0 : i32
    %c0_i32_1 = arith.constant 0 : i32
    return %c0_i32, %c0_i32_0 : i32, i32
  }
  func.func @transform_10(%arg0: i32, %arg1: i32) -> (i32, i32) {
    %c0_i32 = arith.constant 0 : i32
    %c0_i32_0 = arith.constant 0 : i32
    return %arg1, %c0_i32 : i32, i32
  }
  func.func @transform_11(%arg0: i32, %arg1: i32) -> (i32, i32, i32) {
    %c0_i32 = arith.constant 0 : i32
    %c0_i32_0 = arith.constant 0 : i32
    return %arg0, %arg1, %c0_i32 : i32, i32, i32
  }
}

module attributes {stable_mosaic.version = 11 : i64} {
  func.func @_attn_block_kernel(%arg0: i32, %arg1: i32, %arg2: memref<1x8x32xbf16, #tpu.memory_space<vmem>>, %arg3: memref<1x8x32xbf16, #tpu.memory_space<vmem>>, %arg4: memref<8x32xf32, #tpu.memory_space<vmem>>, %arg5: memref<8x32xf32, #tpu.memory_space<vmem>>, %arg6: memref<32x32xbf16, #tpu.memory_space<vmem>>, %arg7: memref<1x32xf32, #tpu.memory_space<vmem>>, %arg8: memref<32x64xbf16, #tpu.memory_space<vmem>>, %arg9: memref<1x64xf32, #tpu.memory_space<vmem>>, %arg10: memref<32x32xbf16, #tpu.memory_space<vmem>>, %arg11: memref<1x32xf32, #tpu.memory_space<vmem>>, %arg12: memref<1x32xf32, #tpu.memory_space<vmem>>, %arg13: memref<1x32xf32, #tpu.memory_space<vmem>>, %arg14: memref<8x8xf32, #tpu.memory_space<vmem>>, %arg15: memref<1x8x32xbf16, #tpu.memory_space<vmem>>, %arg16: memref<4x8x8xbf16, #tpu.memory_space<vmem>>, %arg17: memref<4x8x8xbf16, #tpu.memory_space<vmem>>, %arg18: memref<8x32xf32, #tpu.memory_space<vmem>>) attributes {dimension_semantics = [#tpu.dimension_semantics<parallel>, #tpu.dimension_semantics<arbitrary>], iteration_bounds = array<i64: 2, 1>, scalar_prefetch = 0 : i64, scratch_operands = 3 : i64, tpu.core_type = #tpu.core_type<tc>, window_params = [{transform_indices = @transform_0, window_bounds = array<i64: 1, 8, 32>}, {transform_indices = @transform_1, window_bounds = array<i64: 1, 8, 32>}, {transform_indices = @transform_2, window_bounds = array<i64: 8, 32>}, {pipeline_mode = #tpu.pipeline_mode<synchronous>, transform_indices = @transform_3, window_bounds = array<i64: 8, 32>}, {pipeline_mode = #tpu.pipeline_mode<synchronous>, transform_indices = @transform_4, window_bounds = array<i64: 32, 32>}, {pipeline_mode = #tpu.pipeline_mode<synchronous>, transform_indices = @transform_5, window_bounds = array<i64: 1, 32>}, {pipeline_mode = #tpu.pipeline_mode<synchronous>, transform_indices = @transform_6, window_bounds = array<i64: 32, 64>}, {pipeline_mode = #tpu.pipeline_mode<synchronous>, transform_indices = @transform_7, window_bounds = array<i64: 1, 64>}, {pipeline_mode = #tpu.pipeline_mode<synchronous>, transform_indices = @transform_8, window_bounds = array<i64: 32, 32>}, {pipeline_mode = #tpu.pipeline_mode<synchronous>, transform_indices = @transform_9, window_bounds = array<i64: 1, 32>}, {pipeline_mode = #tpu.pipeline_mode<synchronous>, transform_indices = @transform_10, window_bounds = array<i64: 1, 32>}, {pipeline_mode = #tpu.pipeline_mode<synchronous>, transform_indices = @transform_11, window_bounds = array<i64: 1, 32>}, {transform_indices = @transform_12, window_bounds = array<i64: 8, 8>}, {transform_indices = @transform_13, window_bounds = array<i64: 1, 8, 32>}]} {
    %c0_i32 = arith.constant 0 : i32
    %0 = arith.cmpi eq, %arg1, %c0_i32 : i32
    %1 = arith.extui %0 : i1 to i32
    %c0_i32_0 = arith.constant 0 : i32
    %2 = arith.cmpi ne, %1, %c0_i32_0 : i32
    scf.if %2 {
      %c0_77 = arith.constant 0 : index
      %c0_78 = arith.constant 0 : index
      %c0_79 = arith.constant 0 : index
      %145 = vector.load %arg3[%c0_77, %c0_78, %c0_79] : memref<1x8x32xbf16, #tpu.memory_space<vmem>>, vector<1x8x32xbf16>
      %146 = vector.shape_cast %145 : vector<1x8x32xbf16> to vector<8x32xbf16>
      %147 = arith.extf %146 : vector<8x32xbf16> to vector<8x32xf32>
      %cst_80 = arith.constant 5.65685415 : f32
      %148 = vector.broadcast %cst_80 : f32 to vector<8x32xf32>
      %149 = arith.mulf %147, %148 : vector<8x32xf32>
      %c0_81 = arith.constant 0 : index
      %c0_82 = arith.constant 0 : index
      %150 = vector.load %arg5[%c0_81, %c0_82] : memref<8x32xf32, #tpu.memory_space<vmem>>, vector<8x32xf32>
      %151 = arith.addf %149, %150 : vector<8x32xf32>
      %152 = arith.truncf %151 : vector<8x32xf32> to vector<8x32xbf16>
      %c0_83 = arith.constant 0 : index
      %c0_84 = arith.constant 0 : index
      %153 = vector.load %arg8[%c0_83, %c0_84] : memref<32x64xbf16, #tpu.memory_space<vmem>>, vector<32x64xbf16>
      %cst_85 = arith.constant dense<0.000000e+00> : vector<8x64xf32>
      %154 = tpu.matmul %152, %153, %cst_85 {dimension_numbers = #tpu.dot_dimension_numbers<[1], [0], [0], [1], [0, 0, 1, 1], [], []>} : vector<8x32xbf16>, vector<32x64xbf16>, vector<8x64xf32> -> vector<8x64xf32>
      %c0_86 = arith.constant 0 : index
      %c0_87 = arith.constant 0 : index
      %155 = vector.load %arg9[%c0_86, %c0_87] : memref<1x64xf32, #tpu.memory_space<vmem>>, vector<1x64xf32>
      %156 = vector.broadcast %155 : vector<1x64xf32> to vector<8x64xf32>
      %157 = arith.addf %154, %156 : vector<8x64xf32>
      %158 = vector.extract_strided_slice %157 {offsets = [0, 0], sizes = [8, 8], strides = [1, 1]} : vector<8x64xf32> to vector<8x8xf32>
      %159 = arith.truncf %158 : vector<8x8xf32> to vector<8x8xbf16>
      %c0_88 = arith.constant 0 : index
      %c0_89 = arith.constant 0 : index
      %c0_90 = arith.constant 0 : index
      %160 = vector.load %arg16[%c0_88, %c0_89, %c0_90] : memref<4x8x8xbf16, #tpu.memory_space<vmem>>, vector<1x8x8xbf16>
      %161 = vector.shape_cast %160 : vector<1x8x8xbf16> to vector<8x8xbf16>
      %162 = vector.shape_cast %159 : vector<8x8xbf16> to vector<1x8x8xbf16>
      tpu.vector_store %arg16[%c0_88, %c0_89, %c0_90], %162 {strides = array<i32>} : memref<4x8x8xbf16, #tpu.memory_space<vmem>>, vector<1x8x8xbf16>,
      %163 = vector.extract_strided_slice %157 {offsets = [0, 32], sizes = [8, 8], strides = [1, 1]} : vector<8x64xf32> to vector<8x8xf32>
      %164 = arith.truncf %163 : vector<8x8xf32> to vector<8x8xbf16>
      %c0_91 = arith.constant 0 : index
      %c0_92 = arith.constant 0 : index
      %c0_93 = arith.constant 0 : index
      %165 = vector.load %arg17[%c0_91, %c0_92, %c0_93] : memref<4x8x8xbf16, #tpu.memory_space<vmem>>, vector<1x8x8xbf16>
      %166 = vector.shape_cast %165 : vector<1x8x8xbf16> to vector<8x8xbf16>
      %167 = vector.shape_cast %164 : vector<8x8xbf16> to vector<1x8x8xbf16>
      tpu.vector_store %arg17[%c0_91, %c0_92, %c0_93], %167 {strides = array<i32>} : memref<4x8x8xbf16, #tpu.memory_space<vmem>>, vector<1x8x8xbf16>,
      %168 = vector.extract_strided_slice %157 {offsets = [0, 8], sizes = [8, 8], strides = [1, 1]} : vector<8x64xf32> to vector<8x8xf32>
      %169 = arith.truncf %168 : vector<8x8xf32> to vector<8x8xbf16>
      %c1_94 = arith.constant 1 : index
      %c0_95 = arith.constant 0 : index
      %c0_96 = arith.constant 0 : index
      %170 = vector.load %arg16[%c1_94, %c0_95, %c0_96] : memref<4x8x8xbf16, #tpu.memory_space<vmem>>, vector<1x8x8xbf16>
      %171 = vector.shape_cast %170 : vector<1x8x8xbf16> to vector<8x8xbf16>
      %172 = vector.shape_cast %169 : vector<8x8xbf16> to vector<1x8x8xbf16>
      tpu.vector_store %arg16[%c1_94, %c0_95, %c0_96], %172 {strides = array<i32>} : memref<4x8x8xbf16, #tpu.memory_space<vmem>>, vector<1x8x8xbf16>,
      %173 = vector.extract_strided_slice %157 {offsets = [0, 40], sizes = [8, 8], strides = [1, 1]} : vector<8x64xf32> to vector<8x8xf32>
      %174 = arith.truncf %173 : vector<8x8xf32> to vector<8x8xbf16>
      %c1_97 = arith.constant 1 : index
      %c0_98 = arith.constant 0 : index
      %c0_99 = arith.constant 0 : index
      %175 = vector.load %arg17[%c1_97, %c0_98, %c0_99] : memref<4x8x8xbf16, #tpu.memory_space<vmem>>, vector<1x8x8xbf16>
      %176 = vector.shape_cast %175 : vector<1x8x8xbf16> to vector<8x8xbf16>
      %177 = vector.shape_cast %174 : vector<8x8xbf16> to vector<1x8x8xbf16>
      tpu.vector_store %arg17[%c1_97, %c0_98, %c0_99], %177 {strides = array<i32>} : memref<4x8x8xbf16, #tpu.memory_space<vmem>>, vector<1x8x8xbf16>,
      %178 = vector.extract_strided_slice %157 {offsets = [0, 16], sizes = [8, 8], strides = [1, 1]} : vector<8x64xf32> to vector<8x8xf32>
      %179 = arith.truncf %178 : vector<8x8xf32> to vector<8x8xbf16>
      %c2_100 = arith.constant 2 : index
      %c0_101 = arith.constant 0 : index
      %c0_102 = arith.constant 0 : index
      %180 = vector.load %arg16[%c2_100, %c0_101, %c0_102] : memref<4x8x8xbf16, #tpu.memory_space<vmem>>, vector<1x8x8xbf16>
      %181 = vector.shape_cast %180 : vector<1x8x8xbf16> to vector<8x8xbf16>
      %182 = vector.shape_cast %179 : vector<8x8xbf16> to vector<1x8x8xbf16>
      tpu.vector_store %arg16[%c2_100, %c0_101, %c0_102], %182 {strides = array<i32>} : memref<4x8x8xbf16, #tpu.memory_space<vmem>>, vector<1x8x8xbf16>,
      %183 = vector.extract_strided_slice %157 {offsets = [0, 48], sizes = [8, 8], strides = [1, 1]} : vector<8x64xf32> to vector<8x8xf32>
      %184 = arith.truncf %183 : vector<8x8xf32> to vector<8x8xbf16>
      %c2_103 = arith.constant 2 : index
      %c0_104 = arith.constant 0 : index
      %c0_105 = arith.constant 0 : index
      %185 = vector.load %arg17[%c2_103, %c0_104, %c0_105] : memref<4x8x8xbf16, #tpu.memory_space<vmem>>, vector<1x8x8xbf16>
      %186 = vector.shape_cast %185 : vector<1x8x8xbf16> to vector<8x8xbf16>
      %187 = vector.shape_cast %184 : vector<8x8xbf16> to vector<1x8x8xbf16>
      tpu.vector_store %arg17[%c2_103, %c0_104, %c0_105], %187 {strides = array<i32>} : memref<4x8x8xbf16, #tpu.memory_space<vmem>>, vector<1x8x8xbf16>,
      %188 = vector.extract_strided_slice %157 {offsets = [0, 24], sizes = [8, 8], strides = [1, 1]} : vector<8x64xf32> to vector<8x8xf32>
      %189 = arith.truncf %188 : vector<8x8xf32> to vector<8x8xbf16>
      %c3_106 = arith.constant 3 : index
      %c0_107 = arith.constant 0 : index
      %c0_108 = arith.constant 0 : index
      %190 = vector.load %arg16[%c3_106, %c0_107, %c0_108] : memref<4x8x8xbf16, #tpu.memory_space<vmem>>, vector<1x8x8xbf16>
      %191 = vector.shape_cast %190 : vector<1x8x8xbf16> to vector<8x8xbf16>
      %192 = vector.shape_cast %189 : vector<8x8xbf16> to vector<1x8x8xbf16>
      tpu.vector_store %arg16[%c3_106, %c0_107, %c0_108], %192 {strides = array<i32>} : memref<4x8x8xbf16, #tpu.memory_space<vmem>>, vector<1x8x8xbf16>,
      %193 = vector.extract_strided_slice %157 {offsets = [0, 56], sizes = [8, 8], strides = [1, 1]} : vector<8x64xf32> to vector<8x8xf32>
      %194 = arith.truncf %193 : vector<8x8xf32> to vector<8x8xbf16>
      %c3_109 = arith.constant 3 : index
      %c0_110 = arith.constant 0 : index
      %c0_111 = arith.constant 0 : index
      %195 = vector.load %arg17[%c3_109, %c0_110, %c0_111] : memref<4x8x8xbf16, #tpu.memory_space<vmem>>, vector<1x8x8xbf16>
      %196 = vector.shape_cast %195 : vector<1x8x8xbf16> to vector<8x8xbf16>
      %197 = vector.shape_cast %194 : vector<8x8xbf16> to vector<1x8x8xbf16>
      tpu.vector_store %arg17[%c3_109, %c0_110, %c0_111], %197 {strides = array<i32>} : memref<4x8x8xbf16, #tpu.memory_space<vmem>>, vector<1x8x8xbf16>,
    } else {
    }
    %c0 = arith.constant 0 : index
    %c0_1 = arith.constant 0 : index
    %c0_2 = arith.constant 0 : index
    %3 = vector.load %arg2[%c0, %c0_1, %c0_2] : memref<1x8x32xbf16, #tpu.memory_space<vmem>>, vector<1x8x32xbf16>
    %4 = vector.shape_cast %3 : vector<1x8x32xbf16> to vector<8x32xbf16>
    %5 = arith.extf %4 : vector<8x32xbf16> to vector<8x32xf32>
    %cst = arith.constant 5.65685415 : f32
    %6 = vector.broadcast %cst : f32 to vector<8x32xf32>
    %7 = arith.mulf %5, %6 : vector<8x32xf32>
    %c0_3 = arith.constant 0 : index
    %c0_4 = arith.constant 0 : index
    %8 = vector.load %arg4[%c0_3, %c0_4] : memref<8x32xf32, #tpu.memory_space<vmem>>, vector<8x32xf32>
    %9 = arith.addf %7, %8 : vector<8x32xf32>
    %10 = arith.truncf %9 : vector<8x32xf32> to vector<8x32xbf16>
    %c0_5 = arith.constant 0 : index
    %c0_6 = arith.constant 0 : index
    %11 = vector.load %arg6[%c0_5, %c0_6] : memref<32x32xbf16, #tpu.memory_space<vmem>>, vector<32x32xbf16>
    %cst_7 = arith.constant dense<0.000000e+00> : vector<8x32xf32>
    %12 = tpu.matmul %10, %11, %cst_7 {dimension_numbers = #tpu.dot_dimension_numbers<[1], [0], [0], [1], [0, 0, 1, 1], [], []>} : vector<8x32xbf16>, vector<32x32xbf16>, vector<8x32xf32> -> vector<8x32xf32>
    %c0_8 = arith.constant 0 : index
    %c0_9 = arith.constant 0 : index
    %13 = vector.load %arg7[%c0_8, %c0_9] : memref<1x32xf32, #tpu.memory_space<vmem>>, vector<1x32xf32>
    %14 = vector.broadcast %13 : vector<1x32xf32> to vector<8x32xf32>
    %15 = arith.addf %12, %14 : vector<8x32xf32>
    %c0_10 = arith.constant 0 : index
    %c0_11 = arith.constant 0 : index
    %16 = vector.load %arg14[%c0_10, %c0_11] : memref<8x8xf32, #tpu.memory_space<vmem>>, vector<8x8xf32>
    %17 = vector.extract_strided_slice %15 {offsets = [0, 0], sizes = [8, 8], strides = [1, 1]} : vector<8x32xf32> to vector<8x8xf32>
    %18 = arith.truncf %17 : vector<8x8xf32> to vector<8x8xbf16>
    %c0_12 = arith.constant 0 : index
    %c0_13 = arith.constant 0 : index
    %c0_14 = arith.constant 0 : index
    %19 = vector.load %arg16[%c0_12, %c0_13, %c0_14] : memref<4x8x8xbf16, #tpu.memory_space<vmem>>, vector<1x8x8xbf16>
    %20 = vector.shape_cast %19 : vector<1x8x8xbf16> to vector<8x8xbf16>
    %cst_15 = arith.constant dense<0.000000e+00> : vector<8x8xf32>
    %21 = tpu.matmul %18, %20, %cst_15 {dimension_numbers = #tpu.dot_dimension_numbers<[1], [1], [0], [0], [0, 0, 1, 0], [], []>} : vector<8x8xbf16>, vector<8x8xbf16>, vector<8x8xf32> -> vector<8x8xf32>
    %cst_16 = arith.constant 0.353553385 : f32
    %22 = vector.broadcast %cst_16 : f32 to vector<8x8xf32>
    %23 = arith.mulf %21, %22 : vector<8x8xf32>
    %24 = arith.addf %23, %16 : vector<8x8xf32>
    %cst_17 = arith.constant dense<0xFF800000> : vector<8xf32>
    %25 = vector.multi_reduction <maximumf>, %24, %cst_17 [1] : vector<8x8xf32> to vector<8xf32>
    %26 = vector.shape_cast %25 : vector<8xf32> to vector<8x1xf32>
    %27 = vector.broadcast %26 : vector<8x1xf32> to vector<8x8xf32>
    %28 = arith.subf %24, %27 : vector<8x8xf32>
    %29 = math.exp %28 : vector<8x8xf32>
    %cst_18 = arith.constant dense<0.000000e+00> : vector<8xf32>
    %30 = vector.multi_reduction <add>, %29, %cst_18 [1] : vector<8x8xf32> to vector<8xf32>
    %31 = vector.shape_cast %30 : vector<8xf32> to vector<8x1xf32>
    %32 = tpu.reciprocal %31 : vector<8x1xf32> -> vector<8x1xf32>
    %33 = vector.broadcast %32 : vector<8x1xf32> to vector<8x8xf32>
    %34 = arith.mulf %29, %33 : vector<8x8xf32>
    %35 = arith.truncf %34 : vector<8x8xf32> to vector<8x8xbf16>
    %c0_19 = arith.constant 0 : index
    %c0_20 = arith.constant 0 : index
    %c0_21 = arith.constant 0 : index
    %36 = vector.load %arg17[%c0_19, %c0_20, %c0_21] : memref<4x8x8xbf16, #tpu.memory_space<vmem>>, vector<1x8x8xbf16>
    %37 = vector.shape_cast %36 : vector<1x8x8xbf16> to vector<8x8xbf16>
    %cst_22 = arith.constant dense<0.000000e+00> : vector<8x8xf32>
    %38 = tpu.matmul %35, %37, %cst_22 {dimension_numbers = #tpu.dot_dimension_numbers<[1], [0], [0], [1], [0, 0, 1, 1], [], []>} : vector<8x8xbf16>, vector<8x8xbf16>, vector<8x8xf32> -> vector<8x8xf32>
    %c0_23 = arith.constant 0 : index
    %c0_24 = arith.constant 0 : index
    %39 = vector.load %arg18[%c0_23, %c0_24] : memref<8x32xf32, #tpu.memory_space<vmem>>, vector<8x8xf32>
    tpu.vector_store %arg18[%c0_23, %c0_24], %38 {strides = array<i32>} : memref<8x32xf32, #tpu.memory_space<vmem>>, vector<8x8xf32>,
    %40 = vector.extract_strided_slice %15 {offsets = [0, 8], sizes = [8, 8], strides = [1, 1]} : vector<8x32xf32> to vector<8x8xf32>
    %41 = arith.truncf %40 : vector<8x8xf32> to vector<8x8xbf16>
    %c1 = arith.constant 1 : index
    %c0_25 = arith.constant 0 : index
    %c0_26 = arith.constant 0 : index
    %42 = vector.load %arg16[%c1, %c0_25, %c0_26] : memref<4x8x8xbf16, #tpu.memory_space<vmem>>, vector<1x8x8xbf16>
    %43 = vector.shape_cast %42 : vector<1x8x8xbf16> to vector<8x8xbf16>
    %cst_27 = arith.constant dense<0.000000e+00> : vector<8x8xf32>
    %44 = tpu.matmul %41, %43, %cst_27 {dimension_numbers = #tpu.dot_dimension_numbers<[1], [1], [0], [0], [0, 0, 1, 0], [], []>} : vector<8x8xbf16>, vector<8x8xbf16>, vector<8x8xf32> -> vector<8x8xf32>
    %cst_28 = arith.constant 0.353553385 : f32
    %45 = vector.broadcast %cst_28 : f32 to vector<8x8xf32>
    %46 = arith.mulf %44, %45 : vector<8x8xf32>
    %47 = arith.addf %46, %16 : vector<8x8xf32>
    %cst_29 = arith.constant dense<0xFF800000> : vector<8xf32>
    %48 = vector.multi_reduction <maximumf>, %47, %cst_29 [1] : vector<8x8xf32> to vector<8xf32>
    %49 = vector.shape_cast %48 : vector<8xf32> to vector<8x1xf32>
    %50 = vector.broadcast %49 : vector<8x1xf32> to vector<8x8xf32>
    %51 = arith.subf %47, %50 : vector<8x8xf32>
    %52 = math.exp %51 : vector<8x8xf32>
    %cst_30 = arith.constant dense<0.000000e+00> : vector<8xf32>
    %53 = vector.multi_reduction <add>, %52, %cst_30 [1] : vector<8x8xf32> to vector<8xf32>
    %54 = vector.shape_cast %53 : vector<8xf32> to vector<8x1xf32>
    %55 = tpu.reciprocal %54 : vector<8x1xf32> -> vector<8x1xf32>
    %56 = vector.broadcast %55 : vector<8x1xf32> to vector<8x8xf32>
    %57 = arith.mulf %52, %56 : vector<8x8xf32>
    %58 = arith.truncf %57 : vector<8x8xf32> to vector<8x8xbf16>
    %c1_31 = arith.constant 1 : index
    %c0_32 = arith.constant 0 : index
    %c0_33 = arith.constant 0 : index
    %59 = vector.load %arg17[%c1_31, %c0_32, %c0_33] : memref<4x8x8xbf16, #tpu.memory_space<vmem>>, vector<1x8x8xbf16>
    %60 = vector.shape_cast %59 : vector<1x8x8xbf16> to vector<8x8xbf16>
    %cst_34 = arith.constant dense<0.000000e+00> : vector<8x8xf32>
    %61 = tpu.matmul %58, %60, %cst_34 {dimension_numbers = #tpu.dot_dimension_numbers<[1], [0], [0], [1], [0, 0, 1, 1], [], []>} : vector<8x8xbf16>, vector<8x8xbf16>, vector<8x8xf32> -> vector<8x8xf32>
    %c0_35 = arith.constant 0 : index
    %c8 = arith.constant 8 : index
    %62 = vector.load %arg18[%c0_35, %c8] : memref<8x32xf32, #tpu.memory_space<vmem>>, vector<8x8xf32>
    tpu.vector_store %arg18[%c0_35, %c8], %61 {strides = array<i32>} : memref<8x32xf32, #tpu.memory_space<vmem>>, vector<8x8xf32>,
    %63 = vector.extract_strided_slice %15 {offsets = [0, 16], sizes = [8, 8], strides = [1, 1]} : vector<8x32xf32> to vector<8x8xf32>
    %64 = arith.truncf %63 : vector<8x8xf32> to vector<8x8xbf16>
    %c2 = arith.constant 2 : index
    %c0_36 = arith.constant 0 : index
    %c0_37 = arith.constant 0 : index
    %65 = vector.load %arg16[%c2, %c0_36, %c0_37] : memref<4x8x8xbf16, #tpu.memory_space<vmem>>, vector<1x8x8xbf16>
    %66 = vector.shape_cast %65 : vector<1x8x8xbf16> to vector<8x8xbf16>
    %cst_38 = arith.constant dense<0.000000e+00> : vector<8x8xf32>
    %67 = tpu.matmul %64, %66, %cst_38 {dimension_numbers = #tpu.dot_dimension_numbers<[1], [1], [0], [0], [0, 0, 1, 0], [], []>} : vector<8x8xbf16>, vector<8x8xbf16>, vector<8x8xf32> -> vector<8x8xf32>
    %cst_39 = arith.constant 0.353553385 : f32
    %68 = vector.broadcast %cst_39 : f32 to vector<8x8xf32>
    %69 = arith.mulf %67, %68 : vector<8x8xf32>
    %70 = arith.addf %69, %16 : vector<8x8xf32>
    %cst_40 = arith.constant dense<0xFF800000> : vector<8xf32>
    %71 = vector.multi_reduction <maximumf>, %70, %cst_40 [1] : vector<8x8xf32> to vector<8xf32>
    %72 = vector.shape_cast %71 : vector<8xf32> to vector<8x1xf32>
    %73 = vector.broadcast %72 : vector<8x1xf32> to vector<8x8xf32>
    %74 = arith.subf %70, %73 : vector<8x8xf32>
    %75 = math.exp %74 : vector<8x8xf32>
    %cst_41 = arith.constant dense<0.000000e+00> : vector<8xf32>
    %76 = vector.multi_reduction <add>, %75, %cst_41 [1] : vector<8x8xf32> to vector<8xf32>
    %77 = vector.shape_cast %76 : vector<8xf32> to vector<8x1xf32>
    %78 = tpu.reciprocal %77 : vector<8x1xf32> -> vector<8x1xf32>
    %79 = vector.broadcast %78 : vector<8x1xf32> to vector<8x8xf32>
    %80 = arith.mulf %75, %79 : vector<8x8xf32>
    %81 = arith.truncf %80 : vector<8x8xf32> to vector<8x8xbf16>
    %c2_42 = arith.constant 2 : index
    %c0_43 = arith.constant 0 : index
    %c0_44 = arith.constant 0 : index
    %82 = vector.load %arg17[%c2_42, %c0_43, %c0_44] : memref<4x8x8xbf16, #tpu.memory_space<vmem>>, vector<1x8x8xbf16>
    %83 = vector.shape_cast %82 : vector<1x8x8xbf16> to vector<8x8xbf16>
    %cst_45 = arith.constant dense<0.000000e+00> : vector<8x8xf32>
    %84 = tpu.matmul %81, %83, %cst_45 {dimension_numbers = #tpu.dot_dimension_numbers<[1], [0], [0], [1], [0, 0, 1, 1], [], []>} : vector<8x8xbf16>, vector<8x8xbf16>, vector<8x8xf32> -> vector<8x8xf32>
    %c0_46 = arith.constant 0 : index
    %c16 = arith.constant 16 : index
    %85 = vector.load %arg18[%c0_46, %c16] : memref<8x32xf32, #tpu.memory_space<vmem>>, vector<8x8xf32>
    tpu.vector_store %arg18[%c0_46, %c16], %84 {strides = array<i32>} : memref<8x32xf32, #tpu.memory_space<vmem>>, vector<8x8xf32>,
    %86 = vector.extract_strided_slice %15 {offsets = [0, 24], sizes = [8, 8], strides = [1, 1]} : vector<8x32xf32> to vector<8x8xf32>
    %87 = arith.truncf %86 : vector<8x8xf32> to vector<8x8xbf16>
    %c3 = arith.constant 3 : index
    %c0_47 = arith.constant 0 : index
    %c0_48 = arith.constant 0 : index
    %88 = vector.load %arg16[%c3, %c0_47, %c0_48] : memref<4x8x8xbf16, #tpu.memory_space<vmem>>, vector<1x8x8xbf16>
    %89 = vector.shape_cast %88 : vector<1x8x8xbf16> to vector<8x8xbf16>
    %cst_49 = arith.constant dense<0.000000e+00> : vector<8x8xf32>
    %90 = tpu.matmul %87, %89, %cst_49 {dimension_numbers = #tpu.dot_dimension_numbers<[1], [1], [0], [0], [0, 0, 1, 0], [], []>} : vector<8x8xbf16>, vector<8x8xbf16>, vector<8x8xf32> -> vector<8x8xf32>
    %cst_50 = arith.constant 0.353553385 : f32
    %91 = vector.broadcast %cst_50 : f32 to vector<8x8xf32>
    %92 = arith.mulf %90, %91 : vector<8x8xf32>
    %93 = arith.addf %92, %16 : vector<8x8xf32>
    %cst_51 = arith.constant dense<0xFF800000> : vector<8xf32>
    %94 = vector.multi_reduction <maximumf>, %93, %cst_51 [1] : vector<8x8xf32> to vector<8xf32>
    %95 = vector.shape_cast %94 : vector<8xf32> to vector<8x1xf32>
    %96 = vector.broadcast %95 : vector<8x1xf32> to vector<8x8xf32>
    %97 = arith.subf %93, %96 : vector<8x8xf32>
    %98 = math.exp %97 : vector<8x8xf32>
    %cst_52 = arith.constant dense<0.000000e+00> : vector<8xf32>
    %99 = vector.multi_reduction <add>, %98, %cst_52 [1] : vector<8x8xf32> to vector<8xf32>
    %100 = vector.shape_cast %99 : vector<8xf32> to vector<8x1xf32>
    %101 = tpu.reciprocal %100 : vector<8x1xf32> -> vector<8x1xf32>
    %102 = vector.broadcast %101 : vector<8x1xf32> to vector<8x8xf32>
    %103 = arith.mulf %98, %102 : vector<8x8xf32>
    %104 = arith.truncf %103 : vector<8x8xf32> to vector<8x8xbf16>
    %c3_53 = arith.constant 3 : index
    %c0_54 = arith.constant 0 : index
    %c0_55 = arith.constant 0 : index
    %105 = vector.load %arg17[%c3_53, %c0_54, %c0_55] : memref<4x8x8xbf16, #tpu.memory_space<vmem>>, vector<1x8x8xbf16>
    %106 = vector.shape_cast %105 : vector<1x8x8xbf16> to vector<8x8xbf16>
    %cst_56 = arith.constant dense<0.000000e+00> : vector<8x8xf32>
    %107 = tpu.matmul %104, %106, %cst_56 {dimension_numbers = #tpu.dot_dimension_numbers<[1], [0], [0], [1], [0, 0, 1, 1], [], []>} : vector<8x8xbf16>, vector<8x8xbf16>, vector<8x8xf32> -> vector<8x8xf32>
    %c0_57 = arith.constant 0 : index
    %c24 = arith.constant 24 : index
    %108 = vector.load %arg18[%c0_57, %c24] : memref<8x32xf32, #tpu.memory_space<vmem>>, vector<8x8xf32>
    tpu.vector_store %arg18[%c0_57, %c24], %107 {strides = array<i32>} : memref<8x32xf32, #tpu.memory_space<vmem>>, vector<8x8xf32>,
    %c0_58 = arith.constant 0 : index
    %c0_59 = arith.constant 0 : index
    %109 = vector.load %arg18[%c0_58, %c0_59] : memref<8x32xf32, #tpu.memory_space<vmem>>, vector<8x32xf32>
    %110 = arith.truncf %109 : vector<8x32xf32> to vector<8x32xbf16>
    %c0_60 = arith.constant 0 : index
    %c0_61 = arith.constant 0 : index
    %111 = vector.load %arg10[%c0_60, %c0_61] : memref<32x32xbf16, #tpu.memory_space<vmem>>, vector<32x32xbf16>
    %cst_62 = arith.constant dense<0.000000e+00> : vector<8x32xf32>
    %112 = tpu.matmul %110, %111, %cst_62 {dimension_numbers = #tpu.dot_dimension_numbers<[1], [0], [0], [1], [0, 0, 1, 1], [], []>} : vector<8x32xbf16>, vector<32x32xbf16>, vector<8x32xf32> -> vector<8x32xf32>
    %c0_63 = arith.constant 0 : index
    %c0_64 = arith.constant 0 : index
    %113 = vector.load %arg11[%c0_63, %c0_64] : memref<1x32xf32, #tpu.memory_space<vmem>>, vector<1x32xf32>
    %114 = vector.broadcast %113 : vector<1x32xf32> to vector<8x32xf32>
    %115 = arith.addf %112, %114 : vector<8x32xf32>
    %116 = arith.addf %9, %115 : vector<8x32xf32>
    %cst_65 = arith.constant dense<0.000000e+00> : vector<8xf32>
    %117 = vector.multi_reduction <add>, %116, %cst_65 [1] : vector<8x32xf32> to vector<8xf32>
    %118 = vector.shape_cast %117 : vector<8xf32> to vector<8x1xf32>
    %cst_66 = arith.constant 3.200000e+01 : f32
    %119 = vector.broadcast %cst_66 : f32 to vector<8x1xf32>
    %120 = arith.divf %118, %119 : vector<8x1xf32>
    %121 = vector.broadcast %120 : vector<8x1xf32> to vector<8x32xf32>
    %122 = arith.subf %116, %121 : vector<8x32xf32>
    %123 = arith.mulf %122, %122 : vector<8x32xf32>
    %cst_67 = arith.constant dense<0.000000e+00> : vector<8xf32>
    %124 = vector.multi_reduction <add>, %123, %cst_67 [1] : vector<8x32xf32> to vector<8xf32>
    %125 = vector.shape_cast %124 : vector<8xf32> to vector<8x1xf32>
    %cst_68 = arith.constant 3.200000e+01 : f32
    %126 = vector.broadcast %cst_68 : f32 to vector<8x1xf32>
    %127 = arith.divf %125, %126 : vector<8x1xf32>
    %128 = vector.broadcast %120 : vector<8x1xf32> to vector<8x32xf32>
    %129 = arith.subf %116, %128 : vector<8x32xf32>
    %cst_69 = arith.constant 9.99999974E-6 : f32
    %130 = vector.broadcast %cst_69 : f32 to vector<8x1xf32>
    %131 = arith.addf %127, %130 : vector<8x1xf32>
    %132 = math.rsqrt %131 : vector<8x1xf32>
    %133 = vector.broadcast %132 : vector<8x1xf32> to vector<8x32xf32>
    %134 = arith.mulf %129, %133 : vector<8x32xf32>
    %c0_70 = arith.constant 0 : index
    %c0_71 = arith.constant 0 : index
    %135 = vector.load %arg12[%c0_70, %c0_71] : memref<1x32xf32, #tpu.memory_space<vmem>>, vector<1x32xf32>
    %136 = vector.broadcast %135 : vector<1x32xf32> to vector<8x32xf32>
    %137 = arith.mulf %134, %136 : vector<8x32xf32>
    %c0_72 = arith.constant 0 : index
    %c0_73 = arith.constant 0 : index
    %138 = vector.load %arg13[%c0_72, %c0_73] : memref<1x32xf32, #tpu.memory_space<vmem>>, vector<1x32xf32>
    %139 = vector.broadcast %138 : vector<1x32xf32> to vector<8x32xf32>
    %140 = arith.addf %137, %139 : vector<8x32xf32>
    %141 = arith.truncf %140 : vector<8x32xf32> to vector<8x32xbf16>
    %c0_74 = arith.constant 0 : index
    %c0_75 = arith.constant 0 : index
    %c0_76 = arith.constant 0 : index
    %142 = vector.load %arg15[%c0_74, %c0_75, %c0_76] : memref<1x8x32xbf16, #tpu.memory_space<vmem>>, vector<1x8x32xbf16>
    %143 = vector.shape_cast %142 : vector<1x8x32xbf16> to vector<8x32xbf16>
    %144 = vector.shape_cast %141 : vector<8x32xbf16> to vector<1x8x32xbf16>
    tpu.vector_store %arg15[%c0_74, %c0_75, %c0_76], %144 {strides = array<i32>} : memref<1x8x32xbf16, #tpu.memory_space<vmem>>, vector<1x8x32xbf16>,
    return
  }
  func.func @transform_0(%arg0: i32, %arg1: i32) -> (i32, i32, i32) {
    %c0_i32 = arith.constant 0 : i32
    %c0_i32_0 = arith.constant 0 : i32
    return %arg0, %arg1, %c0_i32 : i32, i32, i32
  }
  func.func @transform_1(%arg0: i32, %arg1: i32) -> (i32, i32, i32) {
    %c0_i32 = arith.constant 0 : i32
    %c0_i32_0 = arith.constant 0 : i32
    %c0_i32_1 = arith.constant 0 : i32
    return %arg0, %c0_i32, %c0_i32_0 : i32, i32, i32
  }
  func.func @transform_2(%arg0: i32, %arg1: i32) -> (i32, i32) {
    %c0_i32 = arith.constant 0 : i32
    %c0_i32_0 = arith.constant 0 : i32
    return %arg1, %c0_i32 : i32, i32
  }
  func.func @transform_3(%arg0: i32, %arg1: i32) -> (i32, i32) {
    %c0_i32 = arith.constant 0 : i32
    %c0_i32_0 = arith.constant 0 : i32
    %c0_i32_1 = arith.constant 0 : i32
    return %c0_i32, %c0_i32_0 : i32, i32
  }
  func.func @transform_4(%arg0: i32, %arg1: i32) -> (i32, i32) {
    %c0_i32 = arith.constant 0 : i32
    %c0_i32_0 = arith.constant 0 : i32
    %c0_i32_1 = arith.constant 0 : i32
    return %c0_i32, %c0_i32_0 : i32, i32
  }
  func.func @transform_5(%arg0: i32, %arg1: i32) -> (i32, i32) {
    %c0_i32 = arith.constant 0 : i32
    %c0_i32_0 = arith.constant 0 : i32
    %c0_i32_1 = arith.constant 0 : i32
    return %c0_i32, %c0_i32_0 : i32, i32
  }
  func.func @transform_6(%arg0: i32, %arg1: i32) -> (i32, i32) {
    %c0_i32 = arith.constant 0 : i32
    %c0_i32_0 = arith.constant 0 : i32
    %c0_i32_1 = arith.constant 0 : i32
    return %c0_i32, %c0_i32_0 : i32, i32
  }
  func.func @transform_7(%arg0: i32, %arg1: i32) -> (i32, i32) {
    %c0_i32 = arith.constant 0 : i32
    %c0_i32_0 = arith.constant 0 : i32
    %c0_i32_1 = arith.constant 0 : i32
    return %c0_i32, %c0_i32_0 : i32, i32
  }
  func.func @transform_8(%arg0: i32, %arg1: i32) -> (i32, i32) {
    %c0_i32 = arith.constant 0 : i32
    %c0_i32_0 = arith.constant 0 : i32
    %c0_i32_1 = arith.constant 0 : i32
    return %c0_i32, %c0_i32_0 : i32, i32
  }
  func.func @transform_9(%arg0: i32, %arg1: i32) -> (i32, i32) {
    %c0_i32 = arith.constant 0 : i32
    %c0_i32_0 = arith.constant 0 : i32
    %c0_i32_1 = arith.constant 0 : i32
    return %c0_i32, %c0_i32_0 : i32, i32
  }
  func.func @transform_10(%arg0: i32, %arg1: i32) -> (i32, i32) {
    %c0_i32 = arith.constant 0 : i32
    %c0_i32_0 = arith.constant 0 : i32
    %c0_i32_1 = arith.constant 0 : i32
    return %c0_i32, %c0_i32_0 : i32, i32
  }
  func.func @transform_11(%arg0: i32, %arg1: i32) -> (i32, i32) {
    %c0_i32 = arith.constant 0 : i32
    %c0_i32_0 = arith.constant 0 : i32
    %c0_i32_1 = arith.constant 0 : i32
    return %c0_i32, %c0_i32_0 : i32, i32
  }
  func.func @transform_12(%arg0: i32, %arg1: i32) -> (i32, i32) {
    %c0_i32 = arith.constant 0 : i32
    %c0_i32_0 = arith.constant 0 : i32
    return %arg1, %c0_i32 : i32, i32
  }
  func.func @transform_13(%arg0: i32, %arg1: i32) -> (i32, i32, i32) {
    %c0_i32 = arith.constant 0 : i32
    %c0_i32_0 = arith.constant 0 : i32
    return %arg0, %arg1, %c0_i32 : i32, i32, i32
  }
}

</mosaic_0001>

<llo_original>
// kernel: transformer_forward.9
$region0: #{transformer_forward.9}
  #allocation0 [shape = 'u32[]', space=smem, size = 0x4, offset = 0x4, fixed_abs, tag = 'smem constant byte address 0x4 - core index']
  #allocation1 [shape = 'u32[144,128]{1,0:T(1,128)}', space=vmem, size = 0x12000, scoped, tag = 'internal scratch']
  #allocation2 [shape = 'f32[16,32]{1,0:T(8,128)}', space=vmem, size = 0x2000, scoped, tag = 'scratch operand']
  %s0 = inlined_call_operand.vmem [shape: bf16[16,32], index: 0, kind: input, shape index: {}]
  %s1 = inlined_call_operand.vmem [shape: bf16[32,32], index: 1, kind: input, shape index: {}]
  %s2 = inlined_call_operand.vmem [shape: f32[1,32], index: 2, kind: input, shape index: {}]
  %s3 = inlined_call_operand.vmem [shape: f32[16,32], index: 3, kind: output, shape index: {}]
  %s4 = sld [smem:[#allocation0]]
  $region30: #{transformer_forward.9} parent=0
    _
  %s6 = ssub.s32 1, %s4
  %s7 = scalar_select 0, %s6, %s4
  // Predicated region
  $region2: #{transformer_forward.9} parent=0 // pred_check
    _
  $region3: #{transformer_forward.9} parent=0 // pred_check_branch
    %9 = sbr.rel (0) target = $region5
  $region4: #{transformer_forward.9} parent=0 // pred_region
    _
  $region5: #{transformer_forward.9} parent=0 // pred_fallthru
    _
  // Predicated region
  $region6: #{transformer_forward.9} parent=0 // pred_check
    _
  $region7: #{transformer_forward.9} parent=0 // pred_check_branch
    %11 = sbr.rel (0) target = $region9
  $region8: #{transformer_forward.9} parent=0 // pred_region
    _
  $region9: #{transformer_forward.9} parent=0 // pred_fallthru
    _
  // Predicated region
  $region10: #{transformer_forward.9} parent=0 // pred_check
    _
  $region11: #{transformer_forward.9} parent=0 // pred_check_branch
    %13 = sbr.rel (0) target = $region13
  $region12: #{transformer_forward.9} parent=0 // pred_region
    _
  $region13: #{transformer_forward.9} parent=0 // pred_fallthru
    _
  %p15 = scmp.eq.s32.totalorder 0, 0
  // Predicated region
  $region14: #{transformer_forward.9} parent=0 // pred_check
    %p16 = pneg %p15
  $region15: #{transformer_forward.9} parent=0 // pred_check_branch
    %18 = sbr.rel (%p16) target = $region17
  $region16: #{transformer_forward.9} parent=0 // pred_region
    %vm19 = vcmask 261120
    %20 = vst.msk [vmem:[#allocation2] sm:$0xff] %vm19, 0.0
    %21 = vst.msk [vmem:[#allocation2 + $0x8] sm:$0xff] %vm19, 0.0
  $region17: #{transformer_forward.9} parent=0 // pred_fallthru
    _
  %v22 = vld [vmem:[#allocation2] sm:$0xff]
  %v23 = vld [vmem:[#allocation2 + $0x8] sm:$0xff]
  %v24 = vld [vmem:[%s0] sm:$0xf]
  %v25 = vld [vmem:[%s0 + $0x4] sm:$0xf]
  %v26 = vld [vmem:[%s1] sm:$0xf]
  %v27 = vld [vmem:[%s1 + $0x4] sm:$0xf]
  %v28 = vld [vmem:[%s1 + $0x8] sm:$0xf]
  %v29 = vld [vmem:[%s1 + $0xc] sm:$0xf]
  %v32 = vunpack.c.l.b16 %v24
  %v33 = vunpack.c.l.b16 %v25
  %v34 = vpack.c.b16 %v33, %v32
  %v39 = vunpack.c.l.b16 %v26
  %v40 = vunpack.c.l.b16 %v27
  %v41 = vunpack.c.l.b16 %v28
  %v42 = vunpack.c.l.b16 %v29
  %v43 = vpack.c.b16 %v40, %v39
  %v44 = vpack.c.b16 %v42, %v41
  %vm47 = vcmask 261120
  %v49 = vsel %vm47, %v34, 0
  %51 = vmatprep.subr.bf16.mxu0 0
  %52 = vmatpush1.bf16.msra.mxu0 %v43
  %53 = vmatprep.subr.bf16.mxu0 0
  %54 = vmatpush1.bf16.msra.mxu0 %v44
  %55 = vmatprep.subr.bf16.mxu0 0
  %56 = vmatpush1.bf16.msra.mxu0 0
  %57 = vmatprep.subr.bf16.mxu0 0
  %58 = vmatpush1.bf16.msra.mxu0 0
  %59 = vmatprep.subr.bf16.mxu0 0
  %60 = vmatpush1.bf16.msra.mxu0 0
  %61 = vmatprep.subr.bf16.mxu0 0
  %62 = vmatpush1.bf16.msra.mxu0 0
  %63 = vmatprep.subr.bf16.mxu0 0
  %64 = vmatpush1.bf16.msra.mxu0 0
  %65 = vmatprep.subr.bf16.mxu0 0
  %66 = vmatpush1.bf16.msra.mxu0 0
  %67 = vmatprep.subr.bf16.mxu0 0
  %68 = vmatpush1.bf16.msra.mxu0 0
  %69 = vmatprep.subr.bf16.mxu0 0
  %70 = vmatpush1.bf16.msra.mxu0 0
  %71 = vmatprep.subr.bf16.mxu0 0
  %72 = vmatpush1.bf16.msra.mxu0 0
  %73 = vmatprep.subr.bf16.mxu0 0
  %74 = vmatpush1.bf16.msra.mxu0 0
  %75 = vmatprep.subr.bf16.mxu0 0
  %76 = vmatpush1.bf16.msra.mxu0 0
  %77 = vmatprep.subr.bf16.mxu0 0
  %78 = vmatpush1.bf16.msra.mxu0 0
  %79 = vmatprep.subr.bf16.mxu0 0
  %80 = vmatpush1.bf16.msra.mxu0 0
  %81 = vmatprep.subr.bf16.mxu0 0
  %82 = vmatpush1.bf16.msra.mxu0 0
  %83 = vmatprep.mubr.bf16.mxu0 0
  %84 = vmatmul.mubr.bf16.gmra.mrb[0].mxu0 %v49
  %v85 = vpop.f32.mrb[0].mxu0
  %v86 = vadd.f32 0.0, %v85
  %v87 = vpop.f32.mrb[0].mxu0
  %v88 = vpop.f32.mrb[0].mxu0
  %v89 = vadd.f32 0.0, %v88
  %v90 = vpop.f32.mrb[0].mxu0
  %91 = vdwg.mxu0
  %v92 = vadd.f32 %v22, %v86
  %v93 = vadd.f32 %v23, %v89
  %94 = vst.msk [vmem:[#allocation2] sm:$0xff] %vm47, %v92
  %95 = vst.msk [vmem:[#allocation2 + $0x8] sm:$0xff] %vm47, %v93
  // Predicated region
  $region18: #{transformer_forward.9} parent=0 // pred_check
    %p96 = pneg %p15
  $region19: #{transformer_forward.9} parent=0 // pred_check_branch
    %98 = sbr.rel (%p96) target = $region21
  $region20: #{transformer_forward.9} parent=0 // pred_region
    %v99 = vld [vmem:[#allocation2] sm:$0xff]
    %v100 = vld [vmem:[#allocation2 + $0x8] sm:$0xff]
    %v101 = vld [vmem:[%s2] sm:$0x1]
    %v103 = vlaneseq
    %v104 = vshrl.u32 %v103, 7
    %v105 = vsub.s32 0, %v104
    %v106 = vrot.slane %v101, %v105
    %v108 = vadd.f32 %v99, %v106
    %v109 = vadd.f32 %v100, %v106
    %110 = vst.msk [vmem:[%s3] sm:$0xff] %vm47, %v108
    %111 = vst.msk [vmem:[%s3 + $0x8] sm:$0xff] %vm47, %v109
  $region21: #{transformer_forward.9} parent=0 // pred_fallthru
    _
  // Predicated region
  $region22: #{transformer_forward.9} parent=0 // pred_check
    _
  $region23: #{transformer_forward.9} parent=0 // pred_check_branch
    %113 = sbr.rel (0) target = $region25
  $region24: #{transformer_forward.9} parent=0 // pred_region
    _
  $region25: #{transformer_forward.9} parent=0 // pred_fallthru
    _
  // Predicated region
  $region26: #{transformer_forward.9} parent=0 // pred_check
    _
  $region27: #{transformer_forward.9} parent=0 // pred_check_branch
    %115 = sbr.rel (0) target = $region29
  $region28: #{transformer_forward.9} parent=0 // pred_region
    _
  $region29: #{transformer_forward.9} parent=0 // pred_fallthru
    _

// kernel: transformer_forward.6
$region0: #{transformer_forward.6}
  #allocation0 [shape = 'u32[]', space=smem, size = 0x4, offset = 0x4, fixed_abs, tag = 'smem constant byte address 0x4 - core index']
  #allocation1 [shape = 'u32[144,128]{1,0:T(1,128)}', space=vmem, size = 0x12000, scoped, tag = 'internal scratch']
  #allocation2 [shape = 'f32[16,32]{1,0:T(8,128)}', space=vmem, size = 0x2000, scoped, tag = 'scratch operand']
  %s0 = inlined_call_operand.vmem [shape: bf16[16,32], index: 0, kind: input, shape index: {}]
  %s1 = inlined_call_operand.vmem [shape: bf16[32,64], index: 1, kind: input, shape index: {}]
  %s2 = inlined_call_operand.vmem [shape: f32[1,64], index: 2, kind: input, shape index: {}]
  %s3 = inlined_call_operand.vmem [shape: bf16[64,32], index: 3, kind: input, shape index: {}]
  %s4 = inlined_call_operand.vmem [shape: f32[1,32], index: 4, kind: input, shape index: {}]
  %s5 = inlined_call_operand.vmem [shape: f32[1,32], index: 5, kind: input, shape index: {}]
  %s6 = inlined_call_operand.vmem [shape: f32[1,32], index: 6, kind: input, shape index: {}]
  %s7 = inlined_call_operand.vmem [shape: bf16[16,32], index: 7, kind: output, shape index: {}]
  %s8 = sld [smem:[#allocation0]]
  $region46: #{transformer_forward.6} parent=0
    _
  %s10 = ssub.s32 1, %s8
  %s11 = scalar_select 0, %s10, %s8
  // Predicated region
  $region2: #{transformer_forward.6} parent=0 // pred_check
    _
  $region3: #{transformer_forward.6} parent=0 // pred_check_branch
    %13 = sbr.rel (0) target = $region5
  $region4: #{transformer_forward.6} parent=0 // pred_region
    _
  $region5: #{transformer_forward.6} parent=0 // pred_fallthru
    _
  // Predicated region
  $region6: #{transformer_forward.6} parent=0 // pred_check
    _
  $region7: #{transformer_forward.6} parent=0 // pred_check_branch
    %15 = sbr.rel (0) target = $region9
  $region8: #{transformer_forward.6} parent=0 // pred_region
    _
  $region9: #{transformer_forward.6} parent=0 // pred_fallthru
    _
  // Predicated region
  $region10: #{transformer_forward.6} parent=0 // pred_check
    _
  $region11: #{transformer_forward.6} parent=0 // pred_check_branch
    %17 = sbr.rel (0) target = $region13
  $region12: #{transformer_forward.6} parent=0 // pred_region
    _
  $region13: #{transformer_forward.6} parent=0 // pred_fallthru
    _
  // Predicated region
  $region14: #{transformer_forward.6} parent=0 // pred_check
    _
  $region15: #{transformer_forward.6} parent=0 // pred_check_branch
    %19 = sbr.rel (0) target = $region17
  $region16: #{transformer_forward.6} parent=0 // pred_region
    _
  $region17: #{transformer_forward.6} parent=0 // pred_fallthru
    _
  // Predicated region
  $region18: #{transformer_forward.6} parent=0 // pred_check
    _
  $region19: #{transformer_forward.6} parent=0 // pred_check_branch
    %21 = sbr.rel (0) target = $region21
  $region20: #{transformer_forward.6} parent=0 // pred_region
    _
  $region21: #{transformer_forward.6} parent=0 // pred_fallthru
    _
  // Predicated region
  $region22: #{transformer_forward.6} parent=0 // pred_check
    _
  $region23: #{transformer_forward.6} parent=0 // pred_check_branch
    %23 = sbr.rel (0) target = $region25
  $region24: #{transformer_forward.6} parent=0 // pred_region
    _
  $region25: #{transformer_forward.6} parent=0 // pred_fallthru
    _
  // Predicated region
  $region26: #{transformer_forward.6} parent=0 // pred_check
    _
  $region27: #{transformer_forward.6} parent=0 // pred_check_branch
    %25 = sbr.rel (0) target = $region29
  $region28: #{transformer_forward.6} parent=0 // pred_region
    _
  $region29: #{transformer_forward.6} parent=0 // pred_fallthru
    _
  %p27 = scmp.eq.s32.totalorder 0, 0
  // Predicated region
  $region30: #{transformer_forward.6} parent=0 // pred_check
    %p28 = pneg %p27
  $region31: #{transformer_forward.6} parent=0 // pred_check_branch
    %30 = sbr.rel (%p28) target = $region33
  $region32: #{transformer_forward.6} parent=0 // pred_region
    %vm31 = vcmask 261120
    %32 = vst.msk [vmem:[#allocation2] sm:$0xff] %vm31, 0.0
    %33 = vst.msk [vmem:[#allocation2 + $0x8] sm:$0xff] %vm31, 0.0
  $region33: #{transformer_forward.6} parent=0 // pred_fallthru
    _
  %v34 = vld [vmem:[%s0] sm:$0xf]
  %v35 = vld [vmem:[%s0 + $0x4] sm:$0xf]
  %v36 = vld [vmem:[%s1] sm:$0xf]
  %v37 = vld [vmem:[%s1 + $0x4] sm:$0xf]
  %v38 = vld [vmem:[%s1 + $0x8] sm:$0xf]
  %v39 = vld [vmem:[%s1 + $0xc] sm:$0xf]
  %v40 = vld [vmem:[%s2] sm:$0x1]
  %v42 = vlaneseq
  %v43 = vshrl.u32 %v42, 7
  %v44 = vsub.s32 0, %v43
  %v45 = vrot.slane %v40, %v44
  %v49 = vunpack.c.l.b16 %v34
  %v50 = vunpack.c.l.b16 %v35
  %v51 = vpack.c.b16 %v50, %v49
  %v56 = vunpack.c.l.b16 %v36
  %v57 = vunpack.c.l.b16 %v37
  %v58 = vunpack.c.l.b16 %v38
  %v59 = vunpack.c.l.b16 %v39
  %v60 = vpack.c.b16 %v57, %v56
  %v61 = vpack.c.b16 %v59, %v58
  %vm64 = vcmask 261120
  %v66 = vsel %vm64, %v51, 0
  %68 = vmatprep.subr.bf16.mxu0 0
  %69 = vmatpush1.bf16.msra.mxu0 %v60
  %70 = vmatprep.subr.bf16.mxu0 0
  %71 = vmatpush1.bf16.msra.mxu0 %v61
  %72 = vmatprep.subr.bf16.mxu0 0
  %73 = vmatpush1.bf16.msra.mxu0 0
  %74 = vmatprep.subr.bf16.mxu0 0
  %75 = vmatpush1.bf16.msra.mxu0 0
  %76 = vmatprep.subr.bf16.mxu0 0
  %77 = vmatpush1.bf16.msra.mxu0 0
  %78 = vmatprep.subr.bf16.mxu0 0
  %79 = vmatpush1.bf16.msra.mxu0 0
  %80 = vmatprep.subr.bf16.mxu0 0
  %81 = vmatpush1.bf16.msra.mxu0 0
  %82 = vmatprep.subr.bf16.mxu0 0
  %83 = vmatpush1.bf16.msra.mxu0 0
  %84 = vmatprep.subr.bf16.mxu0 0
  %85 = vmatpush1.bf16.msra.mxu0 0
  %86 = vmatprep.subr.bf16.mxu0 0
  %87 = vmatpush1.bf16.msra.mxu0 0
  %88 = vmatprep.subr.bf16.mxu0 0
  %89 = vmatpush1.bf16.msra.mxu0 0
  %90 = vmatprep.subr.bf16.mxu0 0
  %91 = vmatpush1.bf16.msra.mxu0 0
  %92 = vmatprep.subr.bf16.mxu0 0
  %93 = vmatpush1.bf16.msra.mxu0 0
  %94 = vmatprep.subr.bf16.mxu0 0
  %95 = vmatpush1.bf16.msra.mxu0 0
  %96 = vmatprep.subr.bf16.mxu0 0
  %97 = vmatpush1.bf16.msra.mxu0 0
  %98 = vmatprep.subr.bf16.mxu0 0
  %99 = vmatpush1.bf16.msra.mxu0 0
  %100 = vmatprep.mubr.bf16.mxu0 0
  %101 = vmatmul.mubr.bf16.gmra.mrb[0].mxu0 %v66
  %v102 = vpop.f32.mrb[0].mxu0
  %v103 = vadd.f32 %v45, %v102
  %v104 = vpop.f32.mrb[0].mxu0
  %v105 = vpop.f32.mrb[0].mxu0
  %v106 = vadd.f32 %v45, %v105
  %v107 = vpop.f32.mrb[0].mxu0
  %108 = vdwg.mxu0
  %v109 = vmax.f32 %v103, 0.0
  %v110 = vmax.f32 %v106, 0.0
  %v111 = vld [vmem:[#allocation2] sm:$0xff]
  %v112 = vld [vmem:[#allocation2 + $0x8] sm:$0xff]
  %v113 = vpack.c.bf16 %v110, %v109
  %v114 = vld [vmem:[%s3] sm:$0xf]
  %v115 = vld [vmem:[%s3 + $0x4] sm:$0xf]
  %v116 = vld [vmem:[%s3 + $0x8] sm:$0xf]
  %v117 = vld [vmem:[%s3 + $0xc] sm:$0xf]
  %v118 = vld [vmem:[%s3 + $0x10] sm:$0xf]
  %v119 = vld [vmem:[%s3 + $0x14] sm:$0xf]
  %v120 = vld [vmem:[%s3 + $0x18] sm:$0xf]
  %v121 = vld [vmem:[%s3 + $0x1c] sm:$0xf]
  %v130 = vunpack.c.l.b16 %v114
  %v131 = vunpack.c.l.b16 %v115
  %v132 = vunpack.c.l.b16 %v116
  %v133 = vunpack.c.l.b16 %v117
  %v134 = vunpack.c.l.b16 %v118
  %v135 = vunpack.c.l.b16 %v119
  %v136 = vunpack.c.l.b16 %v120
  %v137 = vunpack.c.l.b16 %v121
  %v138 = vpack.c.b16 %v131, %v130
  %v139 = vpack.c.b16 %v133, %v132
  %v140 = vpack.c.b16 %v135, %v134
  %v141 = vpack.c.b16 %v137, %v136
  %vm146 = vcmask 523264
  %v148 = vsel %vm146, %v113, 0
  %150 = vmatprep.subr.bf16.mxu0 0
  %151 = vmatpush1.bf16.msra.mxu0 %v138
  %152 = vmatprep.subr.bf16.mxu0 0
  %153 = vmatpush1.bf16.msra.mxu0 %v139
  %154 = vmatprep.subr.bf16.mxu0 0
  %155 = vmatpush1.bf16.msra.mxu0 %v140
  %156 = vmatprep.subr.bf16.mxu0 0
  %157 = vmatpush1.bf16.msra.mxu0 %v141
  %158 = vmatprep.subr.bf16.mxu0 0
  %159 = vmatpush1.bf16.msra.mxu0 0
  %160 = vmatprep.subr.bf16.mxu0 0
  %161 = vmatpush1.bf16.msra.mxu0 0
  %162 = vmatprep.subr.bf16.mxu0 0
  %163 = vmatpush1.bf16.msra.mxu0 0
  %164 = vmatprep.subr.bf16.mxu0 0
  %165 = vmatpush1.bf16.msra.mxu0 0
  %166 = vmatprep.subr.bf16.mxu0 0
  %167 = vmatpush1.bf16.msra.mxu0 0
  %168 = vmatprep.subr.bf16.mxu0 0
  %169 = vmatpush1.bf16.msra.mxu0 0
  %170 = vmatprep.subr.bf16.mxu0 0
  %171 = vmatpush1.bf16.msra.mxu0 0
  %172 = vmatprep.subr.bf16.mxu0 0
  %173 = vmatpush1.bf16.msra.mxu0 0
  %174 = vmatprep.subr.bf16.mxu0 0
  %175 = vmatpush1.bf16.msra.mxu0 0
  %176 = vmatprep.subr.bf16.mxu0 0
  %177 = vmatpush1.bf16.msra.mxu0 0
  %178 = vmatprep.subr.bf16.mxu0 0
  %179 = vmatpush1.bf16.msra.mxu0 0
  %180 = vmatprep.subr.bf16.mxu0 0
  %181 = vmatpush1.bf16.msra.mxu0 0
  %182 = vmatprep.mubr.bf16.mxu0 0
  %183 = vmatmul.mubr.bf16.gmra.mrb[0].mxu0 %v148
  %v184 = vpop.f32.mrb[0].mxu0
  %v185 = vadd.f32 0.0, %v184
  %v186 = vpop.f32.mrb[0].mxu0
  %v187 = vpop.f32.mrb[0].mxu0
  %v188 = vadd.f32 0.0, %v187
  %v189 = vpop.f32.mrb[0].mxu0
  %190 = vdwg.mxu0
  %v191 = vadd.f32 %v111, %v185
  %v192 = vadd.f32 %v112, %v188
  %193 = vst.msk [vmem:[#allocation2] sm:$0xff] %vm64, %v191
  %194 = vst.msk [vmem:[#allocation2 + $0x8] sm:$0xff] %vm64, %v192
  // Predicated region
  $region34: #{transformer_forward.6} parent=0 // pred_check
    %p195 = pneg %p27
  $region35: #{transformer_forward.6} parent=0 // pred_check_branch
    %197 = sbr.rel (%p195) target = $region37
  $region36: #{transformer_forward.6} parent=0 // pred_region
    %v198 = vld [vmem:[%s0] sm:$0xf]
    %v199 = vld [vmem:[%s0 + $0x4] sm:$0xf]
    %v200 = vunpack.c.l.bf16 %v198
    %v201 = vunpack.c.l.bf16 %v199
    %v202 = vld [vmem:[#allocation2] sm:$0xff]
    %v203 = vld [vmem:[#allocation2 + $0x8] sm:$0xff]
    %v204 = vadd.f32 %v200, %v202
    %v205 = vadd.f32 %v201, %v203
    %v206 = vld [vmem:[%s4] sm:$0x1]
    %v208 = vlaneseq
    %v209 = vshrl.u32 %v208, 7
    %v210 = vsub.s32 0, %v209
    %v211 = vrot.slane %v206, %v210
    %v213 = vadd.f32 %v204, %v211
    %v214 = vadd.f32 %v205, %v211
    %v215 = vsel %vm64, %v213, 0.0
    %216 = vadd.xlane.f32.xlu0 %v215
    %v217 = vpop.xlane.xlu0 %216
    %v218 = vsel %vm64, %v214, 0.0
    %219 = vadd.xlane.f32.xlu0 %v218
    %v220 = vpop.xlane.xlu0 %219
    %v221 = vrcp.pop 32.0
    %v222 = vmul.f32 %v217, %v221
    %v223 = vmul.f32 %v220, %v221
    %v224 = vsub.f32 %v213, %v222
    %v225 = vsub.f32 %v214, %v223
    %v226 = vmul.f32 %v224, %v224
    %v227 = vmul.f32 %v225, %v225
    %v228 = vsel %vm64, %v226, 0.0
    %229 = vadd.xlane.f32.xlu0 %v228
    %v230 = vpop.xlane.xlu0 %229
    %v231 = vsel %vm64, %v227, 0.0
    %232 = vadd.xlane.f32.xlu0 %v231
    %v233 = vpop.xlane.xlu0 %232
    %v234 = vmul.f32 %v230, %v221
    %v235 = vmul.f32 %v233, %v221
    %v236 = vadd.f32 %v234, 1e-05
    %v237 = vadd.f32 %v235, 1e-05
    %v238 = vrsqrt.pop %v236
    %v239 = vrsqrt.pop %v237
    %v240 = vmul.f32 %v224, %v238
    %v241 = vmul.f32 %v225, %v239
    %v242 = vld [vmem:[%s5] sm:$0x1]
    %v244 = vlaneseq
    %v245 = vshrl.u32 %v244, 7
    %v246 = vsub.s32 0, %v245
    %v247 = vrot.slane %v242, %v246
    %v249 = vmul.f32 %v240, %v247
    %v250 = vmul.f32 %v241, %v247
    %v251 = vld [vmem:[%s6] sm:$0x1]
    %v253 = vlaneseq
    %v254 = vshrl.u32 %v253, 7
    %v255 = vsub.s32 0, %v254
    %v256 = vrot.slane %v251, %v255
    %v258 = vadd.f32 %v249, %v256
    %v259 = vadd.f32 %v250, %v256
    %v260 = vpack.c.bf16 %v259, %v258
    %v262 = vunpack.c.l.b16 %v260
    %v263 = vunpack.c.h.b16 %v260
    %v264 = vpack.c.b16 %v262, %v262
    %v265 = vpack.c.b16 %v263, %v263
    %vm268 = vcmask 257024
    %269 = vst.msk [vmem:[%s7] sm:$0xf] %vm268, %v264
    %270 = vst.msk [vmem:[%s7 + $0x4] sm:$0xf] %vm268, %v265
  $region37: #{transformer_forward.6} parent=0 // pred_fallthru
    _
  // Predicated region
  $region38: #{transformer_forward.6} parent=0 // pred_check
    _
  $region39: #{transformer_forward.6} parent=0 // pred_check_branch
    %272 = sbr.rel (0) target = $region41
  $region40: #{transformer_forward.6} parent=0 // pred_region
    _
  $region41: #{transformer_forward.6} parent=0 // pred_fallthru
    _
  // Predicated region
  $region42: #{transformer_forward.6} parent=0 // pred_check
    _
  $region43: #{transformer_forward.6} parent=0 // pred_check_branch
    %274 = sbr.rel (0) target = $region45
  $region44: #{transformer_forward.6} parent=0 // pred_region
    _
  $region45: #{transformer_forward.6} parent=0 // pred_fallthru
    _

// kernel: transformer_forward.7
$region0: #{transformer_forward.7}
  #allocation0 [shape = 'u32[]', space=smem, size = 0x4, offset = 0x4, fixed_abs, tag = 'smem constant byte address 0x4 - core index']
  #allocation1 [shape = 'u32[144,128]{1,0:T(1,128)}', space=vmem, size = 0x12000, scoped, tag = 'internal scratch']
  #allocation2 [shape = 'bf16[4,8,8]{2,1,0:T(8,128)(2,1)}', space=vmem, size = 0x2000, scoped, tag = 'scratch operand']
  #allocation3 [shape = 'bf16[4,8,8]{2,1,0:T(8,128)(2,1)}', space=vmem, size = 0x2000, scoped, tag = 'scratch operand']
  #allocation4 [shape = 'f32[8,32]{1,0:T(8,128)}', space=vmem, size = 0x1000, scoped, tag = 'scratch operand']
  %s0 = inlined_call_operand.vmem [shape: bf16[2,8,32], index: 0, kind: input, shape index: {}, may-alias: {0,1}]
  %s1 = inlined_call_operand.vmem [shape: bf16[2,8,32], index: 1, kind: input, shape index: {}, may-alias: {0,1}]
  %s2 = inlined_call_operand.vmem [shape: bf16[32,32], index: 2, kind: input, shape index: {}]
  %s3 = inlined_call_operand.vmem [shape: f32[1,32], index: 3, kind: input, shape index: {}]
  %s4 = inlined_call_operand.vmem [shape: bf16[32,64], index: 4, kind: input, shape index: {}]
  %s5 = inlined_call_operand.vmem [shape: f32[1,64], index: 5, kind: input, shape index: {}]
  %s6 = inlined_call_operand.vmem [shape: bf16[32,32], index: 6, kind: input, shape index: {}]
  %s7 = inlined_call_operand.vmem [shape: f32[1,32], index: 7, kind: input, shape index: {}]
  %s8 = inlined_call_operand.vmem [shape: f32[1,32], index: 8, kind: input, shape index: {}]
  %s9 = inlined_call_operand.vmem [shape: f32[1,32], index: 9, kind: input, shape index: {}]
  %s10 = inlined_call_operand.vmem [shape: f32[8,8], index: 10, kind: input, shape index: {}]
  %s11 = inlined_call_operand.vmem [shape: bf16[2,8,32], index: 11, kind: output, shape index: {}]
  %s12 = sld [smem:[#allocation0]]
  $region81: #{transformer_forward.7} parent=0
    _
  %s14 = ssub.s32 1, %s12
  %s15 = scalar_select 0, %s14, %s12
  loop: start=0, step=1, limit=4
  $region2: #{transformer_forward.7} parent=0 // loop_pre_header
    _
  $region3: #{transformer_forward.7} parent=0 // loop_header
    %s17 = sphi 0, %s21
    %p18 = scmp.ge.s32.totalorder %s17, 4
    %s24 = sphi 0, %s36
    %s25 = sphi 0, %s32
    %s26 = sphi 0, %s24
    %s27 = sphi 0, %s25
    %s28 = sphi 0, %s26
    %s29 = sphi 0, %s27
    %s41 = sphi 0, %s43
    %s44 = sphi 0, %s41
    %s45 = sphi 0, %s44
    %s61 = sphi 0, %s45
    %s67 = sphi 0, %s69
    %s70 = sphi 0, %s67
    %s71 = sphi 0, %s70
    %s87 = sphi 0, %s71
    %s91 = sphi 0, %s91
    %s93 = sphi 0, %s91
    %s94 = sphi 0, %s93
    %s108 = sphi 0, %s94
    %s112 = sphi 0, %s112
    %s114 = sphi 0, %s112
    %s115 = sphi 0, %s114
    %s129 = sphi 0, %s115
    %s133 = sphi 0, %s133
    %s135 = sphi 0, %s133
    %s136 = sphi 0, %s135
    %s150 = sphi 0, %s136
    %s154 = sphi 0, %s154
    %s156 = sphi 0, %s154
    %s157 = sphi 0, %s156
    %s171 = sphi 0, %s157
    %s175 = sphi 0, %s175
    %s177 = sphi 0, %s175
    %s178 = sphi 0, %s177
    %s192 = sphi 0, %s178
    %s196 = sphi 0, %s196
    %s198 = sphi 0, %s196
    %s199 = sphi 0, %s198
    %s213 = sphi 0, %s199
    %s217 = sphi 0, %s217
    %s219 = sphi 0, %s217
    %s220 = sphi 0, %s219
    %s234 = sphi 0, %s220
    %s238 = sphi 0, %s238
    %s240 = sphi 0, %s238
    %s241 = sphi 0, %s240
    %s255 = sphi 0, %s241
    %s261 = sphi 0, %s263
    %s264 = sphi 0, %s261
    %s265 = sphi 0, %s264
    %s281 = sphi 0, %s265
    %s289 = sphi 0, %s291
    %s292 = sphi 0, %s289
    %s293 = sphi 0, %s292
    %s309 = sphi 0, %s293
  $region4: #{transformer_forward.7} parent=0 // loop_header_branch
    %20 = sbr.rel (%p18) target = $region8
  $region5: #{transformer_forward.7} parent=0 // loop_body
    %s22 = ssub.s32 %s17, 1
    %s23 = ssub.s32 %s17, 2
    %s30 = sadd.s32 1, %s25
    %p31 = scmp.ge.s32.totalorder %s30, 1
    %s32 = scalar_select %p31, 0, %s30
    %s33 = sadd.s32 1, %s24
    %s34 = scalar_select %p31, %s33, %s24
    %p35 = scmp.ge.s32.totalorder %s34, 2
    %s36 = scalar_select %p35, 0, %s34
    %s37 = ssub.s32 %s24, %s36
    %s38 = ssub.s32 %s25, %s32
    %s39 = sor.u32 %s37, %s38
    %p40 = scmp.eq.s32.totalorder %s39, 0
    %s42 = sadd.s32 %s41, 1
    %s43 = scalar_select %p40, %s41, %s42
    %p46 = pneg %p40
    %p47 = scmp.eq.s32.totalorder %s17, 1
    %p48 = por %p46, %p47
    %p49 = scmp.ne.s32.totalorder %s41, %s44
    %p50 = scmp.eq.s32.totalorder %s17, 0
    %p51 = por %p49, %p50
    %p52 = scmp.ne.s32.totalorder %s41, %s44
    %p53 = scmp.eq.s32.totalorder %s22, 1
    %p54 = por %p52, %p53
    %p55 = scmp.ne.s32.totalorder %s44, %s45
    %p56 = scmp.eq.s32.totalorder %s22, 0
    %p57 = por %p55, %p56
    %p58 = scmp.ne.s32.totalorder %s44, %s45
    %p59 = scmp.eq.s32.totalorder %s23, 1
    %p60 = por %p58, %p59
    %p62 = scmp.ne.s32.totalorder %s45, %s61
    %p63 = scmp.eq.s32.totalorder %s23, 0
    %p64 = por %p62, %p63
    %s65 = ssub.s32 %s24, %s36
    %p66 = scmp.eq.s32.totalorder %s65, 0
    %s68 = sadd.s32 %s67, 1
    %s69 = scalar_select %p66, %s67, %s68
    %p72 = pneg %p66
    %p73 = scmp.eq.s32.totalorder %s17, 1
    %p74 = por %p72, %p73
    %p75 = scmp.ne.s32.totalorder %s67, %s70
    %p76 = scmp.eq.s32.totalorder %s17, 0
    %p77 = por %p75, %p76
    %p78 = scmp.ne.s32.totalorder %s67, %s70
    %p79 = scmp.eq.s32.totalorder %s22, 1
    %p80 = por %p78, %p79
    %p81 = scmp.ne.s32.totalorder %s70, %s71
    %p82 = scmp.eq.s32.totalorder %s22, 0
    %p83 = por %p81, %p82
    %p84 = scmp.ne.s32.totalorder %s70, %s71
    %p85 = scmp.eq.s32.totalorder %s23, 1
    %p86 = por %p84, %p85
    %p88 = scmp.ne.s32.totalorder %s71, %s87
    %p89 = scmp.eq.s32.totalorder %s23, 0
    %p90 = por %p88, %p89
    %s92 = sadd.s32 %s91, 1
    %p95 = scmp.eq.s32.totalorder %s17, 1
    %p96 = scmp.ne.s32.totalorder %s91, %s93
    %p97 = scmp.eq.s32.totalorder %s17, 0
    %p98 = por %p96, %p97
    %p99 = scmp.ne.s32.totalorder %s91, %s93
    %p100 = scmp.eq.s32.totalorder %s22, 1
    %p101 = por %p99, %p100
    %p102 = scmp.ne.s32.totalorder %s93, %s94
    %p103 = scmp.eq.s32.totalorder %s22, 0
    %p104 = por %p102, %p103
    %p105 = scmp.ne.s32.totalorder %s93, %s94
    %p106 = scmp.eq.s32.totalorder %s23, 1
    %p107 = por %p105, %p106
    %p109 = scmp.ne.s32.totalorder %s94, %s108
    %p110 = scmp.eq.s32.totalorder %s23, 0
    %p111 = por %p109, %p110
    %s113 = sadd.s32 %s112, 1
    %p116 = scmp.eq.s32.totalorder %s17, 1
    %p117 = scmp.ne.s32.totalorder %s112, %s114
    %p118 = scmp.eq.s32.totalorder %s17, 0
    %p119 = por %p117, %p118
    %p120 = scmp.ne.s32.totalorder %s112, %s114
    %p121 = scmp.eq.s32.totalorder %s22, 1
    %p122 = por %p120, %p121
    %p123 = scmp.ne.s32.totalorder %s114, %s115
    %p124 = scmp.eq.s32.totalorder %s22, 0
    %p125 = por %p123, %p124
    %p126 = scmp.ne.s32.totalorder %s114, %s115
    %p127 = scmp.eq.s32.totalorder %s23, 1
    %p128 = por %p126, %p127
    %p130 = scmp.ne.s32.totalorder %s115, %s129
    %p131 = scmp.eq.s32.totalorder %s23, 0
    %p132 = por %p130, %p131
    %s134 = sadd.s32 %s133, 1
    %p137 = scmp.eq.s32.totalorder %s17, 1
    %p138 = scmp.ne.s32.totalorder %s133, %s135
    %p139 = scmp.eq.s32.totalorder %s17, 0
    %p140 = por %p138, %p139
    %p141 = scmp.ne.s32.totalorder %s133, %s135
    %p142 = scmp.eq.s32.totalorder %s22, 1
    %p143 = por %p141, %p142
    %p144 = scmp.ne.s32.totalorder %s135, %s136
    %p145 = scmp.eq.s32.totalorder %s22, 0
    %p146 = por %p144, %p145
    %p147 = scmp.ne.s32.totalorder %s135, %s136
    %p148 = scmp.eq.s32.totalorder %s23, 1
    %p149 = por %p147, %p148
    %p151 = scmp.ne.s32.totalorder %s136, %s150
    %p152 = scmp.eq.s32.totalorder %s23, 0
    %p153 = por %p151, %p152
    %s155 = sadd.s32 %s154, 1
    %p158 = scmp.eq.s32.totalorder %s17, 1
    %p159 = scmp.ne.s32.totalorder %s154, %s156
    %p160 = scmp.eq.s32.totalorder %s17, 0
    %p161 = por %p159, %p160
    %p162 = scmp.ne.s32.totalorder %s154, %s156
    %p163 = scmp.eq.s32.totalorder %s22, 1
    %p164 = por %p162, %p163
    %p165 = scmp.ne.s32.totalorder %s156, %s157
    %p166 = scmp.eq.s32.totalorder %s22, 0
    %p167 = por %p165, %p166
    %p168 = scmp.ne.s32.totalorder %s156, %s157
    %p169 = scmp.eq.s32.totalorder %s23, 1
    %p170 = por %p168, %p169
    %p172 = scmp.ne.s32.totalorder %s157, %s171
    %p173 = scmp.eq.s32.totalorder %s23, 0
    %p174 = por %p172, %p173
    %s176 = sadd.s32 %s175, 1
    %p179 = scmp.eq.s32.totalorder %s17, 1
    %p180 = scmp.ne.s32.totalorder %s175, %s177
    %p181 = scmp.eq.s32.totalorder %s17, 0
    %p182 = por %p180, %p181
    %p183 = scmp.ne.s32.totalorder %s175, %s177
    %p184 = scmp.eq.s32.totalorder %s22, 1
    %p185 = por %p183, %p184
    %p186 = scmp.ne.s32.totalorder %s177, %s178
    %p187 = scmp.eq.s32.totalorder %s22, 0
    %p188 = por %p186, %p187
    %p189 = scmp.ne.s32.totalorder %s177, %s178
    %p190 = scmp.eq.s32.totalorder %s23, 1
    %p191 = por %p189, %p190
    %p193 = scmp.ne.s32.totalorder %s178, %s192
    %p194 = scmp.eq.s32.totalorder %s23, 0
    %p195 = por %p193, %p194
    %s197 = sadd.s32 %s196, 1
    %p200 = scmp.eq.s32.totalorder %s17, 1
    %p201 = scmp.ne.s32.totalorder %s196, %s198
    %p202 = scmp.eq.s32.totalorder %s17, 0
    %p203 = por %p201, %p202
    %p204 = scmp.ne.s32.totalorder %s196, %s198
    %p205 = scmp.eq.s32.totalorder %s22, 1
    %p206 = por %p204, %p205
    %p207 = scmp.ne.s32.totalorder %s198, %s199
    %p208 = scmp.eq.s32.totalorder %s22, 0
    %p209 = por %p207, %p208
    %p210 = scmp.ne.s32.totalorder %s198, %s199
    %p211 = scmp.eq.s32.totalorder %s23, 1
    %p212 = por %p210, %p211
    %p214 = scmp.ne.s32.totalorder %s199, %s213
    %p215 = scmp.eq.s32.totalorder %s23, 0
    %p216 = por %p214, %p215
    %s218 = sadd.s32 %s217, 1
    %p221 = scmp.eq.s32.totalorder %s17, 1
    %p222 = scmp.ne.s32.totalorder %s217, %s219
    %p223 = scmp.eq.s32.totalorder %s17, 0
    %p224 = por %p222, %p223
    %p225 = scmp.ne.s32.totalorder %s217, %s219
    %p226 = scmp.eq.s32.totalorder %s22, 1
    %p227 = por %p225, %p226
    %p228 = scmp.ne.s32.totalorder %s219, %s220
    %p229 = scmp.eq.s32.totalorder %s22, 0
    %p230 = por %p228, %p229
    %p231 = scmp.ne.s32.totalorder %s219, %s220
    %p232 = scmp.eq.s32.totalorder %s23, 1
    %p233 = por %p231, %p232
    %p235 = scmp.ne.s32.totalorder %s220, %s234
    %p236 = scmp.eq.s32.totalorder %s23, 0
    %p237 = por %p235, %p236
    %s239 = sadd.s32 %s238, 1
    %p242 = scmp.eq.s32.totalorder %s17, 1
    %p243 = scmp.ne.s32.totalorder %s238, %s240
    %p244 = scmp.eq.s32.totalorder %s17, 0
    %p245 = por %p243, %p244
    %p246 = scmp.ne.s32.totalorder %s238, %s240
    %p247 = scmp.eq.s32.totalorder %s22, 1
    %p248 = por %p246, %p247
    %p249 = scmp.ne.s32.totalorder %s240, %s241
    %p250 = scmp.eq.s32.totalorder %s22, 0
    %p251 = por %p249, %p250
    %p252 = scmp.ne.s32.totalorder %s240, %s241
    %p253 = scmp.eq.s32.totalorder %s23, 1
    %p254 = por %p252, %p253
    %p256 = scmp.ne.s32.totalorder %s241, %s255
    %p257 = scmp.eq.s32.totalorder %s23, 0
    %p258 = por %p256, %p257
    %s259 = ssub.s32 %s25, %s32
    %p260 = scmp.eq.s32.totalorder %s259, 0
    %s262 = sadd.s32 %s261, 1
    %s263 = scalar_select %p260, %s261, %s262
    %p266 = pneg %p260
    %p267 = scmp.eq.s32.totalorder %s17, 1
    %p268 = por %p266, %p267
    %p269 = scmp.ne.s32.totalorder %s261, %s264
    %p270 = scmp.eq.s32.totalorder %s17, 0
    %p271 = por %p269, %p270
    %p272 = scmp.ne.s32.totalorder %s261, %s264
    %p273 = scmp.eq.s32.totalorder %s22, 1
    %p274 = por %p272, %p273
    %p275 = scmp.ne.s32.totalorder %s264, %s265
    %p276 = scmp.eq.s32.totalorder %s22, 0
    %p277 = por %p275, %p276
    %p278 = scmp.ne.s32.totalorder %s264, %s265
    %p279 = scmp.eq.s32.totalorder %s23, 1
    %p280 = por %p278, %p279
    %p282 = scmp.ne.s32.totalorder %s265, %s281
    %p283 = scmp.eq.s32.totalorder %s23, 0
    %p284 = por %p282, %p283
    %s285 = ssub.s32 %s24, %s36
    %s286 = ssub.s32 %s25, %s32
    %s287 = sor.u32 %s285, %s286
    %p288 = scmp.eq.s32.totalorder %s287, 0
    %s290 = sadd.s32 %s289, 1
    %s291 = scalar_select %p288, %s289, %s290
    %p294 = pneg %p288
    %p295 = scmp.eq.s32.totalorder %s17, 1
    %p296 = por %p294, %p295
    %p297 = scmp.ne.s32.totalorder %s289, %s292
    %p298 = scmp.eq.s32.totalorder %s17, 0
    %p299 = por %p297, %p298
    %p300 = scmp.ne.s32.totalorder %s289, %s292
    %p301 = scmp.eq.s32.totalorder %s22, 1
    %p302 = por %p300, %p301
    %p303 = scmp.ne.s32.totalorder %s292, %s293
    %p304 = scmp.eq.s32.totalorder %s22, 0
    %p305 = por %p303, %p304
    %p306 = scmp.ne.s32.totalorder %s292, %s293
    %p307 = scmp.eq.s32.totalorder %s23, 1
    %p308 = por %p306, %p307
    %p310 = scmp.ne.s32.totalorder %s293, %s309
    %p311 = scmp.eq.s32.totalorder %s23, 0
    %p312 = por %p310, %p311
    %p313 = scmp.le.s32.totalorder 1, %s17
    %p314 = scmp.lt.s32.totalorder %s17, 3
    %p315 = pnand %p313, %p314
    %p316 = pneg %p315
    // Predicated region
    $region9: #{transformer_forward.7} parent=5 // pred_check
      _
    $region10: #{transformer_forward.7} parent=5 // pred_check_branch
      %318 = sbr.rel (%p315) target = $region12
    $region11: #{transformer_forward.7} parent=5 // pred_region
      %s319 = ssub.s32 %s17, 1
      // Predicated region
      $region13: #{transformer_forward.7} parent=11 // pred_check
        %p320 = pneg %p104
      $region14: #{transformer_forward.7} parent=11 // pred_check_branch
        %322 = sbr.rel (%p320) target = $region16
      $region15: #{transformer_forward.7} parent=11 // pred_region
        _
      $region16: #{transformer_forward.7} parent=11 // pred_fallthru
        _
      // Predicated region
      $region17: #{transformer_forward.7} parent=11 // pred_check
        %p323 = pneg %p125
      $region18: #{transformer_forward.7} parent=11 // pred_check_branch
        %325 = sbr.rel (%p323) target = $region20
      $region19: #{transformer_forward.7} parent=11 // pred_region
        _
      $region20: #{transformer_forward.7} parent=11 // pred_fallthru
        _
      // Predicated region
      $region21: #{transformer_forward.7} parent=11 // pred_check
        %p326 = pneg %p146
      $region22: #{transformer_forward.7} parent=11 // pred_check_branch
        %328 = sbr.rel (%p326) target = $region24
      $region23: #{transformer_forward.7} parent=11 // pred_region
        _
      $region24: #{transformer_forward.7} parent=11 // pred_fallthru
        _
      // Predicated region
      $region25: #{transformer_forward.7} parent=11 // pred_check
        %p329 = pneg %p167
      $region26: #{transformer_forward.7} parent=11 // pred_check_branch
        %331 = sbr.rel (%p329) target = $region28
      $region27: #{transformer_forward.7} parent=11 // pred_region
        _
      $region28: #{transformer_forward.7} parent=11 // pred_fallthru
        _
      // Predicated region
      $region29: #{transformer_forward.7} parent=11 // pred_check
        %p332 = pneg %p188
      $region30: #{transformer_forward.7} parent=11 // pred_check_branch
        %334 = sbr.rel (%p332) target = $region32
      $region31: #{transformer_forward.7} parent=11 // pred_region
        _
      $region32: #{transformer_forward.7} parent=11 // pred_fallthru
        _
      // Predicated region
      $region33: #{transformer_forward.7} parent=11 // pred_check
        %p335 = pneg %p209
      $region34: #{transformer_forward.7} parent=11 // pred_check_branch
        %337 = sbr.rel (%p335) target = $region36
      $region35: #{transformer_forward.7} parent=11 // pred_region
        _
      $region36: #{transformer_forward.7} parent=11 // pred_fallthru
        _
      // Predicated region
      $region37: #{transformer_forward.7} parent=11 // pred_check
        %p338 = pneg %p230
      $region38: #{transformer_forward.7} parent=11 // pred_check_branch
        %340 = sbr.rel (%p338) target = $region40
      $region39: #{transformer_forward.7} parent=11 // pred_region
        _
      $region40: #{transformer_forward.7} parent=11 // pred_fallthru
        _
      // Predicated region
      $region41: #{transformer_forward.7} parent=11 // pred_check
        %p341 = pneg %p251
      $region42: #{transformer_forward.7} parent=11 // pred_check_branch
        %343 = sbr.rel (%p341) target = $region44
      $region43: #{transformer_forward.7} parent=11 // pred_region
        _
      $region44: #{transformer_forward.7} parent=11 // pred_fallthru
        _
      // Predicated region
      $region45: #{transformer_forward.7} parent=11 // pred_check
        %p344 = pneg %p277
      $region46: #{transformer_forward.7} parent=11 // pred_check_branch
        %346 = sbr.rel (%p344) target = $region48
      $region47: #{transformer_forward.7} parent=11 // pred_region
        %p347 = scmp.lt.s32.totalorder %s27, 0
        %s348 = scalar_select %p347, %s27, 0
        %s349 = smul.addr %s348, 8
        %s350 = scalar_lea.vmem %s10, %s349
      $region48: #{transformer_forward.7} parent=11 // pred_fallthru
        _
    $region12: #{transformer_forward.7} parent=5 // pred_fallthru
      _
    %p351 = scmp.lt.s32.totalorder %s17, 2
    // Predicated region
    $region49: #{transformer_forward.7} parent=5 // pred_check
      %p352 = pneg %p351
    $region50: #{transformer_forward.7} parent=5 // pred_check_branch
      %354 = sbr.rel (%p352) target = $region52
    $region51: #{transformer_forward.7} parent=5 // pred_region
      // Predicated region
      $region53: #{transformer_forward.7} parent=51 // pred_check
        %p355 = pneg %p51
      $region54: #{transformer_forward.7} parent=51 // pred_check_branch
        %357 = sbr.rel (%p355) target = $region56
      $region55: #{transformer_forward.7} parent=51 // pred_region
        %p358 = scmp.lt.s32.totalorder %s24, 1
        %s359 = scalar_select %p358, %s24, 1
        %p360 = scmp.lt.s32.totalorder %s25, 0
        %s361 = scalar_select %p360, %s25, 0
        %s362 = sadd.s32 %s361, %s359
        %s363 = smul.addr %s362, 4
        %s364 = scalar_lea.vmem %s0, %s363
      $region56: #{transformer_forward.7} parent=51 // pred_fallthru
        _
      // Predicated region
      $region57: #{transformer_forward.7} parent=51 // pred_check
        %p365 = pneg %p77
      $region58: #{transformer_forward.7} parent=51 // pred_check_branch
        %367 = sbr.rel (%p365) target = $region60
      $region59: #{transformer_forward.7} parent=51 // pred_region
        %p368 = scmp.lt.s32.totalorder %s24, 1
        %s369 = scalar_select %p368, %s24, 1
        %s370 = smul.addr %s369, 4
        %s371 = scalar_lea.vmem %s1, %s370
      $region60: #{transformer_forward.7} parent=51 // pred_fallthru
        _
    $region52: #{transformer_forward.7} parent=5 // pred_fallthru
      _
    %p372 = scmp.le.s32.totalorder 1, %s17
    %p373 = scmp.lt.s32.totalorder %s17, 3
    %p374 = pnand %p372, %p373
    %p375 = pneg %p374
    // Predicated region
    $region61: #{transformer_forward.7} parent=5 // pred_check
      _
    $region62: #{transformer_forward.7} parent=5 // pred_check_branch
      %377 = sbr.rel (%p374) target = $region64
    $region63: #{transformer_forward.7} parent=5 // pred_region
      %s378 = ssub.s32 %s17, 1
      %p379 = scmp.lt.s32.totalorder %s26, 1
      %s380 = scalar_select %p379, %s26, 1
      %p381 = scmp.lt.s32.totalorder %s27, 0
      %s382 = scalar_select %p381, %s27, 0
      %s383 = sadd.s32 %s382, %s380
      %s384 = smul.addr %s383, 4
      %s385 = scalar_lea.vmem %s0, %s384
      %p386 = pneg %p57
      %p387 = pneg %p54
      %p388 = scmp.lt.s32.totalorder %s26, 1
      %s389 = scalar_select %p388, %s26, 1
      %s390 = smul.addr %s389, 4
      %s391 = scalar_lea.vmem %s1, %s390
      %p392 = pneg %p83
      %p393 = pneg %p80
      %p394 = pneg %p104
      %p395 = pneg %p101
      %p396 = pneg %p125
      %p397 = pneg %p122
      %p398 = pneg %p146
      %p399 = pneg %p143
      %p400 = pneg %p167
      %p401 = pneg %p164
      %p402 = pneg %p188
      %p403 = pneg %p185
      %p404 = pneg %p209
      %p405 = pneg %p206
      %p406 = pneg %p230
      %p407 = pneg %p227
      %p408 = pneg %p251
      %p409 = pneg %p248
      %p410 = scmp.lt.s32.totalorder %s27, 0
      %s411 = scalar_select %p410, %s27, 0
      %s412 = smul.addr %s411, 8
      %s413 = scalar_lea.vmem %s10, %s412
      %p414 = pneg %p277
      %p415 = pneg %p274
      %p416 = pneg %p305
      %p417 = pneg %p302
      %p418 = scmp.lt.s32.totalorder %s26, 1
      %s419 = scalar_select %p418, %s26, 1
      %p420 = scmp.lt.s32.totalorder %s27, 0
      %s421 = scalar_select %p420, %s27, 0
      %s422 = sadd.s32 %s421, %s419
      %s423 = smul.addr %s422, 4
      %s424 = scalar_lea.vmem %s11, %s423
      %p425 = scmp.lt.s32.totalorder %s26, 1
      %s426 = scalar_select %p425, %s26, 1
      %p427 = scmp.lt.s32.totalorder %s27, 0
      %s428 = scalar_select %p427, %s27, 0
      %s429 = sadd.s32 %s428, %s426
      %s430 = smul.addr %s429, 4
      %s431 = scalar_lea.vmem %s0, %s430
      %p432 = scmp.lt.s32.totalorder %s26, 1
      %s433 = scalar_select %p432, %s26, 1
      %s434 = smul.addr %s433, 4
      %s435 = scalar_lea.vmem %s1, %s434
      %p436 = scmp.lt.s32.totalorder %s27, 0
      %s437 = scalar_select %p436, %s27, 0
      %s438 = smul.addr %s437, 8
      %s439 = scalar_lea.vmem %s10, %s438
      %p440 = scmp.lt.s32.totalorder %s26, 1
      %s441 = scalar_select %p440, %s26, 1
      %p442 = scmp.lt.s32.totalorder %s27, 0
      %s443 = scalar_select %p442, %s27, 0
      %s444 = sadd.s32 %s443, %s441
      %s445 = smul.addr %s444, 4
      %s446 = scalar_lea.vmem %s11, %s445
      %p448 = scmp.eq.s32.totalorder %s27, 0
      // Predicated region
      $region65: #{transformer_forward.7} parent=63 // pred_check
        %p449 = pneg %p448
      $region66: #{transformer_forward.7} parent=63 // pred_check_branch
        %451 = sbr.rel (%p449) target = $region68
      $region67: #{transformer_forward.7} parent=63 // pred_region
        %v452 = vld [vmem:[%s435] sm:$0xf]
        %v453 = vld [vmem:[%s4] sm:$0xf]
        %v454 = vld [vmem:[%s4 + $0x4] sm:$0xf]
        %v455 = vld [vmem:[%s4 + $0x8] sm:$0xf]
        %v456 = vld [vmem:[%s4 + $0xc] sm:$0xf]
        %v457 = vld [vmem:[%s5] sm:$0x1]
        %v459 = vlaneseq
        %v460 = vshrl.u32 %v459, 7
        %v461 = vsub.s32 0, %v460
        %v462 = vrot.slane %v457, %v461
        %v468 = vunpack.c.l.b16 %v453
        %v469 = vunpack.c.l.b16 %v454
        %v470 = vunpack.c.l.b16 %v455
        %v471 = vunpack.c.l.b16 %v456
        %v472 = vpack.c.b16 %v469, %v468
        %v473 = vpack.c.b16 %v471, %v470
        %vm476 = vcmask 261120
        %v478 = vsel %vm476, %v452, 0
        %480 = vmatprep.subr.bf16.mxu0 0
        %481 = vmatpush1.bf16.msra.mxu0 %v472
        %482 = vmatprep.subr.bf16.mxu0 0
        %483 = vmatpush1.bf16.msra.mxu0 %v473
        %484 = vmatprep.subr.bf16.mxu0 0
        %485 = vmatpush1.bf16.msra.mxu0 0
        %486 = vmatprep.subr.bf16.mxu0 0
        %487 = vmatpush1.bf16.msra.mxu0 0
        %488 = vmatprep.subr.bf16.mxu0 0
        %489 = vmatpush1.bf16.msra.mxu0 0
        %490 = vmatprep.subr.bf16.mxu0 0
        %491 = vmatpush1.bf16.msra.mxu0 0
        %492 = vmatprep.subr.bf16.mxu0 0
        %493 = vmatpush1.bf16.msra.mxu0 0
        %494 = vmatprep.subr.bf16.mxu0 0
        %495 = vmatpush1.bf16.msra.mxu0 0
        %496 = vmatprep.subr.bf16.mxu0 0
        %497 = vmatpush1.bf16.msra.mxu0 0
        %498 = vmatprep.subr.bf16.mxu0 0
        %499 = vmatpush1.bf16.msra.mxu0 0
        %500 = vmatprep.subr.bf16.mxu0 0
        %501 = vmatpush1.bf16.msra.mxu0 0
        %502 = vmatprep.subr.bf16.mxu0 0
        %503 = vmatpush1.bf16.msra.mxu0 0
        %504 = vmatprep.subr.bf16.mxu0 0
        %505 = vmatpush1.bf16.msra.mxu0 0
        %506 = vmatprep.subr.bf16.mxu0 0
        %507 = vmatpush1.bf16.msra.mxu0 0
        %508 = vmatprep.subr.bf16.mxu0 0
        %509 = vmatpush1.bf16.msra.mxu0 0
        %510 = vmatprep.subr.bf16.mxu0 0
        %511 = vmatpush1.bf16.msra.mxu0 0
        %512 = vmatprep.mubr.bf16.mxu0 0
        %513 = vmatmul.mubr.bf16.gmra.mrb[0].mxu0 %v478
        %v514 = vpop.f32.mrb[0].mxu0
        %v515 = vadd.f32 %v462, %v514
        %v516 = vpop.f32.mrb[0].mxu0
        %v517 = vpop.f32.mrb[0].mxu0
        %v518 = vpop.f32.mrb[0].mxu0
        %519 = vdwg.mxu0
        %v520 = vpack.c.bf16 %v515, %v515
        %vm521 = vcmask 60416
        %522 = vst.msk [vmem:[#allocation2] sm:$0xf] %vm521, %v520
        %v524 = vunpack.c.l.b16 %v520
        %v525 = vpack.c.b16 %v524, %v524
        %526 = vrot.lane.b32.xlu0 %v525, 96
        %v527 = vpop.permute.xlu0 %526
        %529 = vst.msk [vmem:[#allocation3] sm:$0xf] %vm521, %v527
        %530 = vrot.lane.b32.xlu0 %v525, 120
        %v531 = vpop.permute.xlu0 %530
        %s533 = scalar_lea.vmem [#allocation2], 4
        %534 = vst.msk [vmem:[%s533] sm:$0xf] %vm521, %v531
        %535 = vrot.lane.b32.xlu0 %v525, 88
        %v536 = vpop.permute.xlu0 %535
        %s538 = scalar_lea.vmem [#allocation3], 4
        %539 = vst.msk [vmem:[%s538] sm:$0xf] %vm521, %v536
        %540 = vrot.lane.b32.xlu0 %v525, 112
        %v541 = vpop.permute.xlu0 %540
        %s543 = scalar_lea.vmem [#allocation2], 8
        %544 = vst.msk [vmem:[%s543] sm:$0xf] %vm521, %v541
        %545 = vrot.lane.b32.xlu0 %v525, 80
        %v546 = vpop.permute.xlu0 %545
        %s548 = scalar_lea.vmem [#allocation3], 8
        %549 = vst.msk [vmem:[%s548] sm:$0xf] %vm521, %v546
        %550 = vrot.lane.b32.xlu0 %v525, 104
        %v551 = vpop.permute.xlu0 %550
        %s553 = scalar_lea.vmem [#allocation2], 12
        %554 = vst.msk [vmem:[%s553] sm:$0xf] %vm521, %v551
        %555 = vrot.lane.b32.xlu0 %v525, 72
        %v556 = vpop.permute.xlu0 %555
        %s558 = scalar_lea.vmem [#allocation3], 12
        %559 = vst.msk [vmem:[%s558] sm:$0xf] %vm521, %v556
      $region68: #{transformer_forward.7} parent=63 // pred_fallthru
        _
      %v560 = vld [vmem:[%s431] sm:$0xf]
      %v561 = vunpack.c.l.bf16 %v560
      %v562 = vld [vmem:[%s2] sm:$0xf]
      %v563 = vld [vmem:[%s2 + $0x4] sm:$0xf]
      %v564 = vld [vmem:[%s2 + $0x8] sm:$0xf]
      %v565 = vld [vmem:[%s2 + $0xc] sm:$0xf]
      %v566 = vld [vmem:[%s3] sm:$0x1]
      %v568 = vlaneseq
      %v569 = vshrl.u32 %v568, 7
      %v570 = vsub.s32 0, %v569
      %v571 = vrot.slane %v566, %v570
      %v577 = vunpack.c.l.b16 %v562
      %v578 = vunpack.c.l.b16 %v563
      %v579 = vunpack.c.l.b16 %v564
      %v580 = vunpack.c.l.b16 %v565
      %v581 = vpack.c.b16 %v578, %v577
      %v582 = vpack.c.b16 %v580, %v579
      %vm585 = vcmask 261120
      %v587 = vsel %vm585, %v560, 0
      %589 = vmatprep.subr.bf16.mxu0 0
      %590 = vmatpush1.bf16.msra.mxu0 %v581
      %591 = vmatprep.subr.bf16.mxu0 0
      %592 = vmatpush1.bf16.msra.mxu0 %v582
      %593 = vmatprep.subr.bf16.mxu0 0
      %594 = vmatpush1.bf16.msra.mxu0 0
      %595 = vmatprep.subr.bf16.mxu0 0
      %596 = vmatpush1.bf16.msra.mxu0 0
      %597 = vmatprep.subr.bf16.mxu0 0
      %598 = vmatpush1.bf16.msra.mxu0 0
      %599 = vmatprep.subr.bf16.mxu0 0
      %600 = vmatpush1.bf16.msra.mxu0 0
      %601 = vmatprep.subr.bf16.mxu0 0
      %602 = vmatpush1.bf16.msra.mxu0 0
      %603 = vmatprep.subr.bf16.mxu0 0
      %604 = vmatpush1.bf16.msra.mxu0 0
      %605 = vmatprep.subr.bf16.mxu0 0
      %606 = vmatpush1.bf16.msra.mxu0 0
      %607 = vmatprep.subr.bf16.mxu0 0
      %608 = vmatpush1.bf16.msra.mxu0 0
      %609 = vmatprep.subr.bf16.mxu0 0
      %610 = vmatpush1.bf16.msra.mxu0 0
      %611 = vmatprep.subr.bf16.mxu0 0
      %612 = vmatpush1.bf16.msra.mxu0 0
      %613 = vmatprep.subr.bf16.mxu0 0
      %614 = vmatpush1.bf16.msra.mxu0 0
      %615 = vmatprep.subr.bf16.mxu0 0
      %616 = vmatpush1.bf16.msra.mxu0 0
      %617 = vmatprep.subr.bf16.mxu0 0
      %618 = vmatpush1.bf16.msra.mxu0 0
      %619 = vmatprep.subr.bf16.mxu0 0
      %620 = vmatpush1.bf16.msra.mxu0 0
      %621 = vmatprep.mubr.bf16.mxu0 0
      %622 = vmatmul.mubr.bf16.gmra.mrb[0].mxu0 %v587
      %v623 = vpop.f32.mrb[0].mxu0
      %v624 = vadd.f32 %v571, %v623
      %v625 = vpop.f32.mrb[0].mxu0
      %v626 = vpop.f32.mrb[0].mxu0
      %v627 = vpop.f32.mrb[0].mxu0
      %628 = vdwg.mxu0
      %v629 = vld [vmem:[%s439] sm:$0xff]
      %v630 = vpack.c.bf16 %v624, %v624
      %v631 = vld [vmem:[#allocation2] sm:$0xf]
      %vm632 = vcmask 64512
      %v634 = vsel %vm632, %v630, 0
      %v637 = vsel %vm632, %v631, 0
      %639 = vmatprep.subr.bf16.mxu0 0
      %640 = vmatpush1.bf16.xpose.msra.mxu0 %v637
      %641 = vmatprep.subr.bf16.mxu0 0
      %642 = vmatpush1.bf16.xpose.msra.mxu0 0
      %643 = vmatprep.subr.bf16.mxu0 0
      %644 = vmatpush1.bf16.xpose.msra.mxu0 0
      %645 = vmatprep.subr.bf16.mxu0 0
      %646 = vmatpush1.bf16.xpose.msra.mxu0 0
      %647 = vmatprep.subr.bf16.mxu0 0
      %648 = vmatpush1.bf16.xpose.msra.mxu0 0
      %649 = vmatprep.subr.bf16.mxu0 0
      %650 = vmatpush1.bf16.xpose.msra.mxu0 0
      %651 = vmatprep.subr.bf16.mxu0 0
      %652 = vmatpush1.bf16.xpose.msra.mxu0 0
      %653 = vmatprep.subr.bf16.mxu0 0
      %654 = vmatpush1.bf16.xpose.msra.mxu0 0
      %655 = vmatprep.subr.bf16.mxu0 0
      %656 = vmatpush1.bf16.xpose.msra.mxu0 0
      %657 = vmatprep.subr.bf16.mxu0 0
      %658 = vmatpush1.bf16.xpose.msra.mxu0 0
      %659 = vmatprep.subr.bf16.mxu0 0
      %660 = vmatpush1.bf16.xpose.msra.mxu0 0
      %661 = vmatprep.subr.bf16.mxu0 0
      %662 = vmatpush1.bf16.xpose.msra.mxu0 0
      %663 = vmatprep.subr.bf16.mxu0 0
      %664 = vmatpush1.bf16.xpose.msra.mxu0 0
      %665 = vmatprep.subr.bf16.mxu0 0
      %666 = vmatpush1.bf16.xpose.msra.mxu0 0
      %667 = vmatprep.subr.bf16.mxu0 0
      %668 = vmatpush1.bf16.xpose.msra.mxu0 0
      %669 = vmatprep.subr.bf16.mxu0 0
      %670 = vmatpush1.bf16.xpose.msra.mxu0 0
      %671 = vmatprep.mubr.bf16.mxu0 0
      %672 = vmatmul.mubr.bf16.gmra.mrb[0].mxu0 %v634
      %v673 = vpop.f32.mrb[0].mxu0
      %v674 = vadd.f32 0.0, %v673
      %v675 = vpop.f32.mrb[0].mxu0
      %v676 = vpop.f32.mrb[0].mxu0
      %v677 = vpop.f32.mrb[0].mxu0
      %678 = vdwg.mxu0
      %v679 = vmul.f32 %v674, 0.35355338
      %v680 = vadd.f32 %v679, %v629
      %v681 = vsel %vm632, %v680, -inf
      %682 = vmax.xlane.f32.xlu0 %v681
      %v683 = vpop.xlane.xlu0 %682
      %v684 = vsub.f32 %v680, %v683
      %v685 = vmul.f32 %v684, 1.442695
      %v686 = vpow.pop %v685
      %v687 = vsel %vm632, %v686, 0.0
      %688 = vadd.xlane.f32.xlu0 %v687
      %v689 = vpop.xlane.xlu0 %688
      %v690 = vrcp.pop %v689
      %v691 = vmul.f32 %v686, %v690
      %v692 = vpack.c.bf16 %v691, %v691
      %v693 = vld [vmem:[#allocation3] sm:$0xf]
      %v695 = vsel %vm632, %v692, 0
      %vm697 = vcmask 1043456
      %v699 = vsel %vm697, %v693, 0
      %701 = vmatprep.subr.bf16.mxu0 0
      %702 = vmatpush1.bf16.msra.mxu0 %v699
      %703 = vmatprep.subr.bf16.mxu0 0
      %704 = vmatpush1.bf16.msra.mxu0 0
      %705 = vmatprep.subr.bf16.mxu0 0
      %706 = vmatpush1.bf16.msra.mxu0 0
      %707 = vmatprep.subr.bf16.mxu0 0
      %708 = vmatpush1.bf16.msra.mxu0 0
      %709 = vmatprep.subr.bf16.mxu0 0
      %710 = vmatpush1.bf16.msra.mxu0 0
      %711 = vmatprep.subr.bf16.mxu0 0
      %712 = vmatpush1.bf16.msra.mxu0 0
      %713 = vmatprep.subr.bf16.mxu0 0
      %714 = vmatpush1.bf16.msra.mxu0 0
      %715 = vmatprep.subr.bf16.mxu0 0
      %716 = vmatpush1.bf16.msra.mxu0 0
      %717 = vmatprep.subr.bf16.mxu0 0
      %718 = vmatpush1.bf16.msra.mxu0 0
      %719 = vmatprep.subr.bf16.mxu0 0
      %720 = vmatpush1.bf16.msra.mxu0 0
      %721 = vmatprep.subr.bf16.mxu0 0
      %722 = vmatpush1.bf16.msra.mxu0 0
      %723 = vmatprep.subr.bf16.mxu0 0
      %724 = vmatpush1.bf16.msra.mxu0 0
      %725 = vmatprep.subr.bf16.mxu0 0
      %726 = vmatpush1.bf16.msra.mxu0 0
      %727 = vmatprep.subr.bf16.mxu0 0
      %728 = vmatpush1.bf16.msra.mxu0 0
      %729 = vmatprep.subr.bf16.mxu0 0
      %730 = vmatpush1.bf16.msra.mxu0 0
      %731 = vmatprep.subr.bf16.mxu0 0
      %732 = vmatpush1.bf16.msra.mxu0 0
      %733 = vmatprep.mubr.bf16.mxu0 0
      %734 = vmatmul.mubr.bf16.gmra.mrb[0].mxu0 %v695
      %v735 = vpop.f32.mrb[0].mxu0
      %v736 = vadd.f32 0.0, %v735
      %v737 = vpop.f32.mrb[0].mxu0
      %v738 = vpop.f32.mrb[0].mxu0
      %v739 = vpop.f32.mrb[0].mxu0
      %740 = vdwg.mxu0
      %741 = vst.msk [vmem:[#allocation4] sm:$0xff] %vm632, %v736
      %s742 = scalar_lea.vmem [#allocation2], 4
      %v743 = vld [vmem:[%s742] sm:$0xf]
      %745 = vrot.lane.b32.xlu0 %v630, 120
      %v746 = vpop.permute.xlu0 %745
      %v748 = vsel %vm632, %v746, 0
      %v751 = vsel %vm632, %v743, 0
      %753 = vmatprep.subr.bf16.mxu0 0
      %754 = vmatpush1.bf16.xpose.msra.mxu0 %v751
      %755 = vmatprep.subr.bf16.mxu0 0
      %756 = vmatpush1.bf16.xpose.msra.mxu0 0
      %757 = vmatprep.subr.bf16.mxu0 0
      %758 = vmatpush1.bf16.xpose.msra.mxu0 0
      %759 = vmatprep.subr.bf16.mxu0 0
      %760 = vmatpush1.bf16.xpose.msra.mxu0 0
      %761 = vmatprep.subr.bf16.mxu0 0
      %762 = vmatpush1.bf16.xpose.msra.mxu0 0
      %763 = vmatprep.subr.bf16.mxu0 0
      %764 = vmatpush1.bf16.xpose.msra.mxu0 0
      %765 = vmatprep.subr.bf16.mxu0 0
      %766 = vmatpush1.bf16.xpose.msra.mxu0 0
      %767 = vmatprep.subr.bf16.mxu0 0
      %768 = vmatpush1.bf16.xpose.msra.mxu0 0
      %769 = vmatprep.subr.bf16.mxu0 0
      %770 = vmatpush1.bf16.xpose.msra.mxu0 0
      %771 = vmatprep.subr.bf16.mxu0 0
      %772 = vmatpush1.bf16.xpose.msra.mxu0 0
      %773 = vmatprep.subr.bf16.mxu0 0
      %774 = vmatpush1.bf16.xpose.msra.mxu0 0
      %775 = vmatprep.subr.bf16.mxu0 0
      %776 = vmatpush1.bf16.xpose.msra.mxu0 0
      %777 = vmatprep.subr.bf16.mxu0 0
      %778 = vmatpush1.bf16.xpose.msra.mxu0 0
      %779 = vmatprep.subr.bf16.mxu0 0
      %780 = vmatpush1.bf16.xpose.msra.mxu0 0
      %781 = vmatprep.subr.bf16.mxu0 0
      %782 = vmatpush1.bf16.xpose.msra.mxu0 0
      %783 = vmatprep.subr.bf16.mxu0 0
      %784 = vmatpush1.bf16.xpose.msra.mxu0 0
      %785 = vmatprep.mubr.bf16.mxu0 0
      %786 = vmatmul.mubr.bf16.gmra.mrb[0].mxu0 %v748
      %v787 = vpop.f32.mrb[0].mxu0
      %v788 = vadd.f32 0.0, %v787
      %v789 = vpop.f32.mrb[0].mxu0
      %v790 = vpop.f32.mrb[0].mxu0
      %v791 = vpop.f32.mrb[0].mxu0
      %792 = vdwg.mxu0
      %v793 = vmul.f32 %v788, 0.35355338
      %v794 = vadd.f32 %v793, %v629
      %v795 = vsel %vm632, %v794, -inf
      %796 = vmax.xlane.f32.xlu0 %v795
      %v797 = vpop.xlane.xlu0 %796
      %v798 = vsub.f32 %v794, %v797
      %v799 = vmul.f32 %v798, 1.442695
      %v800 = vpow.pop %v799
      %v801 = vsel %vm632, %v800, 0.0
      %802 = vadd.xlane.f32.xlu0 %v801
      %v803 = vpop.xlane.xlu0 %802
      %v804 = vrcp.pop %v803
      %v805 = vmul.f32 %v800, %v804
      %v806 = vpack.c.bf16 %v805, %v805
      %s807 = scalar_lea.vmem [#allocation3], 4
      %v808 = vld [vmem:[%s807] sm:$0xf]
      %v810 = vsel %vm632, %v806, 0
      %v813 = vsel %vm697, %v808, 0
      %815 = vmatprep.subr.bf16.mxu0 0
      %816 = vmatpush1.bf16.msra.mxu0 %v813
      %817 = vmatprep.subr.bf16.mxu0 0
      %818 = vmatpush1.bf16.msra.mxu0 0
      %819 = vmatprep.subr.bf16.mxu0 0
      %820 = vmatpush1.bf16.msra.mxu0 0
      %821 = vmatprep.subr.bf16.mxu0 0
      %822 = vmatpush1.bf16.msra.mxu0 0
      %823 = vmatprep.subr.bf16.mxu0 0
      %824 = vmatpush1.bf16.msra.mxu0 0
      %825 = vmatprep.subr.bf16.mxu0 0
      %826 = vmatpush1.bf16.msra.mxu0 0
      %827 = vmatprep.subr.bf16.mxu0 0
      %828 = vmatpush1.bf16.msra.mxu0 0
      %829 = vmatprep.subr.bf16.mxu0 0
      %830 = vmatpush1.bf16.msra.mxu0 0
      %831 = vmatprep.subr.bf16.mxu0 0
      %832 = vmatpush1.bf16.msra.mxu0 0
      %833 = vmatprep.subr.bf16.mxu0 0
      %834 = vmatpush1.bf16.msra.mxu0 0
      %835 = vmatprep.subr.bf16.mxu0 0
      %836 = vmatpush1.bf16.msra.mxu0 0
      %837 = vmatprep.subr.bf16.mxu0 0
      %838 = vmatpush1.bf16.msra.mxu0 0
      %839 = vmatprep.subr.bf16.mxu0 0
      %840 = vmatpush1.bf16.msra.mxu0 0
      %841 = vmatprep.subr.bf16.mxu0 0
      %842 = vmatpush1.bf16.msra.mxu0 0
      %843 = vmatprep.subr.bf16.mxu0 0
      %844 = vmatpush1.bf16.msra.mxu0 0
      %845 = vmatprep.subr.bf16.mxu0 0
      %846 = vmatpush1.bf16.msra.mxu0 0
      %847 = vmatprep.mubr.bf16.mxu0 0
      %848 = vmatmul.mubr.bf16.gmra.mrb[0].mxu0 %v810
      %v849 = vpop.f32.mrb[0].mxu0
      %v850 = vadd.f32 0.0, %v849
      %v851 = vpop.f32.mrb[0].mxu0
      %v852 = vpop.f32.mrb[0].mxu0
      %v853 = vpop.f32.mrb[0].mxu0
      %854 = vdwg.mxu0
      %856 = vrot.lane.b32.xlu0 %v850, 8
      %v857 = vpop.permute.xlu0 %856
      %vm859 = vcmask 130112
      %860 = vst.msk [vmem:[#allocation4] sm:$0xff] %vm859, %v857
      %s861 = scalar_lea.vmem [#allocation2], 8
      %v862 = vld [vmem:[%s861] sm:$0xf]
      %863 = vrot.lane.b32.xlu0 %v630, 112
      %v864 = vpop.permute.xlu0 %863
      %v866 = vsel %vm632, %v864, 0
      %v869 = vsel %vm632, %v862, 0
      %871 = vmatprep.subr.bf16.mxu0 0
      %872 = vmatpush1.bf16.xpose.msra.mxu0 %v869
      %873 = vmatprep.subr.bf16.mxu0 0
      %874 = vmatpush1.bf16.xpose.msra.mxu0 0
      %875 = vmatprep.subr.bf16.mxu0 0
      %876 = vmatpush1.bf16.xpose.msra.mxu0 0
      %877 = vmatprep.subr.bf16.mxu0 0
      %878 = vmatpush1.bf16.xpose.msra.mxu0 0
      %879 = vmatprep.subr.bf16.mxu0 0
      %880 = vmatpush1.bf16.xpose.msra.mxu0 0
      %881 = vmatprep.subr.bf16.mxu0 0
      %882 = vmatpush1.bf16.xpose.msra.mxu0 0
      %883 = vmatprep.subr.bf16.mxu0 0
      %884 = vmatpush1.bf16.xpose.msra.mxu0 0
      %885 = vmatprep.subr.bf16.mxu0 0
      %886 = vmatpush1.bf16.xpose.msra.mxu0 0
      %887 = vmatprep.subr.bf16.mxu0 0
      %888 = vmatpush1.bf16.xpose.msra.mxu0 0
      %889 = vmatprep.subr.bf16.mxu0 0
      %890 = vmatpush1.bf16.xpose.msra.mxu0 0
      %891 = vmatprep.subr.bf16.mxu0 0
      %892 = vmatpush1.bf16.xpose.msra.mxu0 0
      %893 = vmatprep.subr.bf16.mxu0 0
      %894 = vmatpush1.bf16.xpose.msra.mxu0 0
      %895 = vmatprep.subr.bf16.mxu0 0
      %896 = vmatpush1.bf16.xpose.msra.mxu0 0
      %897 = vmatprep.subr.bf16.mxu0 0
      %898 = vmatpush1.bf16.xpose.msra.mxu0 0
      %899 = vmatprep.subr.bf16.mxu0 0
      %900 = vmatpush1.bf16.xpose.msra.mxu0 0
      %901 = vmatprep.subr.bf16.mxu0 0
      %902 = vmatpush1.bf16.xpose.msra.mxu0 0
      %903 = vmatprep.mubr.bf16.mxu0 0
      %904 = vmatmul.mubr.bf16.gmra.mrb[0].mxu0 %v866
      %v905 = vpop.f32.mrb[0].mxu0
      %v906 = vadd.f32 0.0, %v905
      %v907 = vpop.f32.mrb[0].mxu0
      %v908 = vpop.f32.mrb[0].mxu0
      %v909 = vpop.f32.mrb[0].mxu0
      %910 = vdwg.mxu0
      %v911 = vmul.f32 %v906, 0.35355338
      %v912 = vadd.f32 %v911, %v629
      %v913 = vsel %vm632, %v912, -inf
      %914 = vmax.xlane.f32.xlu0 %v913
      %v915 = vpop.xlane.xlu0 %914
      %v916 = vsub.f32 %v912, %v915
      %v917 = vmul.f32 %v916, 1.442695
      %v918 = vpow.pop %v917
      %v919 = vsel %vm632, %v918, 0.0
      %920 = vadd.xlane.f32.xlu0 %v919
      %v921 = vpop.xlane.xlu0 %920
      %v922 = vrcp.pop %v921
      %v923 = vmul.f32 %v918, %v922
      %v924 = vpack.c.bf16 %v923, %v923
      %s925 = scalar_lea.vmem [#allocation3], 8
      %v926 = vld [vmem:[%s925] sm:$0xf]
      %v928 = vsel %vm632, %v924, 0
      %v931 = vsel %vm697, %v926, 0
      %933 = vmatprep.subr.bf16.mxu0 0
      %934 = vmatpush1.bf16.msra.mxu0 %v931
      %935 = vmatprep.subr.bf16.mxu0 0
      %936 = vmatpush1.bf16.msra.mxu0 0
      %937 = vmatprep.subr.bf16.mxu0 0
      %938 = vmatpush1.bf16.msra.mxu0 0
      %939 = vmatprep.subr.bf16.mxu0 0
      %940 = vmatpush1.bf16.msra.mxu0 0
      %941 = vmatprep.subr.bf16.mxu0 0
      %942 = vmatpush1.bf16.msra.mxu0 0
      %943 = vmatprep.subr.bf16.mxu0 0
      %944 = vmatpush1.bf16.msra.mxu0 0
      %945 = vmatprep.subr.bf16.mxu0 0
      %946 = vmatpush1.bf16.msra.mxu0 0
      %947 = vmatprep.subr.bf16.mxu0 0
      %948 = vmatpush1.bf16.msra.mxu0 0
      %949 = vmatprep.subr.bf16.mxu0 0
      %950 = vmatpush1.bf16.msra.mxu0 0
      %951 = vmatprep.subr.bf16.mxu0 0
      %952 = vmatpush1.bf16.msra.mxu0 0
      %953 = vmatprep.subr.bf16.mxu0 0
      %954 = vmatpush1.bf16.msra.mxu0 0
      %955 = vmatprep.subr.bf16.mxu0 0
      %956 = vmatpush1.bf16.msra.mxu0 0
      %957 = vmatprep.subr.bf16.mxu0 0
      %958 = vmatpush1.bf16.msra.mxu0 0
      %959 = vmatprep.subr.bf16.mxu0 0
      %960 = vmatpush1.bf16.msra.mxu0 0
      %961 = vmatprep.subr.bf16.mxu0 0
      %962 = vmatpush1.bf16.msra.mxu0 0
      %963 = vmatprep.subr.bf16.mxu0 0
      %964 = vmatpush1.bf16.msra.mxu0 0
      %965 = vmatprep.mubr.bf16.mxu0 0
      %966 = vmatmul.mubr.bf16.gmra.mrb[0].mxu0 %v928
      %v967 = vpop.f32.mrb[0].mxu0
      %v968 = vadd.f32 0.0, %v967
      %v969 = vpop.f32.mrb[0].mxu0
      %v970 = vpop.f32.mrb[0].mxu0
      %v971 = vpop.f32.mrb[0].mxu0
      %972 = vdwg.mxu0
      %974 = vrot.lane.b32.xlu0 %v968, 16
      %v975 = vpop.permute.xlu0 %974
      %vm977 = vcmask 195712
      %978 = vst.msk [vmem:[#allocation4] sm:$0xff] %vm977, %v975
      %s979 = scalar_lea.vmem [#allocation2], 12
      %v980 = vld [vmem:[%s979] sm:$0xf]
      %981 = vrot.lane.b32.xlu0 %v630, 104
      %v982 = vpop.permute.xlu0 %981
      %v984 = vsel %vm632, %v982, 0
      %v987 = vsel %vm632, %v980, 0
      %989 = vmatprep.subr.bf16.mxu0 0
      %990 = vmatpush1.bf16.xpose.msra.mxu0 %v987
      %991 = vmatprep.subr.bf16.mxu0 0
      %992 = vmatpush1.bf16.xpose.msra.mxu0 0
      %993 = vmatprep.subr.bf16.mxu0 0
      %994 = vmatpush1.bf16.xpose.msra.mxu0 0
      %995 = vmatprep.subr.bf16.mxu0 0
      %996 = vmatpush1.bf16.xpose.msra.mxu0 0
      %997 = vmatprep.subr.bf16.mxu0 0
      %998 = vmatpush1.bf16.xpose.msra.mxu0 0
      %999 = vmatprep.subr.bf16.mxu0 0
      %1000 = vmatpush1.bf16.xpose.msra.mxu0 0
      %1001 = vmatprep.subr.bf16.mxu0 0
      %1002 = vmatpush1.bf16.xpose.msra.mxu0 0
      %1003 = vmatprep.subr.bf16.mxu0 0
      %1004 = vmatpush1.bf16.xpose.msra.mxu0 0
      %1005 = vmatprep.subr.bf16.mxu0 0
      %1006 = vmatpush1.bf16.xpose.msra.mxu0 0
      %1007 = vmatprep.subr.bf16.mxu0 0
      %1008 = vmatpush1.bf16.xpose.msra.mxu0 0
      %1009 = vmatprep.subr.bf16.mxu0 0
      %1010 = vmatpush1.bf16.xpose.msra.mxu0 0
      %1011 = vmatprep.subr.bf16.mxu0 0
      %1012 = vmatpush1.bf16.xpose.msra.mxu0 0
      %1013 = vmatprep.subr.bf16.mxu0 0
      %1014 = vmatpush1.bf16.xpose.msra.mxu0 0
      %1015 = vmatprep.subr.bf16.mxu0 0
      %1016 = vmatpush1.bf16.xpose.msra.mxu0 0
      %1017 = vmatprep.subr.bf16.mxu0 0
      %1018 = vmatpush1.bf16.xpose.msra.mxu0 0
      %1019 = vmatprep.subr.bf16.mxu0 0
      %1020 = vmatpush1.bf16.xpose.msra.mxu0 0
      %1021 = vmatprep.mubr.bf16.mxu0 0
      %1022 = vmatmul.mubr.bf16.gmra.mrb[0].mxu0 %v984
      %v1023 = vpop.f32.mrb[0].mxu0
      %v1024 = vadd.f32 0.0, %v1023
      %v1025 = vpop.f32.mrb[0].mxu0
      %v1026 = vpop.f32.mrb[0].mxu0
      %v1027 = vpop.f32.mrb[0].mxu0
      %1028 = vdwg.mxu0
      %v1029 = vmul.f32 %v1024, 0.35355338
      %v1030 = vadd.f32 %v1029, %v629
      %v1031 = vsel %vm632, %v1030, -inf
      %1032 = vmax.xlane.f32.xlu0 %v1031
      %v1033 = vpop.xlane.xlu0 %1032
      %v1034 = vsub.f32 %v1030, %v1033
      %v1035 = vmul.f32 %v1034, 1.442695
      %v1036 = vpow.pop %v1035
      %v1037 = vsel %vm632, %v1036, 0.0
      %1038 = vadd.xlane.f32.xlu0 %v1037
      %v1039 = vpop.xlane.xlu0 %1038
      %v1040 = vrcp.pop %v1039
      %v1041 = vmul.f32 %v1036, %v1040
      %v1042 = vpack.c.bf16 %v1041, %v1041
      %s1043 = scalar_lea.vmem [#allocation3], 12
      %v1044 = vld [vmem:[%s1043] sm:$0xf]
      %v1046 = vsel %vm632, %v1042, 0
      %v1049 = vsel %vm697, %v1044, 0
      %1051 = vmatprep.subr.bf16.mxu0 0
      %1052 = vmatpush1.bf16.msra.mxu0 %v1049
      %1053 = vmatprep.subr.bf16.mxu0 0
      %1054 = vmatpush1.bf16.msra.mxu0 0
      %1055 = vmatprep.subr.bf16.mxu0 0
      %1056 = vmatpush1.bf16.msra.mxu0 0
      %1057 = vmatprep.subr.bf16.mxu0 0
      %1058 = vmatpush1.bf16.msra.mxu0 0
      %1059 = vmatprep.subr.bf16.mxu0 0
      %1060 = vmatpush1.bf16.msra.mxu0 0
      %1061 = vmatprep.subr.bf16.mxu0 0
      %1062 = vmatpush1.bf16.msra.mxu0 0
      %1063 = vmatprep.subr.bf16.mxu0 0
      %1064 = vmatpush1.bf16.msra.mxu0 0
      %1065 = vmatprep.subr.bf16.mxu0 0
      %1066 = vmatpush1.bf16.msra.mxu0 0
      %1067 = vmatprep.subr.bf16.mxu0 0
      %1068 = vmatpush1.bf16.msra.mxu0 0
      %1069 = vmatprep.subr.bf16.mxu0 0
      %1070 = vmatpush1.bf16.msra.mxu0 0
      %1071 = vmatprep.subr.bf16.mxu0 0
      %1072 = vmatpush1.bf16.msra.mxu0 0
      %1073 = vmatprep.subr.bf16.mxu0 0
      %1074 = vmatpush1.bf16.msra.mxu0 0
      %1075 = vmatprep.subr.bf16.mxu0 0
      %1076 = vmatpush1.bf16.msra.mxu0 0
      %1077 = vmatprep.subr.bf16.mxu0 0
      %1078 = vmatpush1.bf16.msra.mxu0 0
      %1079 = vmatprep.subr.bf16.mxu0 0
      %1080 = vmatpush1.bf16.msra.mxu0 0
      %1081 = vmatprep.subr.bf16.mxu0 0
      %1082 = vmatpush1.bf16.msra.mxu0 0
      %1083 = vmatprep.mubr.bf16.mxu0 0
      %1084 = vmatmul.mubr.bf16.gmra.mrb[0].mxu0 %v1046
      %v1085 = vpop.f32.mrb[0].mxu0
      %v1086 = vadd.f32 0.0, %v1085
      %v1087 = vpop.f32.mrb[0].mxu0
      %v1088 = vpop.f32.mrb[0].mxu0
      %v1089 = vpop.f32.mrb[0].mxu0
      %1090 = vdwg.mxu0
      %1092 = vrot.lane.b32.xlu0 %v1086, 24
      %v1093 = vpop.permute.xlu0 %1092
      %vm1095 = vcmask 261312
      %1096 = vst.msk [vmem:[#allocation4] sm:$0xff] %vm1095, %v1093
      %v1097 = vld [vmem:[#allocation4] sm:$0xff]
      %v1098 = vpack.c.bf16 %v1097, %v1097
      %v1099 = vld [vmem:[%s6] sm:$0xf]
      %v1100 = vld [vmem:[%s6 + $0x4] sm:$0xf]
      %v1101 = vld [vmem:[%s6 + $0x8] sm:$0xf]
      %v1102 = vld [vmem:[%s6 + $0xc] sm:$0xf]
      %v1103 = vld [vmem:[%s7] sm:$0x1]
      %v1105 = vlaneseq
      %v1106 = vshrl.u32 %v1105, 7
      %v1107 = vsub.s32 0, %v1106
      %v1108 = vrot.slane %v1103, %v1107
      %v1114 = vunpack.c.l.b16 %v1099
      %v1115 = vunpack.c.l.b16 %v1100
      %v1116 = vunpack.c.l.b16 %v1101
      %v1117 = vunpack.c.l.b16 %v1102
      %v1118 = vpack.c.b16 %v1115, %v1114
      %v1119 = vpack.c.b16 %v1117, %v1116
      %v1123 = vsel %vm585, %v1098, 0
      %1125 = vmatprep.subr.bf16.mxu0 0
      %1126 = vmatpush1.bf16.msra.mxu0 %v1118
      %1127 = vmatprep.subr.bf16.mxu0 0
      %1128 = vmatpush1.bf16.msra.mxu0 %v1119
      %1129 = vmatprep.subr.bf16.mxu0 0
      %1130 = vmatpush1.bf16.msra.mxu0 0
      %1131 = vmatprep.subr.bf16.mxu0 0
      %1132 = vmatpush1.bf16.msra.mxu0 0
      %1133 = vmatprep.subr.bf16.mxu0 0
      %1134 = vmatpush1.bf16.msra.mxu0 0
      %1135 = vmatprep.subr.bf16.mxu0 0
      %1136 = vmatpush1.bf16.msra.mxu0 0
      %1137 = vmatprep.subr.bf16.mxu0 0
      %1138 = vmatpush1.bf16.msra.mxu0 0
      %1139 = vmatprep.subr.bf16.mxu0 0
      %1140 = vmatpush1.bf16.msra.mxu0 0
      %1141 = vmatprep.subr.bf16.mxu0 0
      %1142 = vmatpush1.bf16.msra.mxu0 0
      %1143 = vmatprep.subr.bf16.mxu0 0
      %1144 = vmatpush1.bf16.msra.mxu0 0
      %1145 = vmatprep.subr.bf16.mxu0 0
      %1146 = vmatpush1.bf16.msra.mxu0 0
      %1147 = vmatprep.subr.bf16.mxu0 0
      %1148 = vmatpush1.bf16.msra.mxu0 0
      %1149 = vmatprep.subr.bf16.mxu0 0
      %1150 = vmatpush1.bf16.msra.mxu0 0
      %1151 = vmatprep.subr.bf16.mxu0 0
      %1152 = vmatpush1.bf16.msra.mxu0 0
      %1153 = vmatprep.subr.bf16.mxu0 0
      %1154 = vmatpush1.bf16.msra.mxu0 0
      %1155 = vmatprep.subr.bf16.mxu0 0
      %1156 = vmatpush1.bf16.msra.mxu0 0
      %1157 = vmatprep.mubr.bf16.mxu0 0
      %1158 = vmatmul.mubr.bf16.gmra.mrb[0].mxu0 %v1123
      %v1159 = vpop.f32.mrb[0].mxu0
      %v1160 = vadd.f32 %v1108, %v1159
      %v1161 = vpop.f32.mrb[0].mxu0
      %v1162 = vpop.f32.mrb[0].mxu0
      %v1163 = vpop.f32.mrb[0].mxu0
      %1164 = vdwg.mxu0
      %v1165 = vadd.f32 %v561, %v1160
      %v1166 = vsel %vm585, %v1165, 0.0
      %1167 = vadd.xlane.f32.xlu0 %v1166
      %v1168 = vpop.xlane.xlu0 %1167
      %v1169 = vrcp.pop 32.0
      %v1170 = vmul.f32 %v1168, %v1169
      %v1171 = vsub.f32 %v1165, %v1170
      %v1172 = vmul.f32 %v1171, %v1171
      %v1173 = vsel %vm585, %v1172, 0.0
      %1174 = vadd.xlane.f32.xlu0 %v1173
      %v1175 = vpop.xlane.xlu0 %1174
      %v1176 = vmul.f32 %v1175, %v1169
      %v1177 = vadd.f32 %v1176, 1e-05
      %v1178 = vrsqrt.pop %v1177
      %v1179 = vmul.f32 %v1171, %v1178
      %v1180 = vld [vmem:[%s8] sm:$0x1]
      %v1182 = vlaneseq
      %v1183 = vshrl.u32 %v1182, 7
      %v1184 = vsub.s32 0, %v1183
      %v1185 = vrot.slane %v1180, %v1184
      %v1187 = vmul.f32 %v1179, %v1185
      %v1188 = vld [vmem:[%s9] sm:$0x1]
      %v1190 = vlaneseq
      %v1191 = vshrl.u32 %v1190, 7
      %v1192 = vsub.s32 0, %v1191
      %v1193 = vrot.slane %v1188, %v1192
      %v1195 = vadd.f32 %v1187, %v1193
      %v1196 = vpack.c.bf16 %v1195, %v1195
      %vm1197 = vcmask 257024
      %1198 = vst.msk [vmem:[%s446] sm:$0xf] %vm1197, %v1196
      %p1199 = scmp.lt.s32.totalorder %s26, 1
      %s1200 = scalar_select %p1199, %s26, 1
      %p1201 = scmp.lt.s32.totalorder %s27, 0
      %s1202 = scalar_select %p1201, %s27, 0
      %s1203 = sadd.s32 %s1202, %s1200
      %s1204 = smul.addr %s1203, 4
      %s1205 = scalar_lea.vmem %s11, %s1204
      // Predicated region
      $region69: #{transformer_forward.7} parent=63 // pred_check
        %p1206 = pneg %p302
      $region70: #{transformer_forward.7} parent=63 // pred_check_branch
        %1208 = sbr.rel (%p1206) target = $region72
      $region71: #{transformer_forward.7} parent=63 // pred_region
        _
      $region72: #{transformer_forward.7} parent=63 // pred_fallthru
        _
    $region64: #{transformer_forward.7} parent=5 // pred_fallthru
      _
    %p1209 = scmp.le.s32.totalorder 2, %s17
    // Predicated region
    $region73: #{transformer_forward.7} parent=5 // pred_check
      %p1210 = pneg %p1209
    $region74: #{transformer_forward.7} parent=5 // pred_check_branch
      %1212 = sbr.rel (%p1210) target = $region76
    $region75: #{transformer_forward.7} parent=5 // pred_region
      %s1213 = ssub.s32 %s17, 2
      // Predicated region
      $region77: #{transformer_forward.7} parent=75 // pred_check
        %p1214 = pneg %p308
      $region78: #{transformer_forward.7} parent=75 // pred_check_branch
        %1216 = sbr.rel (%p1214) target = $region80
      $region79: #{transformer_forward.7} parent=75 // pred_region
        %p1217 = scmp.lt.s32.totalorder %s28, 1
        %s1218 = scalar_select %p1217, %s28, 1
        %p1219 = scmp.lt.s32.totalorder %s29, 0
        %s1220 = scalar_select %p1219, %s29, 0
        %s1221 = sadd.s32 %s1220, %s1218
        %s1222 = smul.addr %s1221, 4
        %s1223 = scalar_lea.vmem %s11, %s1222
      $region80: #{transformer_forward.7} parent=75 // pred_fallthru
        _
    $region76: #{transformer_forward.7} parent=5 // pred_fallthru
      _
  $region6: #{transformer_forward.7} parent=0 // loop_footer
    %s21 = sadd.s32 1, %s17
  $region7: #{transformer_forward.7} parent=0 // loop_footer_branch
    %16 = sbr.rel target = $region3
  $region8: #{transformer_forward.7} parent=0 // loop_exit
    _

// kernel: transformer_forward.5
$region0: #{transformer_forward.5}
  #allocation0 [shape = 'u32[]', space=smem, size = 0x4, offset = 0x4, fixed_abs, tag = 'smem constant byte address 0x4 - core index']
  #allocation1 [shape = 'u32[144,128]{1,0:T(1,128)}', space=vmem, size = 0x12000, scoped, tag = 'internal scratch']
  #allocation2 [shape = 'bf16[4,8,8]{2,1,0:T(8,128)(2,1)}', space=vmem, size = 0x2000, scoped, tag = 'scratch operand']
  #allocation3 [shape = 'bf16[4,8,8]{2,1,0:T(8,128)(2,1)}', space=vmem, size = 0x2000, scoped, tag = 'scratch operand']
  #allocation4 [shape = 'f32[8,32]{1,0:T(8,128)}', space=vmem, size = 0x1000, scoped, tag = 'scratch operand']
  %s0 = inlined_call_operand.vmem [shape: bf16[2,8,32], index: 0, kind: input, shape index: {}, may-alias: {0,1}]
  %s1 = inlined_call_operand.vmem [shape: bf16[2,8,32], index: 1, kind: input, shape index: {}, may-alias: {0,1}]
  %s2 = inlined_call_operand.vmem [shape: f32[8,32], index: 2, kind: input, shape index: {}, may-alias: {2,3}]
  %s3 = inlined_call_operand.vmem [shape: f32[8,32], index: 3, kind: input, shape index: {}, may-alias: {2,3}]
  %s4 = inlined_call_operand.vmem [shape: bf16[32,32], index: 4, kind: input, shape index: {}]
  %s5 = inlined_call_operand.vmem [shape: f32[1,32], index: 5, kind: input, shape index: {}]
  %s6 = inlined_call_operand.vmem [shape: bf16[32,64], index: 6, kind: input, shape index: {}]
  %s7 = inlined_call_operand.vmem [shape: f32[1,64], index: 7, kind: input, shape index: {}]
  %s8 = inlined_call_operand.vmem [shape: bf16[32,32], index: 8, kind: input, shape index: {}]
  %s9 = inlined_call_operand.vmem [shape: f32[1,32], index: 9, kind: input, shape index: {}]
  %s10 = inlined_call_operand.vmem [shape: f32[1,32], index: 10, kind: input, shape index: {}]
  %s11 = inlined_call_operand.vmem [shape: f32[1,32], index: 11, kind: input, shape index: {}]
  %s12 = inlined_call_operand.vmem [shape: f32[8,8], index: 12, kind: input, shape index: {}]
  %s13 = inlined_call_operand.vmem [shape: bf16[2,8,32], index: 13, kind: output, shape index: {}]
  %s14 = sld [smem:[#allocation0]]
  $region89: #{transformer_forward.5} parent=0
    _
  %s16 = ssub.s32 1, %s14
  %s17 = scalar_select 0, %s16, %s14
  loop: start=0, step=1, limit=4
  $region2: #{transformer_forward.5} parent=0 // loop_pre_header
    _
  $region3: #{transformer_forward.5} parent=0 // loop_header
    %s19 = sphi 0, %s23
    %p20 = scmp.ge.s32.totalorder %s19, 4
    %s26 = sphi 0, %s38
    %s27 = sphi 0, %s34
    %s28 = sphi 0, %s26
    %s29 = sphi 0, %s27
    %s30 = sphi 0, %s28
    %s31 = sphi 0, %s29
    %s43 = sphi 0, %s45
    %s46 = sphi 0, %s43
    %s47 = sphi 0, %s46
    %s63 = sphi 0, %s47
    %s69 = sphi 0, %s71
    %s72 = sphi 0, %s69
    %s73 = sphi 0, %s72
    %s89 = sphi 0, %s73
    %s95 = sphi 0, %s97
    %s98 = sphi 0, %s95
    %s99 = sphi 0, %s98
    %s115 = sphi 0, %s99
    %s119 = sphi 0, %s119
    %s121 = sphi 0, %s119
    %s122 = sphi 0, %s121
    %s136 = sphi 0, %s122
    %s140 = sphi 0, %s140
    %s142 = sphi 0, %s140
    %s143 = sphi 0, %s142
    %s157 = sphi 0, %s143
    %s161 = sphi 0, %s161
    %s163 = sphi 0, %s161
    %s164 = sphi 0, %s163
    %s178 = sphi 0, %s164
    %s182 = sphi 0, %s182
    %s184 = sphi 0, %s182
    %s185 = sphi 0, %s184
    %s199 = sphi 0, %s185
    %s203 = sphi 0, %s203
    %s205 = sphi 0, %s203
    %s206 = sphi 0, %s205
    %s220 = sphi 0, %s206
    %s224 = sphi 0, %s224
    %s226 = sphi 0, %s224
    %s227 = sphi 0, %s226
    %s241 = sphi 0, %s227
    %s245 = sphi 0, %s245
    %s247 = sphi 0, %s245
    %s248 = sphi 0, %s247
    %s262 = sphi 0, %s248
    %s266 = sphi 0, %s266
    %s268 = sphi 0, %s266
    %s269 = sphi 0, %s268
    %s283 = sphi 0, %s269
    %s287 = sphi 0, %s287
    %s289 = sphi 0, %s287
    %s290 = sphi 0, %s289
    %s304 = sphi 0, %s290
    %s310 = sphi 0, %s312
    %s313 = sphi 0, %s310
    %s314 = sphi 0, %s313
    %s330 = sphi 0, %s314
    %s338 = sphi 0, %s340
    %s341 = sphi 0, %s338
    %s342 = sphi 0, %s341
    %s358 = sphi 0, %s342
  $region4: #{transformer_forward.5} parent=0 // loop_header_branch
    %22 = sbr.rel (%p20) target = $region8
  $region5: #{transformer_forward.5} parent=0 // loop_body
    %s24 = ssub.s32 %s19, 1
    %s25 = ssub.s32 %s19, 2
    %s32 = sadd.s32 1, %s27
    %p33 = scmp.ge.s32.totalorder %s32, 1
    %s34 = scalar_select %p33, 0, %s32
    %s35 = sadd.s32 1, %s26
    %s36 = scalar_select %p33, %s35, %s26
    %p37 = scmp.ge.s32.totalorder %s36, 2
    %s38 = scalar_select %p37, 0, %s36
    %s39 = ssub.s32 %s26, %s38
    %s40 = ssub.s32 %s27, %s34
    %s41 = sor.u32 %s39, %s40
    %p42 = scmp.eq.s32.totalorder %s41, 0
    %s44 = sadd.s32 %s43, 1
    %s45 = scalar_select %p42, %s43, %s44
    %p48 = pneg %p42
    %p49 = scmp.eq.s32.totalorder %s19, 1
    %p50 = por %p48, %p49
    %p51 = scmp.ne.s32.totalorder %s43, %s46
    %p52 = scmp.eq.s32.totalorder %s19, 0
    %p53 = por %p51, %p52
    %p54 = scmp.ne.s32.totalorder %s43, %s46
    %p55 = scmp.eq.s32.totalorder %s24, 1
    %p56 = por %p54, %p55
    %p57 = scmp.ne.s32.totalorder %s46, %s47
    %p58 = scmp.eq.s32.totalorder %s24, 0
    %p59 = por %p57, %p58
    %p60 = scmp.ne.s32.totalorder %s46, %s47
    %p61 = scmp.eq.s32.totalorder %s25, 1
    %p62 = por %p60, %p61
    %p64 = scmp.ne.s32.totalorder %s47, %s63
    %p65 = scmp.eq.s32.totalorder %s25, 0
    %p66 = por %p64, %p65
    %s67 = ssub.s32 %s26, %s38
    %p68 = scmp.eq.s32.totalorder %s67, 0
    %s70 = sadd.s32 %s69, 1
    %s71 = scalar_select %p68, %s69, %s70
    %p74 = pneg %p68
    %p75 = scmp.eq.s32.totalorder %s19, 1
    %p76 = por %p74, %p75
    %p77 = scmp.ne.s32.totalorder %s69, %s72
    %p78 = scmp.eq.s32.totalorder %s19, 0
    %p79 = por %p77, %p78
    %p80 = scmp.ne.s32.totalorder %s69, %s72
    %p81 = scmp.eq.s32.totalorder %s24, 1
    %p82 = por %p80, %p81
    %p83 = scmp.ne.s32.totalorder %s72, %s73
    %p84 = scmp.eq.s32.totalorder %s24, 0
    %p85 = por %p83, %p84
    %p86 = scmp.ne.s32.totalorder %s72, %s73
    %p87 = scmp.eq.s32.totalorder %s25, 1
    %p88 = por %p86, %p87
    %p90 = scmp.ne.s32.totalorder %s73, %s89
    %p91 = scmp.eq.s32.totalorder %s25, 0
    %p92 = por %p90, %p91
    %s93 = ssub.s32 %s27, %s34
    %p94 = scmp.eq.s32.totalorder %s93, 0
    %s96 = sadd.s32 %s95, 1
    %s97 = scalar_select %p94, %s95, %s96
    %p100 = pneg %p94
    %p101 = scmp.eq.s32.totalorder %s19, 1
    %p102 = por %p100, %p101
    %p103 = scmp.ne.s32.totalorder %s95, %s98
    %p104 = scmp.eq.s32.totalorder %s19, 0
    %p105 = por %p103, %p104
    %p106 = scmp.ne.s32.totalorder %s95, %s98
    %p107 = scmp.eq.s32.totalorder %s24, 1
    %p108 = por %p106, %p107
    %p109 = scmp.ne.s32.totalorder %s98, %s99
    %p110 = scmp.eq.s32.totalorder %s24, 0
    %p111 = por %p109, %p110
    %p112 = scmp.ne.s32.totalorder %s98, %s99
    %p113 = scmp.eq.s32.totalorder %s25, 1
    %p114 = por %p112, %p113
    %p116 = scmp.ne.s32.totalorder %s99, %s115
    %p117 = scmp.eq.s32.totalorder %s25, 0
    %p118 = por %p116, %p117
    %s120 = sadd.s32 %s119, 1
    %p123 = scmp.eq.s32.totalorder %s19, 1
    %p124 = scmp.ne.s32.totalorder %s119, %s121
    %p125 = scmp.eq.s32.totalorder %s19, 0
    %p126 = por %p124, %p125
    %p127 = scmp.ne.s32.totalorder %s119, %s121
    %p128 = scmp.eq.s32.totalorder %s24, 1
    %p129 = por %p127, %p128
    %p130 = scmp.ne.s32.totalorder %s121, %s122
    %p131 = scmp.eq.s32.totalorder %s24, 0
    %p132 = por %p130, %p131
    %p133 = scmp.ne.s32.totalorder %s121, %s122
    %p134 = scmp.eq.s32.totalorder %s25, 1
    %p135 = por %p133, %p134
    %p137 = scmp.ne.s32.totalorder %s122, %s136
    %p138 = scmp.eq.s32.totalorder %s25, 0
    %p139 = por %p137, %p138
    %s141 = sadd.s32 %s140, 1
    %p144 = scmp.eq.s32.totalorder %s19, 1
    %p145 = scmp.ne.s32.totalorder %s140, %s142
    %p146 = scmp.eq.s32.totalorder %s19, 0
    %p147 = por %p145, %p146
    %p148 = scmp.ne.s32.totalorder %s140, %s142
    %p149 = scmp.eq.s32.totalorder %s24, 1
    %p150 = por %p148, %p149
    %p151 = scmp.ne.s32.totalorder %s142, %s143
    %p152 = scmp.eq.s32.totalorder %s24, 0
    %p153 = por %p151, %p152
    %p154 = scmp.ne.s32.totalorder %s142, %s143
    %p155 = scmp.eq.s32.totalorder %s25, 1
    %p156 = por %p154, %p155
    %p158 = scmp.ne.s32.totalorder %s143, %s157
    %p159 = scmp.eq.s32.totalorder %s25, 0
    %p160 = por %p158, %p159
    %s162 = sadd.s32 %s161, 1
    %p165 = scmp.eq.s32.totalorder %s19, 1
    %p166 = scmp.ne.s32.totalorder %s161, %s163
    %p167 = scmp.eq.s32.totalorder %s19, 0
    %p168 = por %p166, %p167
    %p169 = scmp.ne.s32.totalorder %s161, %s163
    %p170 = scmp.eq.s32.totalorder %s24, 1
    %p171 = por %p169, %p170
    %p172 = scmp.ne.s32.totalorder %s163, %s164
    %p173 = scmp.eq.s32.totalorder %s24, 0
    %p174 = por %p172, %p173
    %p175 = scmp.ne.s32.totalorder %s163, %s164
    %p176 = scmp.eq.s32.totalorder %s25, 1
    %p177 = por %p175, %p176
    %p179 = scmp.ne.s32.totalorder %s164, %s178
    %p180 = scmp.eq.s32.totalorder %s25, 0
    %p181 = por %p179, %p180
    %s183 = sadd.s32 %s182, 1
    %p186 = scmp.eq.s32.totalorder %s19, 1
    %p187 = scmp.ne.s32.totalorder %s182, %s184
    %p188 = scmp.eq.s32.totalorder %s19, 0
    %p189 = por %p187, %p188
    %p190 = scmp.ne.s32.totalorder %s182, %s184
    %p191 = scmp.eq.s32.totalorder %s24, 1
    %p192 = por %p190, %p191
    %p193 = scmp.ne.s32.totalorder %s184, %s185
    %p194 = scmp.eq.s32.totalorder %s24, 0
    %p195 = por %p193, %p194
    %p196 = scmp.ne.s32.totalorder %s184, %s185
    %p197 = scmp.eq.s32.totalorder %s25, 1
    %p198 = por %p196, %p197
    %p200 = scmp.ne.s32.totalorder %s185, %s199
    %p201 = scmp.eq.s32.totalorder %s25, 0
    %p202 = por %p200, %p201
    %s204 = sadd.s32 %s203, 1
    %p207 = scmp.eq.s32.totalorder %s19, 1
    %p208 = scmp.ne.s32.totalorder %s203, %s205
    %p209 = scmp.eq.s32.totalorder %s19, 0
    %p210 = por %p208, %p209
    %p211 = scmp.ne.s32.totalorder %s203, %s205
    %p212 = scmp.eq.s32.totalorder %s24, 1
    %p213 = por %p211, %p212
    %p214 = scmp.ne.s32.totalorder %s205, %s206
    %p215 = scmp.eq.s32.totalorder %s24, 0
    %p216 = por %p214, %p215
    %p217 = scmp.ne.s32.totalorder %s205, %s206
    %p218 = scmp.eq.s32.totalorder %s25, 1
    %p219 = por %p217, %p218
    %p221 = scmp.ne.s32.totalorder %s206, %s220
    %p222 = scmp.eq.s32.totalorder %s25, 0
    %p223 = por %p221, %p222
    %s225 = sadd.s32 %s224, 1
    %p228 = scmp.eq.s32.totalorder %s19, 1
    %p229 = scmp.ne.s32.totalorder %s224, %s226
    %p230 = scmp.eq.s32.totalorder %s19, 0
    %p231 = por %p229, %p230
    %p232 = scmp.ne.s32.totalorder %s224, %s226
    %p233 = scmp.eq.s32.totalorder %s24, 1
    %p234 = por %p232, %p233
    %p235 = scmp.ne.s32.totalorder %s226, %s227
    %p236 = scmp.eq.s32.totalorder %s24, 0
    %p237 = por %p235, %p236
    %p238 = scmp.ne.s32.totalorder %s226, %s227
    %p239 = scmp.eq.s32.totalorder %s25, 1
    %p240 = por %p238, %p239
    %p242 = scmp.ne.s32.totalorder %s227, %s241
    %p243 = scmp.eq.s32.totalorder %s25, 0
    %p244 = por %p242, %p243
    %s246 = sadd.s32 %s245, 1
    %p249 = scmp.eq.s32.totalorder %s19, 1
    %p250 = scmp.ne.s32.totalorder %s245, %s247
    %p251 = scmp.eq.s32.totalorder %s19, 0
    %p252 = por %p250, %p251
    %p253 = scmp.ne.s32.totalorder %s245, %s247
    %p254 = scmp.eq.s32.totalorder %s24, 1
    %p255 = por %p253, %p254
    %p256 = scmp.ne.s32.totalorder %s247, %s248
    %p257 = scmp.eq.s32.totalorder %s24, 0
    %p258 = por %p256, %p257
    %p259 = scmp.ne.s32.totalorder %s247, %s248
    %p260 = scmp.eq.s32.totalorder %s25, 1
    %p261 = por %p259, %p260
    %p263 = scmp.ne.s32.totalorder %s248, %s262
    %p264 = scmp.eq.s32.totalorder %s25, 0
    %p265 = por %p263, %p264
    %s267 = sadd.s32 %s266, 1
    %p270 = scmp.eq.s32.totalorder %s19, 1
    %p271 = scmp.ne.s32.totalorder %s266, %s268
    %p272 = scmp.eq.s32.totalorder %s19, 0
    %p273 = por %p271, %p272
    %p274 = scmp.ne.s32.totalorder %s266, %s268
    %p275 = scmp.eq.s32.totalorder %s24, 1
    %p276 = por %p274, %p275
    %p277 = scmp.ne.s32.totalorder %s268, %s269
    %p278 = scmp.eq.s32.totalorder %s24, 0
    %p279 = por %p277, %p278
    %p280 = scmp.ne.s32.totalorder %s268, %s269
    %p281 = scmp.eq.s32.totalorder %s25, 1
    %p282 = por %p280, %p281
    %p284 = scmp.ne.s32.totalorder %s269, %s283
    %p285 = scmp.eq.s32.totalorder %s25, 0
    %p286 = por %p284, %p285
    %s288 = sadd.s32 %s287, 1
    %p291 = scmp.eq.s32.totalorder %s19, 1
    %p292 = scmp.ne.s32.totalorder %s287, %s289
    %p293 = scmp.eq.s32.totalorder %s19, 0
    %p294 = por %p292, %p293
    %p295 = scmp.ne.s32.totalorder %s287, %s289
    %p296 = scmp.eq.s32.totalorder %s24, 1
    %p297 = por %p295, %p296
    %p298 = scmp.ne.s32.totalorder %s289, %s290
    %p299 = scmp.eq.s32.totalorder %s24, 0
    %p300 = por %p298, %p299
    %p301 = scmp.ne.s32.totalorder %s289, %s290
    %p302 = scmp.eq.s32.totalorder %s25, 1
    %p303 = por %p301, %p302
    %p305 = scmp.ne.s32.totalorder %s290, %s304
    %p306 = scmp.eq.s32.totalorder %s25, 0
    %p307 = por %p305, %p306
    %s308 = ssub.s32 %s27, %s34
    %p309 = scmp.eq.s32.totalorder %s308, 0
    %s311 = sadd.s32 %s310, 1
    %s312 = scalar_select %p309, %s310, %s311
    %p315 = pneg %p309
    %p316 = scmp.eq.s32.totalorder %s19, 1
    %p317 = por %p315, %p316
    %p318 = scmp.ne.s32.totalorder %s310, %s313
    %p319 = scmp.eq.s32.totalorder %s19, 0
    %p320 = por %p318, %p319
    %p321 = scmp.ne.s32.totalorder %s310, %s313
    %p322 = scmp.eq.s32.totalorder %s24, 1
    %p323 = por %p321, %p322
    %p324 = scmp.ne.s32.totalorder %s313, %s314
    %p325 = scmp.eq.s32.totalorder %s24, 0
    %p326 = por %p324, %p325
    %p327 = scmp.ne.s32.totalorder %s313, %s314
    %p328 = scmp.eq.s32.totalorder %s25, 1
    %p329 = por %p327, %p328
    %p331 = scmp.ne.s32.totalorder %s314, %s330
    %p332 = scmp.eq.s32.totalorder %s25, 0
    %p333 = por %p331, %p332
    %s334 = ssub.s32 %s26, %s38
    %s335 = ssub.s32 %s27, %s34
    %s336 = sor.u32 %s334, %s335
    %p337 = scmp.eq.s32.totalorder %s336, 0
    %s339 = sadd.s32 %s338, 1
    %s340 = scalar_select %p337, %s338, %s339
    %p343 = pneg %p337
    %p344 = scmp.eq.s32.totalorder %s19, 1
    %p345 = por %p343, %p344
    %p346 = scmp.ne.s32.totalorder %s338, %s341
    %p347 = scmp.eq.s32.totalorder %s19, 0
    %p348 = por %p346, %p347
    %p349 = scmp.ne.s32.totalorder %s338, %s341
    %p350 = scmp.eq.s32.totalorder %s24, 1
    %p351 = por %p349, %p350
    %p352 = scmp.ne.s32.totalorder %s341, %s342
    %p353 = scmp.eq.s32.totalorder %s24, 0
    %p354 = por %p352, %p353
    %p355 = scmp.ne.s32.totalorder %s341, %s342
    %p356 = scmp.eq.s32.totalorder %s25, 1
    %p357 = por %p355, %p356
    %p359 = scmp.ne.s32.totalorder %s342, %s358
    %p360 = scmp.eq.s32.totalorder %s25, 0
    %p361 = por %p359, %p360
    %p362 = scmp.le.s32.totalorder 1, %s19
    %p363 = scmp.lt.s32.totalorder %s19, 3
    %p364 = pnand %p362, %p363
    %p365 = pneg %p364
    // Predicated region
    $region9: #{transformer_forward.5} parent=5 // pred_check
      _
    $region10: #{transformer_forward.5} parent=5 // pred_check_branch
      %367 = sbr.rel (%p364) target = $region12
    $region11: #{transformer_forward.5} parent=5 // pred_region
      %s368 = ssub.s32 %s19, 1
      // Predicated region
      $region13: #{transformer_forward.5} parent=11 // pred_check
        %p369 = pneg %p111
      $region14: #{transformer_forward.5} parent=11 // pred_check_branch
        %371 = sbr.rel (%p369) target = $region16
      $region15: #{transformer_forward.5} parent=11 // pred_region
        %p372 = scmp.lt.s32.totalorder %s29, 0
        %s373 = scalar_select %p372, %s29, 0
        %s374 = smul.addr %s373, 8
        %s375 = scalar_lea.vmem %s2, %s374
      $region16: #{transformer_forward.5} parent=11 // pred_fallthru
        _
      // Predicated region
      $region17: #{transformer_forward.5} parent=11 // pred_check
        %p376 = pneg %p132
      $region18: #{transformer_forward.5} parent=11 // pred_check_branch
        %378 = sbr.rel (%p376) target = $region20
      $region19: #{transformer_forward.5} parent=11 // pred_region
        _
      $region20: #{transformer_forward.5} parent=11 // pred_fallthru
        _
      // Predicated region
      $region21: #{transformer_forward.5} parent=11 // pred_check
        %p379 = pneg %p153
      $region22: #{transformer_forward.5} parent=11 // pred_check_branch
        %381 = sbr.rel (%p379) target = $region24
      $region23: #{transformer_forward.5} parent=11 // pred_region
        _
      $region24: #{transformer_forward.5} parent=11 // pred_fallthru
        _
      // Predicated region
      $region25: #{transformer_forward.5} parent=11 // pred_check
        %p382 = pneg %p174
      $region26: #{transformer_forward.5} parent=11 // pred_check_branch
        %384 = sbr.rel (%p382) target = $region28
      $region27: #{transformer_forward.5} parent=11 // pred_region
        _
      $region28: #{transformer_forward.5} parent=11 // pred_fallthru
        _
      // Predicated region
      $region29: #{transformer_forward.5} parent=11 // pred_check
        %p385 = pneg %p195
      $region30: #{transformer_forward.5} parent=11 // pred_check_branch
        %387 = sbr.rel (%p385) target = $region32
      $region31: #{transformer_forward.5} parent=11 // pred_region
        _
      $region32: #{transformer_forward.5} parent=11 // pred_fallthru
        _
      // Predicated region
      $region33: #{transformer_forward.5} parent=11 // pred_check
        %p388 = pneg %p216
      $region34: #{transformer_forward.5} parent=11 // pred_check_branch
        %390 = sbr.rel (%p388) target = $region36
      $region35: #{transformer_forward.5} parent=11 // pred_region
        _
      $region36: #{transformer_forward.5} parent=11 // pred_fallthru
        _
      // Predicated region
      $region37: #{transformer_forward.5} parent=11 // pred_check
        %p391 = pneg %p237
      $region38: #{transformer_forward.5} parent=11 // pred_check_branch
        %393 = sbr.rel (%p391) target = $region40
      $region39: #{transformer_forward.5} parent=11 // pred_region
        _
      $region40: #{transformer_forward.5} parent=11 // pred_fallthru
        _
      // Predicated region
      $region41: #{transformer_forward.5} parent=11 // pred_check
        %p394 = pneg %p258
      $region42: #{transformer_forward.5} parent=11 // pred_check_branch
        %396 = sbr.rel (%p394) target = $region44
      $region43: #{transformer_forward.5} parent=11 // pred_region
        _
      $region44: #{transformer_forward.5} parent=11 // pred_fallthru
        _
      // Predicated region
      $region45: #{transformer_forward.5} parent=11 // pred_check
        %p397 = pneg %p279
      $region46: #{transformer_forward.5} parent=11 // pred_check_branch
        %399 = sbr.rel (%p397) target = $region48
      $region47: #{transformer_forward.5} parent=11 // pred_region
        _
      $region48: #{transformer_forward.5} parent=11 // pred_fallthru
        _
      // Predicated region
      $region49: #{transformer_forward.5} parent=11 // pred_check
        %p400 = pneg %p300
      $region50: #{transformer_forward.5} parent=11 // pred_check_branch
        %402 = sbr.rel (%p400) target = $region52
      $region51: #{transformer_forward.5} parent=11 // pred_region
        _
      $region52: #{transformer_forward.5} parent=11 // pred_fallthru
        _
      // Predicated region
      $region53: #{transformer_forward.5} parent=11 // pred_check
        %p403 = pneg %p326
      $region54: #{transformer_forward.5} parent=11 // pred_check_branch
        %405 = sbr.rel (%p403) target = $region56
      $region55: #{transformer_forward.5} parent=11 // pred_region
        %p406 = scmp.lt.s32.totalorder %s29, 0
        %s407 = scalar_select %p406, %s29, 0
        %s408 = smul.addr %s407, 8
        %s409 = scalar_lea.vmem %s12, %s408
      $region56: #{transformer_forward.5} parent=11 // pred_fallthru
        _
    $region12: #{transformer_forward.5} parent=5 // pred_fallthru
      _
    %p410 = scmp.lt.s32.totalorder %s19, 2
    // Predicated region
    $region57: #{transformer_forward.5} parent=5 // pred_check
      %p411 = pneg %p410
    $region58: #{transformer_forward.5} parent=5 // pred_check_branch
      %413 = sbr.rel (%p411) target = $region60
    $region59: #{transformer_forward.5} parent=5 // pred_region
      // Predicated region
      $region61: #{transformer_forward.5} parent=59 // pred_check
        %p414 = pneg %p53
      $region62: #{transformer_forward.5} parent=59 // pred_check_branch
        %416 = sbr.rel (%p414) target = $region64
      $region63: #{transformer_forward.5} parent=59 // pred_region
        %p417 = scmp.lt.s32.totalorder %s26, 1
        %s418 = scalar_select %p417, %s26, 1
        %p419 = scmp.lt.s32.totalorder %s27, 0
        %s420 = scalar_select %p419, %s27, 0
        %s421 = sadd.s32 %s420, %s418
        %s422 = smul.addr %s421, 4
        %s423 = scalar_lea.vmem %s0, %s422
      $region64: #{transformer_forward.5} parent=59 // pred_fallthru
        _
      // Predicated region
      $region65: #{transformer_forward.5} parent=59 // pred_check
        %p424 = pneg %p79
      $region66: #{transformer_forward.5} parent=59 // pred_check_branch
        %426 = sbr.rel (%p424) target = $region68
      $region67: #{transformer_forward.5} parent=59 // pred_region
        %p427 = scmp.lt.s32.totalorder %s26, 1
        %s428 = scalar_select %p427, %s26, 1
        %s429 = smul.addr %s428, 4
        %s430 = scalar_lea.vmem %s1, %s429
      $region68: #{transformer_forward.5} parent=59 // pred_fallthru
        _
    $region60: #{transformer_forward.5} parent=5 // pred_fallthru
      _
    %p431 = scmp.le.s32.totalorder 1, %s19
    %p432 = scmp.lt.s32.totalorder %s19, 3
    %p433 = pnand %p431, %p432
    %p434 = pneg %p433
    // Predicated region
    $region69: #{transformer_forward.5} parent=5 // pred_check
      _
    $region70: #{transformer_forward.5} parent=5 // pred_check_branch
      %436 = sbr.rel (%p433) target = $region72
    $region71: #{transformer_forward.5} parent=5 // pred_region
      %s437 = ssub.s32 %s19, 1
      %p438 = scmp.lt.s32.totalorder %s28, 1
      %s439 = scalar_select %p438, %s28, 1
      %p440 = scmp.lt.s32.totalorder %s29, 0
      %s441 = scalar_select %p440, %s29, 0
      %s442 = sadd.s32 %s441, %s439
      %s443 = smul.addr %s442, 4
      %s444 = scalar_lea.vmem %s0, %s443
      %p445 = pneg %p59
      %p446 = pneg %p56
      %p447 = scmp.lt.s32.totalorder %s28, 1
      %s448 = scalar_select %p447, %s28, 1
      %s449 = smul.addr %s448, 4
      %s450 = scalar_lea.vmem %s1, %s449
      %p451 = pneg %p85
      %p452 = pneg %p82
      %p453 = scmp.lt.s32.totalorder %s29, 0
      %s454 = scalar_select %p453, %s29, 0
      %s455 = smul.addr %s454, 8
      %s456 = scalar_lea.vmem %s2, %s455
      %p457 = pneg %p111
      %p458 = pneg %p108
      %p459 = pneg %p132
      %p460 = pneg %p129
      %p461 = pneg %p153
      %p462 = pneg %p150
      %p463 = pneg %p174
      %p464 = pneg %p171
      %p465 = pneg %p195
      %p466 = pneg %p192
      %p467 = pneg %p216
      %p468 = pneg %p213
      %p469 = pneg %p237
      %p470 = pneg %p234
      %p471 = pneg %p258
      %p472 = pneg %p255
      %p473 = pneg %p279
      %p474 = pneg %p276
      %p475 = pneg %p300
      %p476 = pneg %p297
      %p477 = scmp.lt.s32.totalorder %s29, 0
      %s478 = scalar_select %p477, %s29, 0
      %s479 = smul.addr %s478, 8
      %s480 = scalar_lea.vmem %s12, %s479
      %p481 = pneg %p326
      %p482 = pneg %p323
      %p483 = pneg %p354
      %p484 = pneg %p351
      %p485 = scmp.lt.s32.totalorder %s28, 1
      %s486 = scalar_select %p485, %s28, 1
      %p487 = scmp.lt.s32.totalorder %s29, 0
      %s488 = scalar_select %p487, %s29, 0
      %s489 = sadd.s32 %s488, %s486
      %s490 = smul.addr %s489, 4
      %s491 = scalar_lea.vmem %s13, %s490
      %p492 = scmp.lt.s32.totalorder %s28, 1
      %s493 = scalar_select %p492, %s28, 1
      %p494 = scmp.lt.s32.totalorder %s29, 0
      %s495 = scalar_select %p494, %s29, 0
      %s496 = sadd.s32 %s495, %s493
      %s497 = smul.addr %s496, 4
      %s498 = scalar_lea.vmem %s0, %s497
      %p499 = scmp.lt.s32.totalorder %s28, 1
      %s500 = scalar_select %p499, %s28, 1
      %s501 = smul.addr %s500, 4
      %s502 = scalar_lea.vmem %s1, %s501
      %p503 = scmp.lt.s32.totalorder %s29, 0
      %s504 = scalar_select %p503, %s29, 0
      %s505 = smul.addr %s504, 8
      %s506 = scalar_lea.vmem %s2, %s505
      %p507 = scmp.lt.s32.totalorder %s29, 0
      %s508 = scalar_select %p507, %s29, 0
      %s509 = smul.addr %s508, 8
      %s510 = scalar_lea.vmem %s12, %s509
      %p511 = scmp.lt.s32.totalorder %s28, 1
      %s512 = scalar_select %p511, %s28, 1
      %p513 = scmp.lt.s32.totalorder %s29, 0
      %s514 = scalar_select %p513, %s29, 0
      %s515 = sadd.s32 %s514, %s512
      %s516 = smul.addr %s515, 4
      %s517 = scalar_lea.vmem %s13, %s516
      %p519 = scmp.eq.s32.totalorder %s29, 0
      // Predicated region
      $region73: #{transformer_forward.5} parent=71 // pred_check
        %p520 = pneg %p519
      $region74: #{transformer_forward.5} parent=71 // pred_check_branch
        %522 = sbr.rel (%p520) target = $region76
      $region75: #{transformer_forward.5} parent=71 // pred_region
        %v523 = vld [vmem:[%s502] sm:$0xf]
        %v524 = vunpack.c.l.bf16 %v523
        %v525 = vmul.f32 %v524, 5.656854
        %v526 = vld [vmem:[%s3] sm:$0xff]
        %v527 = vadd.f32 %v525, %v526
        %v528 = vpack.c.bf16 %v527, %v527
        %v529 = vld [vmem:[%s6] sm:$0xf]
        %v530 = vld [vmem:[%s6 + $0x4] sm:$0xf]
        %v531 = vld [vmem:[%s6 + $0x8] sm:$0xf]
        %v532 = vld [vmem:[%s6 + $0xc] sm:$0xf]
        %v533 = vld [vmem:[%s7] sm:$0x1]
        %v535 = vlaneseq
        %v536 = vshrl.u32 %v535, 7
        %v537 = vsub.s32 0, %v536
        %v538 = vrot.slane %v533, %v537
        %v544 = vunpack.c.l.b16 %v529
        %v545 = vunpack.c.l.b16 %v530
        %v546 = vunpack.c.l.b16 %v531
        %v547 = vunpack.c.l.b16 %v532
        %v548 = vpack.c.b16 %v545, %v544
        %v549 = vpack.c.b16 %v547, %v546
        %vm552 = vcmask 261120
        %v554 = vsel %vm552, %v528, 0
        %556 = vmatprep.subr.bf16.mxu0 0
        %557 = vmatpush1.bf16.msra.mxu0 %v548
        %558 = vmatprep.subr.bf16.mxu0 0
        %559 = vmatpush1.bf16.msra.mxu0 %v549
        %560 = vmatprep.subr.bf16.mxu0 0
        %561 = vmatpush1.bf16.msra.mxu0 0
        %562 = vmatprep.subr.bf16.mxu0 0
        %563 = vmatpush1.bf16.msra.mxu0 0
        %564 = vmatprep.subr.bf16.mxu0 0
        %565 = vmatpush1.bf16.msra.mxu0 0
        %566 = vmatprep.subr.bf16.mxu0 0
        %567 = vmatpush1.bf16.msra.mxu0 0
        %568 = vmatprep.subr.bf16.mxu0 0
        %569 = vmatpush1.bf16.msra.mxu0 0
        %570 = vmatprep.subr.bf16.mxu0 0
        %571 = vmatpush1.bf16.msra.mxu0 0
        %572 = vmatprep.subr.bf16.mxu0 0
        %573 = vmatpush1.bf16.msra.mxu0 0
        %574 = vmatprep.subr.bf16.mxu0 0
        %575 = vmatpush1.bf16.msra.mxu0 0
        %576 = vmatprep.subr.bf16.mxu0 0
        %577 = vmatpush1.bf16.msra.mxu0 0
        %578 = vmatprep.subr.bf16.mxu0 0
        %579 = vmatpush1.bf16.msra.mxu0 0
        %580 = vmatprep.subr.bf16.mxu0 0
        %581 = vmatpush1.bf16.msra.mxu0 0
        %582 = vmatprep.subr.bf16.mxu0 0
        %583 = vmatpush1.bf16.msra.mxu0 0
        %584 = vmatprep.subr.bf16.mxu0 0
        %585 = vmatpush1.bf16.msra.mxu0 0
        %586 = vmatprep.subr.bf16.mxu0 0
        %587 = vmatpush1.bf16.msra.mxu0 0
        %588 = vmatprep.mubr.bf16.mxu0 0
        %589 = vmatmul.mubr.bf16.gmra.mrb[0].mxu0 %v554
        %v590 = vpop.f32.mrb[0].mxu0
        %v591 = vadd.f32 %v538, %v590
        %v592 = vpop.f32.mrb[0].mxu0
        %v593 = vpop.f32.mrb[0].mxu0
        %v594 = vpop.f32.mrb[0].mxu0
        %595 = vdwg.mxu0
        %v596 = vpack.c.bf16 %v591, %v591
        %vm597 = vcmask 60416
        %598 = vst.msk [vmem:[#allocation2] sm:$0xf] %vm597, %v596
        %v600 = vunpack.c.l.b16 %v596
        %v601 = vpack.c.b16 %v600, %v600
        %602 = vrot.lane.b32.xlu0 %v601, 96
        %v603 = vpop.permute.xlu0 %602
        %605 = vst.msk [vmem:[#allocation3] sm:$0xf] %vm597, %v603
        %606 = vrot.lane.b32.xlu0 %v601, 120
        %v607 = vpop.permute.xlu0 %606
        %s609 = scalar_lea.vmem [#allocation2], 4
        %610 = vst.msk [vmem:[%s609] sm:$0xf] %vm597, %v607
        %611 = vrot.lane.b32.xlu0 %v601, 88
        %v612 = vpop.permute.xlu0 %611
        %s614 = scalar_lea.vmem [#allocation3], 4
        %615 = vst.msk [vmem:[%s614] sm:$0xf] %vm597, %v612
        %616 = vrot.lane.b32.xlu0 %v601, 112
        %v617 = vpop.permute.xlu0 %616
        %s619 = scalar_lea.vmem [#allocation2], 8
        %620 = vst.msk [vmem:[%s619] sm:$0xf] %vm597, %v617
        %621 = vrot.lane.b32.xlu0 %v601, 80
        %v622 = vpop.permute.xlu0 %621
        %s624 = scalar_lea.vmem [#allocation3], 8
        %625 = vst.msk [vmem:[%s624] sm:$0xf] %vm597, %v622
        %626 = vrot.lane.b32.xlu0 %v601, 104
        %v627 = vpop.permute.xlu0 %626
        %s629 = scalar_lea.vmem [#allocation2], 12
        %630 = vst.msk [vmem:[%s629] sm:$0xf] %vm597, %v627
        %631 = vrot.lane.b32.xlu0 %v601, 72
        %v632 = vpop.permute.xlu0 %631
        %s634 = scalar_lea.vmem [#allocation3], 12
        %635 = vst.msk [vmem:[%s634] sm:$0xf] %vm597, %v632
      $region76: #{transformer_forward.5} parent=71 // pred_fallthru
        _
      %v636 = vld [vmem:[%s498] sm:$0xf]
      %v637 = vunpack.c.l.bf16 %v636
      %v638 = vmul.f32 %v637, 5.656854
      %v639 = vld [vmem:[%s506] sm:$0xff]
      %v640 = vadd.f32 %v638, %v639
      %v641 = vpack.c.bf16 %v640, %v640
      %v642 = vld [vmem:[%s4] sm:$0xf]
      %v643 = vld [vmem:[%s4 + $0x4] sm:$0xf]
      %v644 = vld [vmem:[%s4 + $0x8] sm:$0xf]
      %v645 = vld [vmem:[%s4 + $0xc] sm:$0xf]
      %v646 = vld [vmem:[%s5] sm:$0x1]
      %v648 = vlaneseq
      %v649 = vshrl.u32 %v648, 7
      %v650 = vsub.s32 0, %v649
      %v651 = vrot.slane %v646, %v650
      %v657 = vunpack.c.l.b16 %v642
      %v658 = vunpack.c.l.b16 %v643
      %v659 = vunpack.c.l.b16 %v644
      %v660 = vunpack.c.l.b16 %v645
      %v661 = vpack.c.b16 %v658, %v657
      %v662 = vpack.c.b16 %v660, %v659
      %vm665 = vcmask 261120
      %v667 = vsel %vm665, %v641, 0
      %669 = vmatprep.subr.bf16.mxu0 0
      %670 = vmatpush1.bf16.msra.mxu0 %v661
      %671 = vmatprep.subr.bf16.mxu0 0
      %672 = vmatpush1.bf16.msra.mxu0 %v662
      %673 = vmatprep.subr.bf16.mxu0 0
      %674 = vmatpush1.bf16.msra.mxu0 0
      %675 = vmatprep.subr.bf16.mxu0 0
      %676 = vmatpush1.bf16.msra.mxu0 0
      %677 = vmatprep.subr.bf16.mxu0 0
      %678 = vmatpush1.bf16.msra.mxu0 0
      %679 = vmatprep.subr.bf16.mxu0 0
      %680 = vmatpush1.bf16.msra.mxu0 0
      %681 = vmatprep.subr.bf16.mxu0 0
      %682 = vmatpush1.bf16.msra.mxu0 0
      %683 = vmatprep.subr.bf16.mxu0 0
      %684 = vmatpush1.bf16.msra.mxu0 0
      %685 = vmatprep.subr.bf16.mxu0 0
      %686 = vmatpush1.bf16.msra.mxu0 0
      %687 = vmatprep.subr.bf16.mxu0 0
      %688 = vmatpush1.bf16.msra.mxu0 0
      %689 = vmatprep.subr.bf16.mxu0 0
      %690 = vmatpush1.bf16.msra.mxu0 0
      %691 = vmatprep.subr.bf16.mxu0 0
      %692 = vmatpush1.bf16.msra.mxu0 0
      %693 = vmatprep.subr.bf16.mxu0 0
      %694 = vmatpush1.bf16.msra.mxu0 0
      %695 = vmatprep.subr.bf16.mxu0 0
      %696 = vmatpush1.bf16.msra.mxu0 0
      %697 = vmatprep.subr.bf16.mxu0 0
      %698 = vmatpush1.bf16.msra.mxu0 0
      %699 = vmatprep.subr.bf16.mxu0 0
      %700 = vmatpush1.bf16.msra.mxu0 0
      %701 = vmatprep.mubr.bf16.mxu0 0
      %702 = vmatmul.mubr.bf16.gmra.mrb[0].mxu0 %v667
      %v703 = vpop.f32.mrb[0].mxu0
      %v704 = vadd.f32 %v651, %v703
      %v705 = vpop.f32.mrb[0].mxu0
      %v706 = vpop.f32.mrb[0].mxu0
      %v707 = vpop.f32.mrb[0].mxu0
      %708 = vdwg.mxu0
      %v709 = vld [vmem:[%s510] sm:$0xff]
      %v710 = vpack.c.bf16 %v704, %v704
      %v711 = vld [vmem:[#allocation2] sm:$0xf]
      %vm712 = vcmask 64512
      %v714 = vsel %vm712, %v710, 0
      %v717 = vsel %vm712, %v711, 0
      %719 = vmatprep.subr.bf16.mxu0 0
      %720 = vmatpush1.bf16.xpose.msra.mxu0 %v717
      %721 = vmatprep.subr.bf16.mxu0 0
      %722 = vmatpush1.bf16.xpose.msra.mxu0 0
      %723 = vmatprep.subr.bf16.mxu0 0
      %724 = vmatpush1.bf16.xpose.msra.mxu0 0
      %725 = vmatprep.subr.bf16.mxu0 0
      %726 = vmatpush1.bf16.xpose.msra.mxu0 0
      %727 = vmatprep.subr.bf16.mxu0 0
      %728 = vmatpush1.bf16.xpose.msra.mxu0 0
      %729 = vmatprep.subr.bf16.mxu0 0
      %730 = vmatpush1.bf16.xpose.msra.mxu0 0
      %731 = vmatprep.subr.bf16.mxu0 0
      %732 = vmatpush1.bf16.xpose.msra.mxu0 0
      %733 = vmatprep.subr.bf16.mxu0 0
      %734 = vmatpush1.bf16.xpose.msra.mxu0 0
      %735 = vmatprep.subr.bf16.mxu0 0
      %736 = vmatpush1.bf16.xpose.msra.mxu0 0
      %737 = vmatprep.subr.bf16.mxu0 0
      %738 = vmatpush1.bf16.xpose.msra.mxu0 0
      %739 = vmatprep.subr.bf16.mxu0 0
      %740 = vmatpush1.bf16.xpose.msra.mxu0 0
      %741 = vmatprep.subr.bf16.mxu0 0
      %742 = vmatpush1.bf16.xpose.msra.mxu0 0
      %743 = vmatprep.subr.bf16.mxu0 0
      %744 = vmatpush1.bf16.xpose.msra.mxu0 0
      %745 = vmatprep.subr.bf16.mxu0 0
      %746 = vmatpush1.bf16.xpose.msra.mxu0 0
      %747 = vmatprep.subr.bf16.mxu0 0
      %748 = vmatpush1.bf16.xpose.msra.mxu0 0
      %749 = vmatprep.subr.bf16.mxu0 0
      %750 = vmatpush1.bf16.xpose.msra.mxu0 0
      %751 = vmatprep.mubr.bf16.mxu0 0
      %752 = vmatmul.mubr.bf16.gmra.mrb[0].mxu0 %v714
      %v753 = vpop.f32.mrb[0].mxu0
      %v754 = vadd.f32 0.0, %v753
      %v755 = vpop.f32.mrb[0].mxu0
      %v756 = vpop.f32.mrb[0].mxu0
      %v757 = vpop.f32.mrb[0].mxu0
      %758 = vdwg.mxu0
      %v759 = vmul.f32 %v754, 0.35355338
      %v760 = vadd.f32 %v759, %v709
      %v761 = vsel %vm712, %v760, -inf
      %762 = vmax.xlane.f32.xlu0 %v761
      %v763 = vpop.xlane.xlu0 %762
      %v764 = vsub.f32 %v760, %v763
      %v765 = vmul.f32 %v764, 1.442695
      %v766 = vpow.pop %v765
      %v767 = vsel %vm712, %v766, 0.0
      %768 = vadd.xlane.f32.xlu0 %v767
      %v769 = vpop.xlane.xlu0 %768
      %v770 = vrcp.pop %v769
      %v771 = vmul.f32 %v766, %v770
      %v772 = vpack.c.bf16 %v771, %v771
      %v773 = vld [vmem:[#allocation3] sm:$0xf]
      %v775 = vsel %vm712, %v772, 0
      %vm777 = vcmask 1043456
      %v779 = vsel %vm777, %v773, 0
      %781 = vmatprep.subr.bf16.mxu0 0
      %782 = vmatpush1.bf16.msra.mxu0 %v779
      %783 = vmatprep.subr.bf16.mxu0 0
      %784 = vmatpush1.bf16.msra.mxu0 0
      %785 = vmatprep.subr.bf16.mxu0 0
      %786 = vmatpush1.bf16.msra.mxu0 0
      %787 = vmatprep.subr.bf16.mxu0 0
      %788 = vmatpush1.bf16.msra.mxu0 0
      %789 = vmatprep.subr.bf16.mxu0 0
      %790 = vmatpush1.bf16.msra.mxu0 0
      %791 = vmatprep.subr.bf16.mxu0 0
      %792 = vmatpush1.bf16.msra.mxu0 0
      %793 = vmatprep.subr.bf16.mxu0 0
      %794 = vmatpush1.bf16.msra.mxu0 0
      %795 = vmatprep.subr.bf16.mxu0 0
      %796 = vmatpush1.bf16.msra.mxu0 0
      %797 = vmatprep.subr.bf16.mxu0 0
      %798 = vmatpush1.bf16.msra.mxu0 0
      %799 = vmatprep.subr.bf16.mxu0 0
      %800 = vmatpush1.bf16.msra.mxu0 0
      %801 = vmatprep.subr.bf16.mxu0 0
      %802 = vmatpush1.bf16.msra.mxu0 0
      %803 = vmatprep.subr.bf16.mxu0 0
      %804 = vmatpush1.bf16.msra.mxu0 0
      %805 = vmatprep.subr.bf16.mxu0 0
      %806 = vmatpush1.bf16.msra.mxu0 0
      %807 = vmatprep.subr.bf16.mxu0 0
      %808 = vmatpush1.bf16.msra.mxu0 0
      %809 = vmatprep.subr.bf16.mxu0 0
      %810 = vmatpush1.bf16.msra.mxu0 0
      %811 = vmatprep.subr.bf16.mxu0 0
      %812 = vmatpush1.bf16.msra.mxu0 0
      %813 = vmatprep.mubr.bf16.mxu0 0
      %814 = vmatmul.mubr.bf16.gmra.mrb[0].mxu0 %v775
      %v815 = vpop.f32.mrb[0].mxu0
      %v816 = vadd.f32 0.0, %v815
      %v817 = vpop.f32.mrb[0].mxu0
      %v818 = vpop.f32.mrb[0].mxu0
      %v819 = vpop.f32.mrb[0].mxu0
      %820 = vdwg.mxu0
      %821 = vst.msk [vmem:[#allocation4] sm:$0xff] %vm712, %v816
      %s822 = scalar_lea.vmem [#allocation2], 4
      %v823 = vld [vmem:[%s822] sm:$0xf]
      %825 = vrot.lane.b32.xlu0 %v710, 120
      %v826 = vpop.permute.xlu0 %825
      %v828 = vsel %vm712, %v826, 0
      %v831 = vsel %vm712, %v823, 0
      %833 = vmatprep.subr.bf16.mxu0 0
      %834 = vmatpush1.bf16.xpose.msra.mxu0 %v831
      %835 = vmatprep.subr.bf16.mxu0 0
      %836 = vmatpush1.bf16.xpose.msra.mxu0 0
      %837 = vmatprep.subr.bf16.mxu0 0
      %838 = vmatpush1.bf16.xpose.msra.mxu0 0
      %839 = vmatprep.subr.bf16.mxu0 0
      %840 = vmatpush1.bf16.xpose.msra.mxu0 0
      %841 = vmatprep.subr.bf16.mxu0 0
      %842 = vmatpush1.bf16.xpose.msra.mxu0 0
      %843 = vmatprep.subr.bf16.mxu0 0
      %844 = vmatpush1.bf16.xpose.msra.mxu0 0
      %845 = vmatprep.subr.bf16.mxu0 0
      %846 = vmatpush1.bf16.xpose.msra.mxu0 0
      %847 = vmatprep.subr.bf16.mxu0 0
      %848 = vmatpush1.bf16.xpose.msra.mxu0 0
      %849 = vmatprep.subr.bf16.mxu0 0
      %850 = vmatpush1.bf16.xpose.msra.mxu0 0
      %851 = vmatprep.subr.bf16.mxu0 0
      %852 = vmatpush1.bf16.xpose.msra.mxu0 0
      %853 = vmatprep.subr.bf16.mxu0 0
      %854 = vmatpush1.bf16.xpose.msra.mxu0 0
      %855 = vmatprep.subr.bf16.mxu0 0
      %856 = vmatpush1.bf16.xpose.msra.mxu0 0
      %857 = vmatprep.subr.bf16.mxu0 0
      %858 = vmatpush1.bf16.xpose.msra.mxu0 0
      %859 = vmatprep.subr.bf16.mxu0 0
      %860 = vmatpush1.bf16.xpose.msra.mxu0 0
      %861 = vmatprep.subr.bf16.mxu0 0
      %862 = vmatpush1.bf16.xpose.msra.mxu0 0
      %863 = vmatprep.subr.bf16.mxu0 0
      %864 = vmatpush1.bf16.xpose.msra.mxu0 0
      %865 = vmatprep.mubr.bf16.mxu0 0
      %866 = vmatmul.mubr.bf16.gmra.mrb[0].mxu0 %v828
      %v867 = vpop.f32.mrb[0].mxu0
      %v868 = vadd.f32 0.0, %v867
      %v869 = vpop.f32.mrb[0].mxu0
      %v870 = vpop.f32.mrb[0].mxu0
      %v871 = vpop.f32.mrb[0].mxu0
      %872 = vdwg.mxu0
      %v873 = vmul.f32 %v868, 0.35355338
      %v874 = vadd.f32 %v873, %v709
      %v875 = vsel %vm712, %v874, -inf
      %876 = vmax.xlane.f32.xlu0 %v875
      %v877 = vpop.xlane.xlu0 %876
      %v878 = vsub.f32 %v874, %v877
      %v879 = vmul.f32 %v878, 1.442695
      %v880 = vpow.pop %v879
      %v881 = vsel %vm712, %v880, 0.0
      %882 = vadd.xlane.f32.xlu0 %v881
      %v883 = vpop.xlane.xlu0 %882
      %v884 = vrcp.pop %v883
      %v885 = vmul.f32 %v880, %v884
      %v886 = vpack.c.bf16 %v885, %v885
      %s887 = scalar_lea.vmem [#allocation3], 4
      %v888 = vld [vmem:[%s887] sm:$0xf]
      %v890 = vsel %vm712, %v886, 0
      %v893 = vsel %vm777, %v888, 0
      %895 = vmatprep.subr.bf16.mxu0 0
      %896 = vmatpush1.bf16.msra.mxu0 %v893
      %897 = vmatprep.subr.bf16.mxu0 0
      %898 = vmatpush1.bf16.msra.mxu0 0
      %899 = vmatprep.subr.bf16.mxu0 0
      %900 = vmatpush1.bf16.msra.mxu0 0
      %901 = vmatprep.subr.bf16.mxu0 0
      %902 = vmatpush1.bf16.msra.mxu0 0
      %903 = vmatprep.subr.bf16.mxu0 0
      %904 = vmatpush1.bf16.msra.mxu0 0
      %905 = vmatprep.subr.bf16.mxu0 0
      %906 = vmatpush1.bf16.msra.mxu0 0
      %907 = vmatprep.subr.bf16.mxu0 0
      %908 = vmatpush1.bf16.msra.mxu0 0
      %909 = vmatprep.subr.bf16.mxu0 0
      %910 = vmatpush1.bf16.msra.mxu0 0
      %911 = vmatprep.subr.bf16.mxu0 0
      %912 = vmatpush1.bf16.msra.mxu0 0
      %913 = vmatprep.subr.bf16.mxu0 0
      %914 = vmatpush1.bf16.msra.mxu0 0
      %915 = vmatprep.subr.bf16.mxu0 0
      %916 = vmatpush1.bf16.msra.mxu0 0
      %917 = vmatprep.subr.bf16.mxu0 0
      %918 = vmatpush1.bf16.msra.mxu0 0
      %919 = vmatprep.subr.bf16.mxu0 0
      %920 = vmatpush1.bf16.msra.mxu0 0
      %921 = vmatprep.subr.bf16.mxu0 0
      %922 = vmatpush1.bf16.msra.mxu0 0
      %923 = vmatprep.subr.bf16.mxu0 0
      %924 = vmatpush1.bf16.msra.mxu0 0
      %925 = vmatprep.subr.bf16.mxu0 0
      %926 = vmatpush1.bf16.msra.mxu0 0
      %927 = vmatprep.mubr.bf16.mxu0 0
      %928 = vmatmul.mubr.bf16.gmra.mrb[0].mxu0 %v890
      %v929 = vpop.f32.mrb[0].mxu0
      %v930 = vadd.f32 0.0, %v929
      %v931 = vpop.f32.mrb[0].mxu0
      %v932 = vpop.f32.mrb[0].mxu0
      %v933 = vpop.f32.mrb[0].mxu0
      %934 = vdwg.mxu0
      %936 = vrot.lane.b32.xlu0 %v930, 8
      %v937 = vpop.permute.xlu0 %936
      %vm939 = vcmask 130112
      %940 = vst.msk [vmem:[#allocation4] sm:$0xff] %vm939, %v937
      %s941 = scalar_lea.vmem [#allocation2], 8
      %v942 = vld [vmem:[%s941] sm:$0xf]
      %943 = vrot.lane.b32.xlu0 %v710, 112
      %v944 = vpop.permute.xlu0 %943
      %v946 = vsel %vm712, %v944, 0
      %v949 = vsel %vm712, %v942, 0
      %951 = vmatprep.subr.bf16.mxu0 0
      %952 = vmatpush1.bf16.xpose.msra.mxu0 %v949
      %953 = vmatprep.subr.bf16.mxu0 0
      %954 = vmatpush1.bf16.xpose.msra.mxu0 0
      %955 = vmatprep.subr.bf16.mxu0 0
      %956 = vmatpush1.bf16.xpose.msra.mxu0 0
      %957 = vmatprep.subr.bf16.mxu0 0
      %958 = vmatpush1.bf16.xpose.msra.mxu0 0
      %959 = vmatprep.subr.bf16.mxu0 0
      %960 = vmatpush1.bf16.xpose.msra.mxu0 0
      %961 = vmatprep.subr.bf16.mxu0 0
      %962 = vmatpush1.bf16.xpose.msra.mxu0 0
      %963 = vmatprep.subr.bf16.mxu0 0
      %964 = vmatpush1.bf16.xpose.msra.mxu0 0
      %965 = vmatprep.subr.bf16.mxu0 0
      %966 = vmatpush1.bf16.xpose.msra.mxu0 0
      %967 = vmatprep.subr.bf16.mxu0 0
      %968 = vmatpush1.bf16.xpose.msra.mxu0 0
      %969 = vmatprep.subr.bf16.mxu0 0
      %970 = vmatpush1.bf16.xpose.msra.mxu0 0
      %971 = vmatprep.subr.bf16.mxu0 0
      %972 = vmatpush1.bf16.xpose.msra.mxu0 0
      %973 = vmatprep.subr.bf16.mxu0 0
      %974 = vmatpush1.bf16.xpose.msra.mxu0 0
      %975 = vmatprep.subr.bf16.mxu0 0
      %976 = vmatpush1.bf16.xpose.msra.mxu0 0
      %977 = vmatprep.subr.bf16.mxu0 0
      %978 = vmatpush1.bf16.xpose.msra.mxu0 0
      %979 = vmatprep.subr.bf16.mxu0 0
      %980 = vmatpush1.bf16.xpose.msra.mxu0 0
      %981 = vmatprep.subr.bf16.mxu0 0
      %982 = vmatpush1.bf16.xpose.msra.mxu0 0
      %983 = vmatprep.mubr.bf16.mxu0 0
      %984 = vmatmul.mubr.bf16.gmra.mrb[0].mxu0 %v946
      %v985 = vpop.f32.mrb[0].mxu0
      %v986 = vadd.f32 0.0, %v985
      %v987 = vpop.f32.mrb[0].mxu0
      %v988 = vpop.f32.mrb[0].mxu0
      %v989 = vpop.f32.mrb[0].mxu0
      %990 = vdwg.mxu0
      %v991 = vmul.f32 %v986, 0.35355338
      %v992 = vadd.f32 %v991, %v709
      %v993 = vsel %vm712, %v992, -inf
      %994 = vmax.xlane.f32.xlu0 %v993
      %v995 = vpop.xlane.xlu0 %994
      %v996 = vsub.f32 %v992, %v995
      %v997 = vmul.f32 %v996, 1.442695
      %v998 = vpow.pop %v997
      %v999 = vsel %vm712, %v998, 0.0
      %1000 = vadd.xlane.f32.xlu0 %v999
      %v1001 = vpop.xlane.xlu0 %1000
      %v1002 = vrcp.pop %v1001
      %v1003 = vmul.f32 %v998, %v1002
      %v1004 = vpack.c.bf16 %v1003, %v1003
      %s1005 = scalar_lea.vmem [#allocation3], 8
      %v1006 = vld [vmem:[%s1005] sm:$0xf]
      %v1008 = vsel %vm712, %v1004, 0
      %v1011 = vsel %vm777, %v1006, 0
      %1013 = vmatprep.subr.bf16.mxu0 0
      %1014 = vmatpush1.bf16.msra.mxu0 %v1011
      %1015 = vmatprep.subr.bf16.mxu0 0
      %1016 = vmatpush1.bf16.msra.mxu0 0
      %1017 = vmatprep.subr.bf16.mxu0 0
      %1018 = vmatpush1.bf16.msra.mxu0 0
      %1019 = vmatprep.subr.bf16.mxu0 0
      %1020 = vmatpush1.bf16.msra.mxu0 0
      %1021 = vmatprep.subr.bf16.mxu0 0
      %1022 = vmatpush1.bf16.msra.mxu0 0
      %1023 = vmatprep.subr.bf16.mxu0 0
      %1024 = vmatpush1.bf16.msra.mxu0 0
      %1025 = vmatprep.subr.bf16.mxu0 0
      %1026 = vmatpush1.bf16.msra.mxu0 0
      %1027 = vmatprep.subr.bf16.mxu0 0
      %1028 = vmatpush1.bf16.msra.mxu0 0
      %1029 = vmatprep.subr.bf16.mxu0 0
      %1030 = vmatpush1.bf16.msra.mxu0 0
      %1031 = vmatprep.subr.bf16.mxu0 0
      %1032 = vmatpush1.bf16.msra.mxu0 0
      %1033 = vmatprep.subr.bf16.mxu0 0
      %1034 = vmatpush1.bf16.msra.mxu0 0
      %1035 = vmatprep.subr.bf16.mxu0 0
      %1036 = vmatpush1.bf16.msra.mxu0 0
      %1037 = vmatprep.subr.bf16.mxu0 0
      %1038 = vmatpush1.bf16.msra.mxu0 0
      %1039 = vmatprep.subr.bf16.mxu0 0
      %1040 = vmatpush1.bf16.msra.mxu0 0
      %1041 = vmatprep.subr.bf16.mxu0 0
      %1042 = vmatpush1.bf16.msra.mxu0 0
      %1043 = vmatprep.subr.bf16.mxu0 0
      %1044 = vmatpush1.bf16.msra.mxu0 0
      %1045 = vmatprep.mubr.bf16.mxu0 0
      %1046 = vmatmul.mubr.bf16.gmra.mrb[0].mxu0 %v1008
      %v1047 = vpop.f32.mrb[0].mxu0
      %v1048 = vadd.f32 0.0, %v1047
      %v1049 = vpop.f32.mrb[0].mxu0
      %v1050 = vpop.f32.mrb[0].mxu0
      %v1051 = vpop.f32.mrb[0].mxu0
      %1052 = vdwg.mxu0
      %1054 = vrot.lane.b32.xlu0 %v1048, 16
      %v1055 = vpop.permute.xlu0 %1054
      %vm1057 = vcmask 195712
      %1058 = vst.msk [vmem:[#allocation4] sm:$0xff] %vm1057, %v1055
      %s1059 = scalar_lea.vmem [#allocation2], 12
      %v1060 = vld [vmem:[%s1059] sm:$0xf]
      %1061 = vrot.lane.b32.xlu0 %v710, 104
      %v1062 = vpop.permute.xlu0 %1061
      %v1064 = vsel %vm712, %v1062, 0
      %v1067 = vsel %vm712, %v1060, 0
      %1069 = vmatprep.subr.bf16.mxu0 0
      %1070 = vmatpush1.bf16.xpose.msra.mxu0 %v1067
      %1071 = vmatprep.subr.bf16.mxu0 0
      %1072 = vmatpush1.bf16.xpose.msra.mxu0 0
      %1073 = vmatprep.subr.bf16.mxu0 0
      %1074 = vmatpush1.bf16.xpose.msra.mxu0 0
      %1075 = vmatprep.subr.bf16.mxu0 0
      %1076 = vmatpush1.bf16.xpose.msra.mxu0 0
      %1077 = vmatprep.subr.bf16.mxu0 0
      %1078 = vmatpush1.bf16.xpose.msra.mxu0 0
      %1079 = vmatprep.subr.bf16.mxu0 0
      %1080 = vmatpush1.bf16.xpose.msra.mxu0 0
      %1081 = vmatprep.subr.bf16.mxu0 0
      %1082 = vmatpush1.bf16.xpose.msra.mxu0 0
      %1083 = vmatprep.subr.bf16.mxu0 0
      %1084 = vmatpush1.bf16.xpose.msra.mxu0 0
      %1085 = vmatprep.subr.bf16.mxu0 0
      %1086 = vmatpush1.bf16.xpose.msra.mxu0 0
      %1087 = vmatprep.subr.bf16.mxu0 0
      %1088 = vmatpush1.bf16.xpose.msra.mxu0 0
      %1089 = vmatprep.subr.bf16.mxu0 0
      %1090 = vmatpush1.bf16.xpose.msra.mxu0 0
      %1091 = vmatprep.subr.bf16.mxu0 0
      %1092 = vmatpush1.bf16.xpose.msra.mxu0 0
      %1093 = vmatprep.subr.bf16.mxu0 0
      %1094 = vmatpush1.bf16.xpose.msra.mxu0 0
      %1095 = vmatprep.subr.bf16.mxu0 0
      %1096 = vmatpush1.bf16.xpose.msra.mxu0 0
      %1097 = vmatprep.subr.bf16.mxu0 0
      %1098 = vmatpush1.bf16.xpose.msra.mxu0 0
      %1099 = vmatprep.subr.bf16.mxu0 0
      %1100 = vmatpush1.bf16.xpose.msra.mxu0 0
      %1101 = vmatprep.mubr.bf16.mxu0 0
      %1102 = vmatmul.mubr.bf16.gmra.mrb[0].mxu0 %v1064
      %v1103 = vpop.f32.mrb[0].mxu0
      %v1104 = vadd.f32 0.0, %v1103
      %v1105 = vpop.f32.mrb[0].mxu0
      %v1106 = vpop.f32.mrb[0].mxu0
      %v1107 = vpop.f32.mrb[0].mxu0
      %1108 = vdwg.mxu0
      %v1109 = vmul.f32 %v1104, 0.35355338
      %v1110 = vadd.f32 %v1109, %v709
      %v1111 = vsel %vm712, %v1110, -inf
      %1112 = vmax.xlane.f32.xlu0 %v1111
      %v1113 = vpop.xlane.xlu0 %1112
      %v1114 = vsub.f32 %v1110, %v1113
      %v1115 = vmul.f32 %v1114, 1.442695
      %v1116 = vpow.pop %v1115
      %v1117 = vsel %vm712, %v1116, 0.0
      %1118 = vadd.xlane.f32.xlu0 %v1117
      %v1119 = vpop.xlane.xlu0 %1118
      %v1120 = vrcp.pop %v1119
      %v1121 = vmul.f32 %v1116, %v1120
      %v1122 = vpack.c.bf16 %v1121, %v1121
      %s1123 = scalar_lea.vmem [#allocation3], 12
      %v1124 = vld [vmem:[%s1123] sm:$0xf]
      %v1126 = vsel %vm712, %v1122, 0
      %v1129 = vsel %vm777, %v1124, 0
      %1131 = vmatprep.subr.bf16.mxu0 0
      %1132 = vmatpush1.bf16.msra.mxu0 %v1129
      %1133 = vmatprep.subr.bf16.mxu0 0
      %1134 = vmatpush1.bf16.msra.mxu0 0
      %1135 = vmatprep.subr.bf16.mxu0 0
      %1136 = vmatpush1.bf16.msra.mxu0 0
      %1137 = vmatprep.subr.bf16.mxu0 0
      %1138 = vmatpush1.bf16.msra.mxu0 0
      %1139 = vmatprep.subr.bf16.mxu0 0
      %1140 = vmatpush1.bf16.msra.mxu0 0
      %1141 = vmatprep.subr.bf16.mxu0 0
      %1142 = vmatpush1.bf16.msra.mxu0 0
      %1143 = vmatprep.subr.bf16.mxu0 0
      %1144 = vmatpush1.bf16.msra.mxu0 0
      %1145 = vmatprep.subr.bf16.mxu0 0
      %1146 = vmatpush1.bf16.msra.mxu0 0
      %1147 = vmatprep.subr.bf16.mxu0 0
      %1148 = vmatpush1.bf16.msra.mxu0 0
      %1149 = vmatprep.subr.bf16.mxu0 0
      %1150 = vmatpush1.bf16.msra.mxu0 0
      %1151 = vmatprep.subr.bf16.mxu0 0
      %1152 = vmatpush1.bf16.msra.mxu0 0
      %1153 = vmatprep.subr.bf16.mxu0 0
      %1154 = vmatpush1.bf16.msra.mxu0 0
      %1155 = vmatprep.subr.bf16.mxu0 0
      %1156 = vmatpush1.bf16.msra.mxu0 0
      %1157 = vmatprep.subr.bf16.mxu0 0
      %1158 = vmatpush1.bf16.msra.mxu0 0
      %1159 = vmatprep.subr.bf16.mxu0 0
      %1160 = vmatpush1.bf16.msra.mxu0 0
      %1161 = vmatprep.subr.bf16.mxu0 0
      %1162 = vmatpush1.bf16.msra.mxu0 0
      %1163 = vmatprep.mubr.bf16.mxu0 0
      %1164 = vmatmul.mubr.bf16.gmra.mrb[0].mxu0 %v1126
      %v1165 = vpop.f32.mrb[0].mxu0
      %v1166 = vadd.f32 0.0, %v1165
      %v1167 = vpop.f32.mrb[0].mxu0
      %v1168 = vpop.f32.mrb[0].mxu0
      %v1169 = vpop.f32.mrb[0].mxu0
      %1170 = vdwg.mxu0
      %1172 = vrot.lane.b32.xlu0 %v1166, 24
      %v1173 = vpop.permute.xlu0 %1172
      %vm1175 = vcmask 261312
      %1176 = vst.msk [vmem:[#allocation4] sm:$0xff] %vm1175, %v1173
      %v1177 = vld [vmem:[#allocation4] sm:$0xff]
      %v1178 = vpack.c.bf16 %v1177, %v1177
      %v1179 = vld [vmem:[%s8] sm:$0xf]
      %v1180 = vld [vmem:[%s8 + $0x4] sm:$0xf]
      %v1181 = vld [vmem:[%s8 + $0x8] sm:$0xf]
      %v1182 = vld [vmem:[%s8 + $0xc] sm:$0xf]
      %v1183 = vld [vmem:[%s9] sm:$0x1]
      %v1185 = vlaneseq
      %v1186 = vshrl.u32 %v1185, 7
      %v1187 = vsub.s32 0, %v1186
      %v1188 = vrot.slane %v1183, %v1187
      %v1194 = vunpack.c.l.b16 %v1179
      %v1195 = vunpack.c.l.b16 %v1180
      %v1196 = vunpack.c.l.b16 %v1181
      %v1197 = vunpack.c.l.b16 %v1182
      %v1198 = vpack.c.b16 %v1195, %v1194
      %v1199 = vpack.c.b16 %v1197, %v1196
      %v1203 = vsel %vm665, %v1178, 0
      %1205 = vmatprep.subr.bf16.mxu0 0
      %1206 = vmatpush1.bf16.msra.mxu0 %v1198
      %1207 = vmatprep.subr.bf16.mxu0 0
      %1208 = vmatpush1.bf16.msra.mxu0 %v1199
      %1209 = vmatprep.subr.bf16.mxu0 0
      %1210 = vmatpush1.bf16.msra.mxu0 0
      %1211 = vmatprep.subr.bf16.mxu0 0
      %1212 = vmatpush1.bf16.msra.mxu0 0
      %1213 = vmatprep.subr.bf16.mxu0 0
      %1214 = vmatpush1.bf16.msra.mxu0 0
      %1215 = vmatprep.subr.bf16.mxu0 0
      %1216 = vmatpush1.bf16.msra.mxu0 0
      %1217 = vmatprep.subr.bf16.mxu0 0
      %1218 = vmatpush1.bf16.msra.mxu0 0
      %1219 = vmatprep.subr.bf16.mxu0 0
      %1220 = vmatpush1.bf16.msra.mxu0 0
      %1221 = vmatprep.subr.bf16.mxu0 0
      %1222 = vmatpush1.bf16.msra.mxu0 0
      %1223 = vmatprep.subr.bf16.mxu0 0
      %1224 = vmatpush1.bf16.msra.mxu0 0
      %1225 = vmatprep.subr.bf16.mxu0 0
      %1226 = vmatpush1.bf16.msra.mxu0 0
      %1227 = vmatprep.subr.bf16.mxu0 0
      %1228 = vmatpush1.bf16.msra.mxu0 0
      %1229 = vmatprep.subr.bf16.mxu0 0
      %1230 = vmatpush1.bf16.msra.mxu0 0
      %1231 = vmatprep.subr.bf16.mxu0 0
      %1232 = vmatpush1.bf16.msra.mxu0 0
      %1233 = vmatprep.subr.bf16.mxu0 0
      %1234 = vmatpush1.bf16.msra.mxu0 0
      %1235 = vmatprep.subr.bf16.mxu0 0
      %1236 = vmatpush1.bf16.msra.mxu0 0
      %1237 = vmatprep.mubr.bf16.mxu0 0
      %1238 = vmatmul.mubr.bf16.gmra.mrb[0].mxu0 %v1203
      %v1239 = vpop.f32.mrb[0].mxu0
      %v1240 = vadd.f32 %v1188, %v1239
      %v1241 = vpop.f32.mrb[0].mxu0
      %v1242 = vpop.f32.mrb[0].mxu0
      %v1243 = vpop.f32.mrb[0].mxu0
      %1244 = vdwg.mxu0
      %v1245 = vadd.f32 %v640, %v1240
      %v1246 = vsel %vm665, %v1245, 0.0
      %1247 = vadd.xlane.f32.xlu0 %v1246
      %v1248 = vpop.xlane.xlu0 %1247
      %v1249 = vrcp.pop 32.0
      %v1250 = vmul.f32 %v1248, %v1249
      %v1251 = vsub.f32 %v1245, %v1250
      %v1252 = vmul.f32 %v1251, %v1251
      %v1253 = vsel %vm665, %v1252, 0.0
      %1254 = vadd.xlane.f32.xlu0 %v1253
      %v1255 = vpop.xlane.xlu0 %1254
      %v1256 = vmul.f32 %v1255, %v1249
      %v1257 = vadd.f32 %v1256, 1e-05
      %v1258 = vrsqrt.pop %v1257
      %v1259 = vmul.f32 %v1251, %v1258
      %v1260 = vld [vmem:[%s10] sm:$0x1]
      %v1262 = vlaneseq
      %v1263 = vshrl.u32 %v1262, 7
      %v1264 = vsub.s32 0, %v1263
      %v1265 = vrot.slane %v1260, %v1264
      %v1267 = vmul.f32 %v1259, %v1265
      %v1268 = vld [vmem:[%s11] sm:$0x1]
      %v1270 = vlaneseq
      %v1271 = vshrl.u32 %v1270, 7
      %v1272 = vsub.s32 0, %v1271
      %v1273 = vrot.slane %v1268, %v1272
      %v1275 = vadd.f32 %v1267, %v1273
      %v1276 = vpack.c.bf16 %v1275, %v1275
      %vm1277 = vcmask 257024
      %1278 = vst.msk [vmem:[%s517] sm:$0xf] %vm1277, %v1276
      %p1279 = scmp.lt.s32.totalorder %s28, 1
      %s1280 = scalar_select %p1279, %s28, 1
      %p1281 = scmp.lt.s32.totalorder %s29, 0
      %s1282 = scalar_select %p1281, %s29, 0
      %s1283 = sadd.s32 %s1282, %s1280
      %s1284 = smul.addr %s1283, 4
      %s1285 = scalar_lea.vmem %s13, %s1284
      // Predicated region
      $region77: #{transformer_forward.5} parent=71 // pred_check
        %p1286 = pneg %p351
      $region78: #{transformer_forward.5} parent=71 // pred_check_branch
        %1288 = sbr.rel (%p1286) target = $region80
      $region79: #{transformer_forward.5} parent=71 // pred_region
        _
      $region80: #{transformer_forward.5} parent=71 // pred_fallthru
        _
    $region72: #{transformer_forward.5} parent=5 // pred_fallthru
      _
    %p1289 = scmp.le.s32.totalorder 2, %s19
    // Predicated region
    $region81: #{transformer_forward.5} parent=5 // pred_check
      %p1290 = pneg %p1289
    $region82: #{transformer_forward.5} parent=5 // pred_check_branch
      %1292 = sbr.rel (%p1290) target = $region84
    $region83: #{transformer_forward.5} parent=5 // pred_region
      %s1293 = ssub.s32 %s19, 2
      // Predicated region
      $region85: #{transformer_forward.5} parent=83 // pred_check
        %p1294 = pneg %p357
      $region86: #{transformer_forward.5} parent=83 // pred_check_branch
        %1296 = sbr.rel (%p1294) target = $region88
      $region87: #{transformer_forward.5} parent=83 // pred_region
        %p1297 = scmp.lt.s32.totalorder %s30, 1
        %s1298 = scalar_select %p1297, %s30, 1
        %p1299 = scmp.lt.s32.totalorder %s31, 0
        %s1300 = scalar_select %p1299, %s31, 0
        %s1301 = sadd.s32 %s1300, %s1298
        %s1302 = smul.addr %s1301, 4
        %s1303 = scalar_lea.vmem %s13, %s1302
      $region88: #{transformer_forward.5} parent=83 // pred_fallthru
        _
    $region84: #{transformer_forward.5} parent=5 // pred_fallthru
      _
  $region6: #{transformer_forward.5} parent=0 // loop_footer
    %s23 = sadd.s32 1, %s19
  $region7: #{transformer_forward.5} parent=0 // loop_footer_branch
    %18 = sbr.rel target = $region3
  $region8: #{transformer_forward.5} parent=0 // loop_exit
    _

</llo_original>
